<compile_context>
chip_gen: v5e
topology: v5e:2x2
jax: 0.10.0
libtpu: 0.0.40
codegen_flags: <defaults>
</compile_context>

<pallas_src>
import functools

import jax
import jax.numpy as jnp
from jax.experimental import pallas as pl
from jax.experimental.pallas import tpu as pltpu


def _partial_l1_kernel(coef_ref, freq_ref, phase_ref, ex_ref, gt_ref,
                       w1t_ref, b1_ref, w2t_ref, b2_ref, out_ref,
                       *, L, N, N_pad, TB, static_length):
    """One lane-tile of TB queries; emits a single L1 partial sum."""
    C3 = 3 * N_pad
    C6 = 6 * N_pad

    # Fourier-term index within each RGB channel, hoisted out of the L loop
    # (JAX does not CSE broadcast/iota).
    n_idx = jax.lax.broadcasted_iota(jnp.int32, (C3, 1), 0) % N_pad
    if static_length is not None:
        # mode == 'specify': one static (3Np,1) mask; also zeroes padded terms n >= N.
        mask = (n_idx < min(static_length, N)).astype(jnp.float32)
    else:
        n_idx_f = n_idx.astype(jnp.float32)

    # Phase block is small (L*Np rows): load once, upcast, slice the f32 value
    # (per-member offsets l*Np are multiples of 8, so value slices stay aligned).
    ph_all = phase_ref[...].astype(jnp.float32)                 # (L*Np, TB)

    ret = jnp.zeros((8, TB), jnp.float32)
    for l in range(L):                 # static unroll; L is small (ensemble size)
        base = l * C6
        # bf16 ref slices at 16-row-aligned offsets (C6 = 6*Np, Np % 8 == 0);
        # upcast the whole (cos+sin) slab once, then split the f32 value.
        cf = coef_ref[base:base + C6, :].astype(jnp.float32)    # (6Np, TB)
        fq = freq_ref[base:base + C6, :].astype(jnp.float32)    # (6Np, TB)
        ccos, csin = cf[:C3, :], cf[C3:, :]
        fx, fy = fq[:C3, :], fq[C3:, :]

        ph_l = ph_all[l * N_pad:(l + 1) * N_pad, :]             # (Np, TB)
        # TODO(synk): phase assumed shared across the 3 RGB channels
        # (predictor.reshape/unreshape internals are unspecified).
        ph = jnp.concatenate([ph_l, ph_l, ph_l], axis=0)        # (3Np, TB)

        ex = ex_ref[l * 8:(l + 1) * 8, :]                       # (8, TB) f32
        rel_x = ex[0:1, :]
        rel_y = ex[1:2, :]
        w_l = ex[2:3, :]                   # precomputed area / tot_area

        # Fourier decoding at the relative coordinate.
        parg = jnp.pi * (fx * rel_x + fy * rel_y + ph)
        term = ccos * jnp.cos(parg) + csin * jnp.sin(parg)
        if static_length is not None:
            dec = term * mask
        else:
            length = ex[3:4, :]            # per-query partial length (random mode)
            dec = jnp.where(n_idx_f < length, term, 0.0)        # (3Np, TB)

        # Per-member decoder MLP (no (3Np, L*TB) scratch -> smaller VMEM footprint;
        # MXU has huge slack so the extra pushes are free under the HBM bound).
        h = jnp.dot(w1t_ref[...], dec, preferred_element_type=jnp.float32) + b1_ref[...]
        h = jnp.maximum(h, 0.0)                                  # (H, TB)
        rgb = jnp.dot(w2t_ref[...], h, preferred_element_type=jnp.float32) + b2_ref[...]
        ret = ret + rgb * w_l              # area-weighted local ensemble

    # Per-tile L1 partial sum; padded lanes (weight=0, gt=0) and padded rows
    # (w2t/b2/gt rows 3..7 are zero) contribute exactly 0.
    tile_sum = jnp.sum(jnp.abs(ret - gt_ref[...]))
    out_ref[...] = jnp.full(out_ref.shape, tile_sum, jnp.float32)


def make_decoder_params(num_pred, hidden=32, out_ch=3):
    """Deterministic synthetic decoder MLP parameters."""
    k1, k2 = jax.random.split(jax.random.PRNGKey(42))
    in_dim = 3 * num_pred
    w1 = jax.random.normal(k1, (in_dim, hidden), jnp.float32) / jnp.sqrt(in_dim)
    b1 = jnp.zeros((1, hidden), jnp.float32)
    w2 = jax.random.normal(k2, (hidden, out_ch), jnp.float32) / jnp.sqrt(hidden)
    b2 = jnp.zeros((1, out_ch), jnp.float32)
    return w1, b1, w2, b2


def partial_l1_forward(pred, gt, params, *, mode, num_pred, length=None,
                       weight=1.0, log_key="partial_l1", rng=None, tile_b=2048):
    """Mirrors PartialL1.forward: returns (loss * weight, {log_key: loss})."""
    L = len(pred["coef"])
    bs, q = pred["coef"][0].shape[:2]
    B = bs * q
    N = num_pred
    N_pad = -(-N // 8) * 8                 # keep per-member slabs sublane-aligned
    C3, C6 = 3 * N_pad, 6 * N_pad

    assert tile_b % 128 == 0
    lane_tiles = -(-B // 128)
    # Big tiles amortize the ~0.35us/step pipeline overhead, but keep >= 2 grid
    # tiles when there is enough work so both v7x TensorCores are used.
    if lane_tiles >= 2:
        tile_b = min(tile_b, 128 * max(1, lane_tiles // 2))
    else:
        tile_b = 128
    B_pad = tile_b * max(1, -(-B // tile_b))
    G = B_pad // tile_b

    def pad_cols(x):
        return jnp.pad(x, ((0, 0), (0, B_pad - B)))

    def pack_lane_dense(arrs, groups, dtype):
        # Per-member (bs, q, groups*N) -> (L*groups*Np, B_pad) lane-dense, one
        # transpose + one pad for the whole operand (keeps wrapper HBM traffic low).
        # TODO(synk): the channel-major [group][n] packing of the 6N feature axis
        # is assumed; model.predictor.reshape/unreshape are unspecified.
        x = jnp.stack([a.reshape(B, groups, N) for a in arrs], axis=0)   # (L,B,g,N)
        if N_pad != N:
            x = jnp.pad(x, ((0, 0), (0, 0), (0, 0), (0, N_pad - N)))
        x = x.astype(dtype)
        x = jnp.transpose(x, (0, 2, 3, 1)).reshape(L * groups * N_pad, B)
        return pad_cols(x)

    # bf16 ingest for the dominant streams (upcast happens inside the kernel).
    coef_t = pack_lane_dense(pred["coef"], 6, jnp.bfloat16)     # (L*6Np, B_pad)
    freq_t = pack_lane_dense(pred["freq"], 6, jnp.bfloat16)     # (L*6Np, B_pad)
    phase_t = pack_lane_dense(pred["phase"], 1, jnp.bfloat16)   # (L*Np,  B_pad), no x3

    # Partial-fourier lengths.
    static_length = None
    if mode == "specify":
        assert length is not None
        static_length = int(length)
        lens = jnp.full((L, B), float(length), jnp.float32)
    elif mode == "random":
        # TODO(synk): torch.randint RNG stream is not reproducible in JAX; use JAX
        # PRNG (thread a fresh key per call in training).
        rng = jax.random.PRNGKey(0) if rng is None else rng
        lens = (jax.random.randint(rng, (L, B), 0, N) + 1).astype(jnp.float32)
    else:
        raise ValueError('Invalid mode. Please specify either "random" or "specify".')

    # LIIF-style diagonal area swap + normalization, precomputed in the wrapper.
    # TODO(synk): model.reconstruct_pixels internals unspecified; pred['coord'] unused.
    perm = [3, 2, 1, 0] if L == 4 else list(range(L))
    areas = jnp.stack([pred["area"][i].reshape(B) for i in range(L)]).astype(jnp.float32)
    tot = jnp.sum(areas, axis=0, keepdims=True) + 1e-8
    ens_w = areas[jnp.asarray(perm)] / tot                       # (L, B)

    # Per-ensemble scalar rows packed into full 8-sublane slabs: (L*8, B_pad).
    zeros_b = jnp.zeros((B,), jnp.float32)
    ex_rows = []
    for l in range(L):
        rel = pred["rel_coord"][l].reshape(B, 2).astype(jnp.float32)
        ex_rows.append(jnp.stack(
            [rel[:, 0], rel[:, 1], ens_w[l], lens[l],
             zeros_b, zeros_b, zeros_b, zeros_b], axis=0))
    extras = pad_cols(jnp.concatenate(ex_rows, axis=0))

    gt_t = pad_cols(jnp.concatenate(
        [gt["gt_rgb"].reshape(B, 3).astype(jnp.float32).T,
         jnp.zeros((5, B), jnp.float32)], axis=0))               # (8, B_pad)

    w1, b1, w2, b2 = params
    H = w1.shape[1]
    w1f = w1.astype(jnp.float32)
    if N_pad != N:
        w1f = jnp.zeros((3, N_pad, H), jnp.float32).at[:, :N, :].set(
            w1f.reshape(3, N, H)).reshape(3 * N_pad, H)
    w1t = w1f.T                                                  # (H, 3Np)
    b1c = b1.astype(jnp.float32).reshape(H, 1)                   # (H, 1)
    w2t = jnp.zeros((8, H), jnp.float32).at[0:3, :].set(w2.astype(jnp.float32).T)
    b2c = jnp.zeros((8, 1), jnp.float32).at[0:3, 0].set(b2.astype(jnp.float32).reshape(3))

    kernel = functools.partial(_partial_l1_kernel, L=L, N=N, N_pad=N_pad,
                               TB=tile_b, static_length=static_length)
    partials = pl.pallas_call(
        kernel,
        out_shape=jax.ShapeDtypeStruct((G, 8, 128), jnp.float32),
        grid_spec=pltpu.PrefetchScalarGridSpec(
            num_scalar_prefetch=0,
            grid=(G,),
            in_specs=[
                pl.BlockSpec((L * C6, tile_b), lambda i: (0, i)),      # coef (bf16)
                pl.BlockSpec((L * C6, tile_b), lambda i: (0, i)),      # freq (bf16)
                pl.BlockSpec((L * N_pad, tile_b), lambda i: (0, i)),   # phase (bf16)
                pl.BlockSpec((L * 8, tile_b), lambda i: (0, i)),       # extras (f32)
                pl.BlockSpec((8, tile_b), lambda i: (0, i)),           # gt (f32)
                pl.BlockSpec((H, C3), lambda i: (0, 0)),               # w1t (resident)
                pl.BlockSpec((H, 1), lambda i: (0, 0)),                # b1
                pl.BlockSpec((8, H), lambda i: (0, 0)),                # w2t (padded rows)
                pl.BlockSpec((8, 1), lambda i: (0, 0)),                # b2
            ],
            out_specs=pl.BlockSpec((1, 8, 128), lambda i: (i, 0, 0)),
        ),
        compiler_params=pltpu.CompilerParams(
            dimension_semantics=("parallel",),        # per-tile partials -> no carry
            vmem_limit_bytes=32 * 1024 * 1024),       # >> working set, safe on v5e..v7x
    )(coef_t, freq_t, phase_t, extras, gt_t, w1t, b1c, w2t, b2c)

    loss = jnp.sum(partials[:, 0, 0]) / (B * 3)       # mean L1 over (bs, q, 3)
    return loss * weight, {log_key: loss}


if __name__ == "__main__":
    bs, q, N, L, H = 2, 8, 8, 4, 32  # batch, queries, num_pred, ensemble size, hidden

    key = jax.random.PRNGKey(0)
    ks = list(jax.random.split(key, 4 * L + 3))

    pred = {"coef": [], "freq": [], "phase": [], "rel_coord": []}
    ki = 0
    for _ in range(L):
        pred["coef"].append(jax.random.normal(ks[ki], (bs, q, 6 * N), jnp.float32)); ki += 1
        pred["freq"].append(jax.random.normal(ks[ki], (bs, q, 6 * N), jnp.float32)); ki += 1
        pred["phase"].append(jax.random.normal(ks[ki], (bs, q, N), jnp.float32)); ki += 1
        pred["rel_coord"].append(
            0.5 * jax.random.normal(ks[ki], (bs, q, 2), jnp.float32)); ki += 1

    areas = jax.random.uniform(ks[ki], (L, bs, q), jnp.float32, 0.1, 1.0); ki += 1
    pred["area"] = [areas[i] for i in range(L)]
    pred["coord"] = jnp.zeros((bs, q, 2), jnp.float32)  # unused downstream

    gt = {"gt_rgb": jax.random.normal(ks[ki], (bs, q, 3), jnp.float32)}; ki += 1

    params = make_decoder_params(N, hidden=H)

    weighted_loss, loss_dict = partial_l1_forward(
        pred, gt, params, mode="specify", num_pred=N, length=5, weight=1.0)

    jax.block_until_ready(weighted_loss)
    jax.block_until_ready(loss_dict["partial_l1"])
    print("KERNEL_OK")
</pallas_src>

<mosaic_0001>
module attributes {stable_mosaic.version = 11 : i64} {
  func.func @_partial_l1_kernel(%arg0: i32, %arg1: memref<192x128xbf16, #tpu.memory_space<vmem>>, %arg2: memref<192x128xbf16, #tpu.memory_space<vmem>>, %arg3: memref<32x128xbf16, #tpu.memory_space<vmem>>, %arg4: memref<32x128xf32, #tpu.memory_space<vmem>>, %arg5: memref<8x128xf32, #tpu.memory_space<vmem>>, %arg6: memref<32x24xf32, #tpu.memory_space<vmem>>, %arg7: memref<32x1xf32, #tpu.memory_space<vmem>>, %arg8: memref<8x32xf32, #tpu.memory_space<vmem>>, %arg9: memref<8x1xf32, #tpu.memory_space<vmem>>, %arg10: memref<1x8x128xf32, #tpu.memory_space<vmem>>) attributes {dimension_semantics = [#tpu.dimension_semantics<parallel>], iteration_bounds = array<i64: 1>, scalar_prefetch = 0 : i64, scratch_operands = 0 : i64, tpu.core_type = #tpu.core_type<tc>, window_params = [{transform_indices = @transform_0, window_bounds = array<i64: 192, 128>}, {transform_indices = @transform_1, window_bounds = array<i64: 192, 128>}, {transform_indices = @transform_2, window_bounds = array<i64: 32, 128>}, {transform_indices = @transform_3, window_bounds = array<i64: 32, 128>}, {transform_indices = @transform_4, window_bounds = array<i64: 8, 128>}, {pipeline_mode = #tpu.pipeline_mode<synchronous>, transform_indices = @transform_5, window_bounds = array<i64: 32, 24>}, {pipeline_mode = #tpu.pipeline_mode<synchronous>, transform_indices = @transform_6, window_bounds = array<i64: 32, 1>}, {pipeline_mode = #tpu.pipeline_mode<synchronous>, transform_indices = @transform_7, window_bounds = array<i64: 8, 32>}, {pipeline_mode = #tpu.pipeline_mode<synchronous>, transform_indices = @transform_8, window_bounds = array<i64: 8, 1>}, {transform_indices = @transform_9, window_bounds = array<i64: 1, 8, 128>}]} {
    %0 = tpu.iota {dimensions = array<i32: 0>} : vector<24x1xi32>
    %c8_i32 = arith.constant 8 : i32
    %c0_i32 = arith.constant 0 : i32
    %1 = arith.cmpi eq, %c8_i32, %c0_i32 : i32
    %c1_i32 = arith.constant 1 : i32
    %2 = arith.select %1, %c1_i32, %c8_i32 : i32
    %3 = vector.broadcast %2 : i32 to vector<24x1xi32>
    %4 = arith.remsi %0, %3 : vector<24x1xi32>
    %c0_i32_0 = arith.constant 0 : i32
    %5 = vector.broadcast %c0_i32_0 : i32 to vector<24x1xi32>
    %6 = arith.cmpi ne, %4, %5 : vector<24x1xi32>
    %c0_i32_1 = arith.constant 0 : i32
    %7 = vector.broadcast %c0_i32_1 : i32 to vector<24x1xi32>
    %8 = arith.cmpi slt, %4, %7 : vector<24x1xi32>
    %c0_i32_2 = arith.constant 0 : i32
    %9 = arith.cmpi slt, %2, %c0_i32_2 : i32
    %10 = vector.broadcast %9 : i1 to vector<24x1xi1>
    %11 = vector.broadcast %10 : vector<24x1xi1> to vector<24x1xi1>
    %12 = arith.xori %8, %11 : vector<24x1xi1>
    %13 = arith.andi %12, %6 : vector<24x1xi1>
    %14 = vector.broadcast %2 : i32 to vector<24x1xi32>
    %15 = arith.addi %4, %14 : vector<24x1xi32>
    %16 = arith.select %13, %15, %4 : vector<24x1xi1>, vector<24x1xi32>
    %c5_i32 = arith.constant 5 : i32
    %17 = vector.broadcast %c5_i32 : i32 to vector<24x1xi32>
    %18 = arith.cmpi slt, %16, %17 : vector<24x1xi32>
    %19 = arith.extui %18 : vector<24x1xi1> to vector<24x1xi32>
    %20 = arith.sitofp %19 : vector<24x1xi32> to vector<24x1xf32>
    %c0 = arith.constant 0 : index
    %c0_3 = arith.constant 0 : index
    %21 = vector.load %arg3[%c0, %c0_3] : memref<32x128xbf16, #tpu.memory_space<vmem>>, vector<32x128xbf16>
    %22 = arith.extf %21 : vector<32x128xbf16> to vector<32x128xf32>
    %cst = arith.constant 0.000000e+00 : f32
    %23 = vector.broadcast %cst : f32 to vector<8x128xf32>
    %c0_4 = arith.constant 0 : index
    %c0_5 = arith.constant 0 : index
    %24 = vector.load %arg1[%c0_4, %c0_5] : memref<192x128xbf16, #tpu.memory_space<vmem>>, vector<48x128xbf16>
    %25 = arith.extf %24 : vector<48x128xbf16> to vector<48x128xf32>
    %c0_6 = arith.constant 0 : index
    %c0_7 = arith.constant 0 : index
    %26 = vector.load %arg2[%c0_6, %c0_7] : memref<192x128xbf16, #tpu.memory_space<vmem>>, vector<48x128xbf16>
    %27 = arith.extf %26 : vector<48x128xbf16> to vector<48x128xf32>
    %28 = vector.extract_strided_slice %25 {offsets = [0, 0], sizes = [24, 128], strides = [1, 1]} : vector<48x128xf32> to vector<24x128xf32>
    %29 = vector.extract_strided_slice %25 {offsets = [24, 0], sizes = [24, 128], strides = [1, 1]} : vector<48x128xf32> to vector<24x128xf32>
    %30 = vector.extract_strided_slice %27 {offsets = [0, 0], sizes = [24, 128], strides = [1, 1]} : vector<48x128xf32> to vector<24x128xf32>
    %31 = vector.extract_strided_slice %27 {offsets = [24, 0], sizes = [24, 128], strides = [1, 1]} : vector<48x128xf32> to vector<24x128xf32>
    %32 = vector.extract_strided_slice %22 {offsets = [0, 0], sizes = [8, 128], strides = [1, 1]} : vector<32x128xf32> to vector<8x128xf32>
    %33 = tpu.concatenate %32, %32, %32 in 0 : vector<8x128xf32>, vector<8x128xf32>, vector<8x128xf32> -> vector<24x128xf32>
    %c0_8 = arith.constant 0 : index
    %c0_9 = arith.constant 0 : index
    %34 = vector.load %arg4[%c0_8, %c0_9] : memref<32x128xf32, #tpu.memory_space<vmem>>, vector<8x128xf32>
    %35 = vector.extract_strided_slice %34 {offsets = [0, 0], sizes = [1, 128], strides = [1, 1]} : vector<8x128xf32> to vector<1x128xf32>
    %36 = vector.extract_strided_slice %34 {offsets = [1, 0], sizes = [1, 128], strides = [1, 1]} : vector<8x128xf32> to vector<1x128xf32>
    %37 = vector.extract_strided_slice %34 {offsets = [2, 0], sizes = [1, 128], strides = [1, 1]} : vector<8x128xf32> to vector<1x128xf32>
    %38 = vector.broadcast %35 : vector<1x128xf32> to vector<24x128xf32>
    %39 = arith.mulf %30, %38 : vector<24x128xf32>
    %40 = vector.broadcast %36 : vector<1x128xf32> to vector<24x128xf32>
    %41 = arith.mulf %31, %40 : vector<24x128xf32>
    %42 = arith.addf %39, %41 : vector<24x128xf32>
    %43 = arith.addf %42, %33 : vector<24x128xf32>
    %cst_10 = arith.constant 3.14159274 : f32
    %44 = vector.broadcast %cst_10 : f32 to vector<24x128xf32>
    %45 = arith.mulf %44, %43 : vector<24x128xf32>
    %46 = math.cos %45 : vector<24x128xf32>
    %47 = arith.mulf %28, %46 : vector<24x128xf32>
    %48 = math.sin %45 : vector<24x128xf32>
    %49 = arith.mulf %29, %48 : vector<24x128xf32>
    %50 = arith.addf %47, %49 : vector<24x128xf32>
    %51 = vector.broadcast %20 : vector<24x1xf32> to vector<24x128xf32>
    %52 = arith.mulf %50, %51 : vector<24x128xf32>
    %c0_11 = arith.constant 0 : index
    %c0_12 = arith.constant 0 : index
    %53 = vector.load %arg6[%c0_11, %c0_12] : memref<32x24xf32, #tpu.memory_space<vmem>>, vector<32x24xf32>
    %cst_13 = arith.constant dense<0.000000e+00> : vector<32x128xf32>
    %54 = tpu.matmul %53, %52, %cst_13 {dimension_numbers = #tpu.dot_dimension_numbers<[1], [0], [0], [1], [0, 0, 1, 1], [], []>} : vector<32x24xf32>, vector<24x128xf32>, vector<32x128xf32> -> vector<32x128xf32>
    %c0_14 = arith.constant 0 : index
    %c0_15 = arith.constant 0 : index
    %55 = vector.load %arg7[%c0_14, %c0_15] : memref<32x1xf32, #tpu.memory_space<vmem>>, vector<32x1xf32>
    %56 = vector.broadcast %55 : vector<32x1xf32> to vector<32x128xf32>
    %57 = arith.addf %54, %56 : vector<32x128xf32>
    %cst_16 = arith.constant 0.000000e+00 : f32
    %58 = vector.broadcast %cst_16 : f32 to vector<32x128xf32>
    %59 = arith.maximumf %57, %58 : vector<32x128xf32>
    %c0_17 = arith.constant 0 : index
    %c0_18 = arith.constant 0 : index
    %60 = vector.load %arg8[%c0_17, %c0_18] : memref<8x32xf32, #tpu.memory_space<vmem>>, vector<8x32xf32>
    %cst_19 = arith.constant dense<0.000000e+00> : vector<8x128xf32>
    %61 = tpu.matmul %60, %59, %cst_19 {dimension_numbers = #tpu.dot_dimension_numbers<[1], [0], [0], [1], [0, 0, 1, 1], [], []>} : vector<8x32xf32>, vector<32x128xf32>, vector<8x128xf32> -> vector<8x128xf32>
    %c0_20 = arith.constant 0 : index
    %c0_21 = arith.constant 0 : index
    %62 = vector.load %arg9[%c0_20, %c0_21] : memref<8x1xf32, #tpu.memory_space<vmem>>, vector<8x1xf32>
    %63 = vector.broadcast %62 : vector<8x1xf32> to vector<8x128xf32>
    %64 = arith.addf %61, %63 : vector<8x128xf32>
    %65 = vector.broadcast %37 : vector<1x128xf32> to vector<8x128xf32>
    %66 = arith.mulf %64, %65 : vector<8x128xf32>
    %67 = arith.addf %23, %66 : vector<8x128xf32>
    %c48 = arith.constant 48 : index
    %c0_22 = arith.constant 0 : index
    %68 = vector.load %arg1[%c48, %c0_22] : memref<192x128xbf16, #tpu.memory_space<vmem>>, vector<48x128xbf16>
    %69 = arith.extf %68 : vector<48x128xbf16> to vector<48x128xf32>
    %c48_23 = arith.constant 48 : index
    %c0_24 = arith.constant 0 : index
    %70 = vector.load %arg2[%c48_23, %c0_24] : memref<192x128xbf16, #tpu.memory_space<vmem>>, vector<48x128xbf16>
    %71 = arith.extf %70 : vector<48x128xbf16> to vector<48x128xf32>
    %72 = vector.extract_strided_slice %69 {offsets = [0, 0], sizes = [24, 128], strides = [1, 1]} : vector<48x128xf32> to vector<24x128xf32>
    %73 = vector.extract_strided_slice %69 {offsets = [24, 0], sizes = [24, 128], strides = [1, 1]} : vector<48x128xf32> to vector<24x128xf32>
    %74 = vector.extract_strided_slice %71 {offsets = [0, 0], sizes = [24, 128], strides = [1, 1]} : vector<48x128xf32> to vector<24x128xf32>
    %75 = vector.extract_strided_slice %71 {offsets = [24, 0], sizes = [24, 128], strides = [1, 1]} : vector<48x128xf32> to vector<24x128xf32>
    %76 = vector.extract_strided_slice %22 {offsets = [8, 0], sizes = [8, 128], strides = [1, 1]} : vector<32x128xf32> to vector<8x128xf32>
    %77 = tpu.concatenate %76, %76, %76 in 0 : vector<8x128xf32>, vector<8x128xf32>, vector<8x128xf32> -> vector<24x128xf32>
    %c8 = arith.constant 8 : index
    %c0_25 = arith.constant 0 : index
    %78 = vector.load %arg4[%c8, %c0_25] : memref<32x128xf32, #tpu.memory_space<vmem>>, vector<8x128xf32>
    %79 = vector.extract_strided_slice %78 {offsets = [0, 0], sizes = [1, 128], strides = [1, 1]} : vector<8x128xf32> to vector<1x128xf32>
    %80 = vector.extract_strided_slice %78 {offsets = [1, 0], sizes = [1, 128], strides = [1, 1]} : vector<8x128xf32> to vector<1x128xf32>
    %81 = vector.extract_strided_slice %78 {offsets = [2, 0], sizes = [1, 128], strides = [1, 1]} : vector<8x128xf32> to vector<1x128xf32>
    %82 = vector.broadcast %79 : vector<1x128xf32> to vector<24x128xf32>
    %83 = arith.mulf %74, %82 : vector<24x128xf32>
    %84 = vector.broadcast %80 : vector<1x128xf32> to vector<24x128xf32>
    %85 = arith.mulf %75, %84 : vector<24x128xf32>
    %86 = arith.addf %83, %85 : vector<24x128xf32>
    %87 = arith.addf %86, %77 : vector<24x128xf32>
    %cst_26 = arith.constant 3.14159274 : f32
    %88 = vector.broadcast %cst_26 : f32 to vector<24x128xf32>
    %89 = arith.mulf %88, %87 : vector<24x128xf32>
    %90 = math.cos %89 : vector<24x128xf32>
    %91 = arith.mulf %72, %90 : vector<24x128xf32>
    %92 = math.sin %89 : vector<24x128xf32>
    %93 = arith.mulf %73, %92 : vector<24x128xf32>
    %94 = arith.addf %91, %93 : vector<24x128xf32>
    %95 = vector.broadcast %20 : vector<24x1xf32> to vector<24x128xf32>
    %96 = arith.mulf %94, %95 : vector<24x128xf32>
    %c0_27 = arith.constant 0 : index
    %c0_28 = arith.constant 0 : index
    %97 = vector.load %arg6[%c0_27, %c0_28] : memref<32x24xf32, #tpu.memory_space<vmem>>, vector<32x24xf32>
    %cst_29 = arith.constant dense<0.000000e+00> : vector<32x128xf32>
    %98 = tpu.matmul %97, %96, %cst_29 {dimension_numbers = #tpu.dot_dimension_numbers<[1], [0], [0], [1], [0, 0, 1, 1], [], []>} : vector<32x24xf32>, vector<24x128xf32>, vector<32x128xf32> -> vector<32x128xf32>
    %c0_30 = arith.constant 0 : index
    %c0_31 = arith.constant 0 : index
    %99 = vector.load %arg7[%c0_30, %c0_31] : memref<32x1xf32, #tpu.memory_space<vmem>>, vector<32x1xf32>
    %100 = vector.broadcast %99 : vector<32x1xf32> to vector<32x128xf32>
    %101 = arith.addf %98, %100 : vector<32x128xf32>
    %cst_32 = arith.constant 0.000000e+00 : f32
    %102 = vector.broadcast %cst_32 : f32 to vector<32x128xf32>
    %103 = arith.maximumf %101, %102 : vector<32x128xf32>
    %c0_33 = arith.constant 0 : index
    %c0_34 = arith.constant 0 : index
    %104 = vector.load %arg8[%c0_33, %c0_34] : memref<8x32xf32, #tpu.memory_space<vmem>>, vector<8x32xf32>
    %cst_35 = arith.constant dense<0.000000e+00> : vector<8x128xf32>
    %105 = tpu.matmul %104, %103, %cst_35 {dimension_numbers = #tpu.dot_dimension_numbers<[1], [0], [0], [1], [0, 0, 1, 1], [], []>} : vector<8x32xf32>, vector<32x128xf32>, vector<8x128xf32> -> vector<8x128xf32>
    %c0_36 = arith.constant 0 : index
    %c0_37 = arith.constant 0 : index
    %106 = vector.load %arg9[%c0_36, %c0_37] : memref<8x1xf32, #tpu.memory_space<vmem>>, vector<8x1xf32>
    %107 = vector.broadcast %106 : vector<8x1xf32> to vector<8x128xf32>
    %108 = arith.addf %105, %107 : vector<8x128xf32>
    %109 = vector.broadcast %81 : vector<1x128xf32> to vector<8x128xf32>
    %110 = arith.mulf %108, %109 : vector<8x128xf32>
    %111 = arith.addf %67, %110 : vector<8x128xf32>
    %c96 = arith.constant 96 : index
    %c0_38 = arith.constant 0 : index
    %112 = vector.load %arg1[%c96, %c0_38] : memref<192x128xbf16, #tpu.memory_space<vmem>>, vector<48x128xbf16>
    %113 = arith.extf %112 : vector<48x128xbf16> to vector<48x128xf32>
    %c96_39 = arith.constant 96 : index
    %c0_40 = arith.constant 0 : index
    %114 = vector.load %arg2[%c96_39, %c0_40] : memref<192x128xbf16, #tpu.memory_space<vmem>>, vector<48x128xbf16>
    %115 = arith.extf %114 : vector<48x128xbf16> to vector<48x128xf32>
    %116 = vector.extract_strided_slice %113 {offsets = [0, 0], sizes = [24, 128], strides = [1, 1]} : vector<48x128xf32> to vector<24x128xf32>
    %117 = vector.extract_strided_slice %113 {offsets = [24, 0], sizes = [24, 128], strides = [1, 1]} : vector<48x128xf32> to vector<24x128xf32>
    %118 = vector.extract_strided_slice %115 {offsets = [0, 0], sizes = [24, 128], strides = [1, 1]} : vector<48x128xf32> to vector<24x128xf32>
    %119 = vector.extract_strided_slice %115 {offsets = [24, 0], sizes = [24, 128], strides = [1, 1]} : vector<48x128xf32> to vector<24x128xf32>
    %120 = vector.extract_strided_slice %22 {offsets = [16, 0], sizes = [8, 128], strides = [1, 1]} : vector<32x128xf32> to vector<8x128xf32>
    %121 = tpu.concatenate %120, %120, %120 in 0 : vector<8x128xf32>, vector<8x128xf32>, vector<8x128xf32> -> vector<24x128xf32>
    %c16 = arith.constant 16 : index
    %c0_41 = arith.constant 0 : index
    %122 = vector.load %arg4[%c16, %c0_41] : memref<32x128xf32, #tpu.memory_space<vmem>>, vector<8x128xf32>
    %123 = vector.extract_strided_slice %122 {offsets = [0, 0], sizes = [1, 128], strides = [1, 1]} : vector<8x128xf32> to vector<1x128xf32>
    %124 = vector.extract_strided_slice %122 {offsets = [1, 0], sizes = [1, 128], strides = [1, 1]} : vector<8x128xf32> to vector<1x128xf32>
    %125 = vector.extract_strided_slice %122 {offsets = [2, 0], sizes = [1, 128], strides = [1, 1]} : vector<8x128xf32> to vector<1x128xf32>
    %126 = vector.broadcast %123 : vector<1x128xf32> to vector<24x128xf32>
    %127 = arith.mulf %118, %126 : vector<24x128xf32>
    %128 = vector.broadcast %124 : vector<1x128xf32> to vector<24x128xf32>
    %129 = arith.mulf %119, %128 : vector<24x128xf32>
    %130 = arith.addf %127, %129 : vector<24x128xf32>
    %131 = arith.addf %130, %121 : vector<24x128xf32>
    %cst_42 = arith.constant 3.14159274 : f32
    %132 = vector.broadcast %cst_42 : f32 to vector<24x128xf32>
    %133 = arith.mulf %132, %131 : vector<24x128xf32>
    %134 = math.cos %133 : vector<24x128xf32>
    %135 = arith.mulf %116, %134 : vector<24x128xf32>
    %136 = math.sin %133 : vector<24x128xf32>
    %137 = arith.mulf %117, %136 : vector<24x128xf32>
    %138 = arith.addf %135, %137 : vector<24x128xf32>
    %139 = vector.broadcast %20 : vector<24x1xf32> to vector<24x128xf32>
    %140 = arith.mulf %138, %139 : vector<24x128xf32>
    %c0_43 = arith.constant 0 : index
    %c0_44 = arith.constant 0 : index
    %141 = vector.load %arg6[%c0_43, %c0_44] : memref<32x24xf32, #tpu.memory_space<vmem>>, vector<32x24xf32>
    %cst_45 = arith.constant dense<0.000000e+00> : vector<32x128xf32>
    %142 = tpu.matmul %141, %140, %cst_45 {dimension_numbers = #tpu.dot_dimension_numbers<[1], [0], [0], [1], [0, 0, 1, 1], [], []>} : vector<32x24xf32>, vector<24x128xf32>, vector<32x128xf32> -> vector<32x128xf32>
    %c0_46 = arith.constant 0 : index
    %c0_47 = arith.constant 0 : index
    %143 = vector.load %arg7[%c0_46, %c0_47] : memref<32x1xf32, #tpu.memory_space<vmem>>, vector<32x1xf32>
    %144 = vector.broadcast %143 : vector<32x1xf32> to vector<32x128xf32>
    %145 = arith.addf %142, %144 : vector<32x128xf32>
    %cst_48 = arith.constant 0.000000e+00 : f32
    %146 = vector.broadcast %cst_48 : f32 to vector<32x128xf32>
    %147 = arith.maximumf %145, %146 : vector<32x128xf32>
    %c0_49 = arith.constant 0 : index
    %c0_50 = arith.constant 0 : index
    %148 = vector.load %arg8[%c0_49, %c0_50] : memref<8x32xf32, #tpu.memory_space<vmem>>, vector<8x32xf32>
    %cst_51 = arith.constant dense<0.000000e+00> : vector<8x128xf32>
    %149 = tpu.matmul %148, %147, %cst_51 {dimension_numbers = #tpu.dot_dimension_numbers<[1], [0], [0], [1], [0, 0, 1, 1], [], []>} : vector<8x32xf32>, vector<32x128xf32>, vector<8x128xf32> -> vector<8x128xf32>
    %c0_52 = arith.constant 0 : index
    %c0_53 = arith.constant 0 : index
    %150 = vector.load %arg9[%c0_52, %c0_53] : memref<8x1xf32, #tpu.memory_space<vmem>>, vector<8x1xf32>
    %151 = vector.broadcast %150 : vector<8x1xf32> to vector<8x128xf32>
    %152 = arith.addf %149, %151 : vector<8x128xf32>
    %153 = vector.broadcast %125 : vector<1x128xf32> to vector<8x128xf32>
    %154 = arith.mulf %152, %153 : vector<8x128xf32>
    %155 = arith.addf %111, %154 : vector<8x128xf32>
    %c144 = arith.constant 144 : index
    %c0_54 = arith.constant 0 : index
    %156 = vector.load %arg1[%c144, %c0_54] : memref<192x128xbf16, #tpu.memory_space<vmem>>, vector<48x128xbf16>
    %157 = arith.extf %156 : vector<48x128xbf16> to vector<48x128xf32>
    %c144_55 = arith.constant 144 : index
    %c0_56 = arith.constant 0 : index
    %158 = vector.load %arg2[%c144_55, %c0_56] : memref<192x128xbf16, #tpu.memory_space<vmem>>, vector<48x128xbf16>
    %159 = arith.extf %158 : vector<48x128xbf16> to vector<48x128xf32>
    %160 = vector.extract_strided_slice %157 {offsets = [0, 0], sizes = [24, 128], strides = [1, 1]} : vector<48x128xf32> to vector<24x128xf32>
    %161 = vector.extract_strided_slice %157 {offsets = [24, 0], sizes = [24, 128], strides = [1, 1]} : vector<48x128xf32> to vector<24x128xf32>
    %162 = vector.extract_strided_slice %159 {offsets = [0, 0], sizes = [24, 128], strides = [1, 1]} : vector<48x128xf32> to vector<24x128xf32>
    %163 = vector.extract_strided_slice %159 {offsets = [24, 0], sizes = [24, 128], strides = [1, 1]} : vector<48x128xf32> to vector<24x128xf32>
    %164 = vector.extract_strided_slice %22 {offsets = [24, 0], sizes = [8, 128], strides = [1, 1]} : vector<32x128xf32> to vector<8x128xf32>
    %165 = tpu.concatenate %164, %164, %164 in 0 : vector<8x128xf32>, vector<8x128xf32>, vector<8x128xf32> -> vector<24x128xf32>
    %c24 = arith.constant 24 : index
    %c0_57 = arith.constant 0 : index
    %166 = vector.load %arg4[%c24, %c0_57] : memref<32x128xf32, #tpu.memory_space<vmem>>, vector<8x128xf32>
    %167 = vector.extract_strided_slice %166 {offsets = [0, 0], sizes = [1, 128], strides = [1, 1]} : vector<8x128xf32> to vector<1x128xf32>
    %168 = vector.extract_strided_slice %166 {offsets = [1, 0], sizes = [1, 128], strides = [1, 1]} : vector<8x128xf32> to vector<1x128xf32>
    %169 = vector.extract_strided_slice %166 {offsets = [2, 0], sizes = [1, 128], strides = [1, 1]} : vector<8x128xf32> to vector<1x128xf32>
    %170 = vector.broadcast %167 : vector<1x128xf32> to vector<24x128xf32>
    %171 = arith.mulf %162, %170 : vector<24x128xf32>
    %172 = vector.broadcast %168 : vector<1x128xf32> to vector<24x128xf32>
    %173 = arith.mulf %163, %172 : vector<24x128xf32>
    %174 = arith.addf %171, %173 : vector<24x128xf32>
    %175 = arith.addf %174, %165 : vector<24x128xf32>
    %cst_58 = arith.constant 3.14159274 : f32
    %176 = vector.broadcast %cst_58 : f32 to vector<24x128xf32>
    %177 = arith.mulf %176, %175 : vector<24x128xf32>
    %178 = math.cos %177 : vector<24x128xf32>
    %179 = arith.mulf %160, %178 : vector<24x128xf32>
    %180 = math.sin %177 : vector<24x128xf32>
    %181 = arith.mulf %161, %180 : vector<24x128xf32>
    %182 = arith.addf %179, %181 : vector<24x128xf32>
    %183 = vector.broadcast %20 : vector<24x1xf32> to vector<24x128xf32>
    %184 = arith.mulf %182, %183 : vector<24x128xf32>
    %c0_59 = arith.constant 0 : index
    %c0_60 = arith.constant 0 : index
    %185 = vector.load %arg6[%c0_59, %c0_60] : memref<32x24xf32, #tpu.memory_space<vmem>>, vector<32x24xf32>
    %cst_61 = arith.constant dense<0.000000e+00> : vector<32x128xf32>
    %186 = tpu.matmul %185, %184, %cst_61 {dimension_numbers = #tpu.dot_dimension_numbers<[1], [0], [0], [1], [0, 0, 1, 1], [], []>} : vector<32x24xf32>, vector<24x128xf32>, vector<32x128xf32> -> vector<32x128xf32>
    %c0_62 = arith.constant 0 : index
    %c0_63 = arith.constant 0 : index
    %187 = vector.load %arg7[%c0_62, %c0_63] : memref<32x1xf32, #tpu.memory_space<vmem>>, vector<32x1xf32>
    %188 = vector.broadcast %187 : vector<32x1xf32> to vector<32x128xf32>
    %189 = arith.addf %186, %188 : vector<32x128xf32>
    %cst_64 = arith.constant 0.000000e+00 : f32
    %190 = vector.broadcast %cst_64 : f32 to vector<32x128xf32>
    %191 = arith.maximumf %189, %190 : vector<32x128xf32>
    %c0_65 = arith.constant 0 : index
    %c0_66 = arith.constant 0 : index
    %192 = vector.load %arg8[%c0_65, %c0_66] : memref<8x32xf32, #tpu.memory_space<vmem>>, vector<8x32xf32>
    %cst_67 = arith.constant dense<0.000000e+00> : vector<8x128xf32>
    %193 = tpu.matmul %192, %191, %cst_67 {dimension_numbers = #tpu.dot_dimension_numbers<[1], [0], [0], [1], [0, 0, 1, 1], [], []>} : vector<8x32xf32>, vector<32x128xf32>, vector<8x128xf32> -> vector<8x128xf32>
    %c0_68 = arith.constant 0 : index
    %c0_69 = arith.constant 0 : index
    %194 = vector.load %arg9[%c0_68, %c0_69] : memref<8x1xf32, #tpu.memory_space<vmem>>, vector<8x1xf32>
    %195 = vector.broadcast %194 : vector<8x1xf32> to vector<8x128xf32>
    %196 = arith.addf %193, %195 : vector<8x128xf32>
    %197 = vector.broadcast %169 : vector<1x128xf32> to vector<8x128xf32>
    %198 = arith.mulf %196, %197 : vector<8x128xf32>
    %199 = arith.addf %155, %198 : vector<8x128xf32>
    %c0_70 = arith.constant 0 : index
    %c0_71 = arith.constant 0 : index
    %200 = vector.load %arg5[%c0_70, %c0_71] : memref<8x128xf32, #tpu.memory_space<vmem>>, vector<8x128xf32>
    %201 = arith.subf %199, %200 : vector<8x128xf32>
    %202 = math.absf %201 : vector<8x128xf32>
    %203 = vector.shape_cast %202 : vector<8x128xf32> to vector<1x8x128xf32>
    %cst_72 = arith.constant dense<0.000000e+00> : vector<1xf32>
    %204 = vector.multi_reduction <add>, %203, %cst_72 [1, 2] : vector<1x8x128xf32> to vector<1xf32>
    %205 = vector.shape_cast %204 : vector<1xf32> to vector<1x1x1xf32>
    %206 = vector.extract %205[0, 0, 0] : f32 from vector<1x1x1xf32>
    %207 = vector.broadcast %206 : f32 to vector<1x8x128xf32>
    %c0_73 = arith.constant 0 : index
    %c0_74 = arith.constant 0 : index
    %c0_75 = arith.constant 0 : index
    %208 = vector.load %arg10[%c0_73, %c0_74, %c0_75] : memref<1x8x128xf32, #tpu.memory_space<vmem>>, vector<1x8x128xf32>
    tpu.vector_store %arg10[%c0_73, %c0_74, %c0_75], %207 {strides = array<i32>} : memref<1x8x128xf32, #tpu.memory_space<vmem>>, vector<1x8x128xf32>,
    return
  }
  func.func @transform_0(%arg0: i32) -> (i32, i32) {
    %c0_i32 = arith.constant 0 : i32
    %c0_i32_0 = arith.constant 0 : i32
    return %c0_i32, %arg0 : i32, i32
  }
  func.func @transform_1(%arg0: i32) -> (i32, i32) {
    %c0_i32 = arith.constant 0 : i32
    %c0_i32_0 = arith.constant 0 : i32
    return %c0_i32, %arg0 : i32, i32
  }
  func.func @transform_2(%arg0: i32) -> (i32, i32) {
    %c0_i32 = arith.constant 0 : i32
    %c0_i32_0 = arith.constant 0 : i32
    return %c0_i32, %arg0 : i32, i32
  }
  func.func @transform_3(%arg0: i32) -> (i32, i32) {
    %c0_i32 = arith.constant 0 : i32
    %c0_i32_0 = arith.constant 0 : i32
    return %c0_i32, %arg0 : i32, i32
  }
  func.func @transform_4(%arg0: i32) -> (i32, i32) {
    %c0_i32 = arith.constant 0 : i32
    %c0_i32_0 = arith.constant 0 : i32
    return %c0_i32, %arg0 : i32, i32
  }
  func.func @transform_5(%arg0: i32) -> (i32, i32) {
    %c0_i32 = arith.constant 0 : i32
    %c0_i32_0 = arith.constant 0 : i32
    %c0_i32_1 = arith.constant 0 : i32
    return %c0_i32, %c0_i32_0 : i32, i32
  }
  func.func @transform_6(%arg0: i32) -> (i32, i32) {
    %c0_i32 = arith.constant 0 : i32
    %c0_i32_0 = arith.constant 0 : i32
    %c0_i32_1 = arith.constant 0 : i32
    return %c0_i32, %c0_i32_0 : i32, i32
  }
  func.func @transform_7(%arg0: i32) -> (i32, i32) {
    %c0_i32 = arith.constant 0 : i32
    %c0_i32_0 = arith.constant 0 : i32
    %c0_i32_1 = arith.constant 0 : i32
    return %c0_i32, %c0_i32_0 : i32, i32
  }
  func.func @transform_8(%arg0: i32) -> (i32, i32) {
    %c0_i32 = arith.constant 0 : i32
    %c0_i32_0 = arith.constant 0 : i32
    %c0_i32_1 = arith.constant 0 : i32
    return %c0_i32, %c0_i32_0 : i32, i32
  }
  func.func @transform_9(%arg0: i32) -> (i32, i32, i32) {
    %c0_i32 = arith.constant 0 : i32
    %c0_i32_0 = arith.constant 0 : i32
    %c0_i32_1 = arith.constant 0 : i32
    return %arg0, %c0_i32, %c0_i32_0 : i32, i32, i32
  }
}

</mosaic_0001>

<llo_original>
// kernel: tpu_custom_call.1
$region0: #{tpu_custom_call.1}
  #allocation0 [shape = 'u32[]', space=smem, size = 0x4, offset = 0x4, fixed_abs, tag = 'smem constant byte address 0x4 - core index']
  #allocation1 [shape = 'u32[72,128]{1,0:T(1,128)}', space=vmem, size = 0x9000, scoped, tag = 'internal scratch']
  %s0 = inlined_call_operand.hbm [shape: bf16[192,128], index: 0, kind: input, shape index: {}]
  %s1 = inlined_call_operand.hbm [shape: bf16[192,128], index: 1, kind: input, shape index: {}]
  %s2 = inlined_call_operand.vmem [shape: bf16[32,128], index: 2, kind: input, shape index: {}]
  %s3 = inlined_call_operand.vmem [shape: f32[32,128], index: 3, kind: input, shape index: {}]
  %s4 = inlined_call_operand.vmem [shape: f32[8,128], index: 4, kind: input, shape index: {}]
  %s5 = inlined_call_operand.vmem [shape: f32[32,24], index: 5, kind: input, shape index: {}]
  %s6 = inlined_call_operand.vmem [shape: f32[32,1], index: 6, kind: input, shape index: {}]
  %s7 = inlined_call_operand.vmem [shape: f32[8,32], index: 7, kind: input, shape index: {}]
  %s8 = inlined_call_operand.vmem [shape: f32[8,1], index: 8, kind: input, shape index: {}]
  %s9 = inlined_call_operand.hbm [shape: f32[1,8,128], index: 9, kind: output, shape index: {}]
  %s10 = sld [smem:[#allocation0]]
  $region54: #{tpu_custom_call.1} parent=0
    _
  %s12 = ssub.s32 1, %s10
  %s13 = scalar_select 0, %s12, %s10
  $region1: #{tpu_custom_call.1} parent=0
    #allocation2 [shape = 'u8[49152]{0}', space=vmem, size = 0xc000, scoped, tag = 'input window, operand 0, single buffered']
    #allocation3 [shape = 's32[1]{0}', space=sflag, size = 0x4, scoped, tag = 'scoped memory for tpu_custom_call.1']
    #allocation4 [shape = 's32[1]{0}', space=sflag, size = 0x4, scoped, tag = 'scoped memory for tpu_custom_call.1']
    #allocation5 [shape = 'u8[49152]{0}', space=vmem, size = 0xc000, scoped, tag = 'input window, operand 1, single buffered']
    #allocation6 [shape = 's32[1]{0}', space=sflag, size = 0x4, scoped, tag = 'scoped memory for tpu_custom_call.1']
    #allocation7 [shape = 'u8[4096]{0}', space=vmem, size = 0x1000, scoped, tag = 'output window, operand 0, single buffered']
    %14 = vsyncpa [#allocation3], 0
    %15 = vsyncpa [#allocation6], 0
    %16 = vsyncpa [#allocation4], 0
    // Predicated region
    $region2: #{tpu_custom_call.1} parent=1 // pred_check
      _
    $region3: #{tpu_custom_call.1} parent=1 // pred_check_branch
      %18 = sbr.rel (0) target = $region5
    $region4: #{tpu_custom_call.1} parent=1 // pred_region
      %20 = vsyncadd [#allocation3], 0
      %s21 = sshll.u32 %s0, 4
      %s22 = int_to_ptr.hbm [resolvable:$true] %s21
      %s23 = sshll.u32 [#allocation2], 4
      %s24 = int_to_ptr.vmem [resolvable:$true] %s23
      %29 = dma.hbm_to_vmem [thread:$0]  %s22, 1536, %s24, [#allocation3], 64, 64, 4
    $region5: #{tpu_custom_call.1} parent=1 // pred_fallthru
      _
    // Predicated region
    $region6: #{tpu_custom_call.1} parent=1 // pred_check
      _
    $region7: #{tpu_custom_call.1} parent=1 // pred_check_branch
      %31 = sbr.rel (0) target = $region9
    $region8: #{tpu_custom_call.1} parent=1 // pred_region
      %33 = vsyncadd [#allocation6], 0
      %s34 = sshll.u32 %s1, 4
      %s35 = int_to_ptr.hbm [resolvable:$true] %s34
      %s36 = sshll.u32 [#allocation5], 4
      %s37 = int_to_ptr.vmem [resolvable:$true] %s36
      %42 = dma.hbm_to_vmem [thread:$0]  %s35, 1536, %s37, [#allocation6], 64, 64, 4
    $region9: #{tpu_custom_call.1} parent=1 // pred_fallthru
      _
    // Predicated region
    $region10: #{tpu_custom_call.1} parent=1 // pred_check
      _
    $region11: #{tpu_custom_call.1} parent=1 // pred_check_branch
      %44 = sbr.rel (0) target = $region13
    $region12: #{tpu_custom_call.1} parent=1 // pred_region
      _
    $region13: #{tpu_custom_call.1} parent=1 // pred_fallthru
      _
    // Predicated region
    $region14: #{tpu_custom_call.1} parent=1 // pred_check
      _
    $region15: #{tpu_custom_call.1} parent=1 // pred_check_branch
      %46 = sbr.rel (0) target = $region17
    $region16: #{tpu_custom_call.1} parent=1 // pred_region
      _
    $region17: #{tpu_custom_call.1} parent=1 // pred_fallthru
      _
    // Predicated region
    $region18: #{tpu_custom_call.1} parent=1 // pred_check
      _
    $region19: #{tpu_custom_call.1} parent=1 // pred_check_branch
      %48 = sbr.rel (0) target = $region21
    $region20: #{tpu_custom_call.1} parent=1 // pred_region
      _
    $region21: #{tpu_custom_call.1} parent=1 // pred_fallthru
      _
    // Predicated region
    $region22: #{tpu_custom_call.1} parent=1 // pred_check
      _
    $region23: #{tpu_custom_call.1} parent=1 // pred_check_branch
      %50 = sbr.rel (0) target = $region25
    $region24: #{tpu_custom_call.1} parent=1 // pred_region
      _
    $region25: #{tpu_custom_call.1} parent=1 // pred_fallthru
      _
    // Predicated region
    $region26: #{tpu_custom_call.1} parent=1 // pred_check
      _
    $region27: #{tpu_custom_call.1} parent=1 // pred_check_branch
      %52 = sbr.rel (0) target = $region29
    $region28: #{tpu_custom_call.1} parent=1 // pred_region
      _
    $region29: #{tpu_custom_call.1} parent=1 // pred_fallthru
      _
    // Predicated region
    $region30: #{tpu_custom_call.1} parent=1 // pred_check
      _
    $region31: #{tpu_custom_call.1} parent=1 // pred_check_branch
      %54 = sbr.rel (0) target = $region33
    $region32: #{tpu_custom_call.1} parent=1 // pred_region
      _
    $region33: #{tpu_custom_call.1} parent=1 // pred_fallthru
      _
    // Predicated region
    $region34: #{tpu_custom_call.1} parent=1 // pred_check
      _
    $region35: #{tpu_custom_call.1} parent=1 // pred_check_branch
      %56 = sbr.rel (0) target = $region37
    $region36: #{tpu_custom_call.1} parent=1 // pred_region
      _
    $region37: #{tpu_custom_call.1} parent=1 // pred_fallthru
      _
    // Predicated region
    $region38: #{tpu_custom_call.1} parent=1 // pred_check
      _
    $region39: #{tpu_custom_call.1} parent=1 // pred_check_branch
      %58 = sbr.rel (0) target = $region41
    $region40: #{tpu_custom_call.1} parent=1 // pred_region
      %60 = dma.done [#allocation3], 1536
    $region41: #{tpu_custom_call.1} parent=1 // pred_fallthru
      _
    // Predicated region
    $region42: #{tpu_custom_call.1} parent=1 // pred_check
      _
    $region43: #{tpu_custom_call.1} parent=1 // pred_check_branch
      %62 = sbr.rel (0) target = $region45
    $region44: #{tpu_custom_call.1} parent=1 // pred_region
      %64 = dma.done [#allocation6], 1536
    $region45: #{tpu_custom_call.1} parent=1 // pred_fallthru
      _
    %v65 = vlaneseq
    %v66 = vshrl.u32 %v65, 7
    %v67 = vadd.s32 %v66, 8
    %v68 = vadd.s32 %v66, 16
    %vm69 = vcmp.lt.s32.totalorder %v66, 0
    %v70 = vsub.s32 0, %v66
    %v71 = vsel %vm69, %v70, %v66
    %v72 = vshrl.u32 %v71, 3
    %v73 = vand.u32 %v71, 7
    %v74 = vsub.s32 0, %v73
    %v75 = vsel %vm69, %v74, %v73
    %vm76 = vcmp.lt.s32.totalorder %v67, 0
    %v77 = vsub.s32 0, %v67
    %v78 = vsel %vm76, %v77, %v67
    %v79 = vshrl.u32 %v78, 3
    %v80 = vand.u32 %v78, 7
    %v81 = vsub.s32 0, %v80
    %v82 = vsel %vm76, %v81, %v80
    %vm83 = vcmp.lt.s32.totalorder %v68, 0
    %v84 = vsub.s32 0, %v68
    %v85 = vsel %vm83, %v84, %v68
    %v86 = vshrl.u32 %v85, 3
    %v87 = vand.u32 %v85, 7
    %v88 = vsub.s32 0, %v87
    %v89 = vsel %vm83, %v88, %v87
    %vm90 = vcmp.ne.s32.totalorder %v75, 0
    %vm91 = vcmp.ne.s32.totalorder %v82, 0
    %vm92 = vcmp.ne.s32.totalorder %v89, 0
    %vm93 = vcmp.lt.s32.totalorder %v75, 0
    %vm94 = vcmp.lt.s32.totalorder %v82, 0
    %vm95 = vcmp.lt.s32.totalorder %v89, 0
    %vm96 = vmand %vm93, %vm90
    %vm97 = vmand %vm94, %vm91
    %vm98 = vmand %vm95, %vm92
    %v99 = vadd.s32 %v75, 8
    %v100 = vadd.s32 %v82, 8
    %v101 = vadd.s32 %v89, 8
    %v102 = vsel %vm96, %v99, %v75
    %v103 = vsel %vm97, %v100, %v82
    %v104 = vsel %vm98, %v101, %v89
    %vm105 = vcmp.lt.s32.totalorder %v102, 5
    %vm106 = vcmp.lt.s32.totalorder %v103, 5
    %vm107 = vcmp.lt.s32.totalorder %v104, 5
    %v108 = vsel %vm105, 1, 0
    %v109 = vsel %vm106, 1, 0
    %v110 = vsel %vm107, 1, 0
    %v111 = vcvt.s32.f32 %v108
    %v112 = vcvt.s32.f32 %v109
    %v113 = vcvt.s32.f32 %v110
    %v114 = vld [vmem:[%s2] sm:$0xf]
    %v115 = vld [vmem:[%s2 + $0x4] sm:$0xf]
    %v116 = vld [vmem:[%s2 + $0x8] sm:$0xf]
    %v117 = vld [vmem:[%s2 + $0xc] sm:$0xf]
    %v118 = vunpack.c.l.bf16 %v114
    %v119 = vunpack.c.l.bf16 %v115
    %v120 = vunpack.c.l.bf16 %v116
    %v121 = vunpack.c.l.bf16 %v117
    %v122 = vld [vmem:[#allocation2] sm:$0xf]
    %v123 = vld [vmem:[#allocation2 + $0x4] sm:$0xf]
    %v124 = vld [vmem:[#allocation2 + $0x8] sm:$0xf]
    %v125 = vld [vmem:[#allocation2 + $0xc] sm:$0xf]
    %v126 = vld [vmem:[#allocation2 + $0x10] sm:$0xf]
    %v127 = vld [vmem:[#allocation2 + $0x14] sm:$0xf]
    %v128 = vunpack.c.l.bf16 %v122
    %v129 = vunpack.c.l.bf16 %v123
    %v130 = vunpack.c.l.bf16 %v124
    %v131 = vunpack.c.l.bf16 %v125
    %v132 = vunpack.c.l.bf16 %v126
    %v133 = vunpack.c.l.bf16 %v127
    %v134 = vld [vmem:[#allocation5] sm:$0xf]
    %v135 = vld [vmem:[#allocation5 + $0x4] sm:$0xf]
    %v136 = vld [vmem:[#allocation5 + $0x8] sm:$0xf]
    %v137 = vld [vmem:[#allocation5 + $0xc] sm:$0xf]
    %v138 = vld [vmem:[#allocation5 + $0x10] sm:$0xf]
    %v139 = vld [vmem:[#allocation5 + $0x14] sm:$0xf]
    %v140 = vunpack.c.l.bf16 %v134
    %v141 = vunpack.c.l.bf16 %v135
    %v142 = vunpack.c.l.bf16 %v136
    %v143 = vunpack.c.l.bf16 %v137
    %v144 = vunpack.c.l.bf16 %v138
    %v145 = vunpack.c.l.bf16 %v139
    %v146 = vld [vmem:[%s3] sm:$0xff]
    %v147 = vperm.slane %v146, 0
    %v148 = vmul.f32 %v140, %v147
    %v149 = vmul.f32 %v141, %v147
    %v150 = vmul.f32 %v142, %v147
    %v151 = vperm.slane %v146, 1
    %v152 = vmul.f32 %v143, %v151
    %v153 = vmul.f32 %v144, %v151
    %v154 = vmul.f32 %v145, %v151
    %v155 = vadd.f32 %v148, %v152
    %v156 = vadd.f32 %v149, %v153
    %v157 = vadd.f32 %v150, %v154
    %v158 = vadd.f32 %v155, %v118
    %v159 = vadd.f32 %v156, %v118
    %v160 = vadd.f32 %v157, %v118
    %v161 = vmul.f32 %v158, 3.1415927
    %v162 = vmul.f32 %v159, 3.1415927
    %v163 = vmul.f32 %v160, 3.1415927
    %v164 = vand.u32 2147483647, %v161
    %vm165 = vcmp.le.f32.partialorder %v164, 0.7853982
    %vm166 = vcmp.lt.s32.totalorder %v161, 0
    %v167 = vand.u32 %v161, 2139095040
    %v168 = vshrl.u32 %v167, 23
    %v169 = vsub.s32 %v168, 127
    %v170 = vand.u32 2147483647, %v161
    %v171 = vand.u32 %v170, 8388607
    %v172 = vor.u32 %v171, 8388608
    %v173 = vsub.s32 0, %v172
    %v174 = vadd.s32 %v169, 1
    %vm175 = vcmp.gt.s32.totalorder %v174, 0
    %v176 = vsel %vm175, %v174, 0
    %v177 = vshrl.u32 %v176, 5
    %v178 = vand.u32 %v176, 31
    %v179 = vsub.s32 32, %v178
    %v180 = vshrl.u32 683565275, %v179
    %v181 = vshll.u32 683565275, %v178
    %v182 = vshrl.u32 2475754826, %v179
    %v183 = vor.u32 %v181, %v182
    %v184 = vshll.u32 2475754826, %v178
    %v185 = vshrl.u32 2131351028, %v179
    %v186 = vor.u32 %v184, %v185
    %v187 = vshll.u32 2131351028, %v178
    %v188 = vshrl.u32 2102212464, %v179
    %v189 = vor.u32 %v187, %v188
    %v190 = vshll.u32 2102212464, %v178
    %v191 = vshrl.u32 920167782, %v179
    %v192 = vor.u32 %v190, %v191
    %v193 = vshll.u32 920167782, %v178
    %v194 = vshrl.u32 1326507024, %v179
    %v195 = vor.u32 %v193, %v194
    %vm196 = vcmp.lt.s32.totalorder %v177, 1
    %vm197 = vcmp.lt.s32.totalorder %v177, 2
    %vm198 = vcmp.lt.s32.totalorder %v177, 3
    %vm199 = vcmp.lt.s32.totalorder %v177, 4
    %v200 = vsel %vm196, %v180, %v183
    %v201 = vsel %vm199, %v189, 2102212464
    %v202 = vsel %vm198, %v186, %v201
    %v203 = vsel %vm197, %v200, %v202
    %v204 = vsel %vm196, %v183, %v186
    %v205 = vsel %vm199, %v192, 920167782
    %v206 = vsel %vm198, %v189, %v205
    %v207 = vsel %vm197, %v204, %v206
    %v208 = vsel %vm196, %v186, %v189
    %v209 = vsel %vm199, %v195, 1326507024
    %v210 = vsel %vm198, %v192, %v209
    %v211 = vsel %vm197, %v208, %v210
    %v212 = vshll.u32 %v172, 8
    %v213 = vand.u32 %v212, 65535
    %v214 = vshrl.u32 %v212, 16
    %v215 = vand.u32 %v211, 65535
    %v216 = vshrl.u32 %v211, 16
    %v217 = vmul.u32 %v213, %v215
    %v218 = vmul.u32 %v213, %v216
    %v219 = vmul.u32 %v214, %v215
    %v220 = vmul.u32 %v214, %v216
    %v221 = vshll.u32 %v218, 16
    %v222 = vshrl.u32 %v218, 16
    %v223 = vshll.u32 %v219, 16
    %v224 = vshrl.u32 %v219, 16
    %vm225 = vc.u32 %v217, %v221
    %v226 = vsel %vm225, 1, 0
    %v227 = vadd.s32 %v217, %v221
    %v228 = vadd.s32 %v220, %v226
    %vm229 = vc.u32 %v227, %v223
    %v230 = vsel %vm229, 1, 0
    %v231 = vadd.s32 %v227, %v223
    %v232 = vadd.s32 %v228, %v230
    %v233 = vadd.s32 %v232, %v222
    %v234 = vadd.s32 %v233, %v224
    %v235 = vand.u32 %v212, 65535
    %v236 = vshrl.u32 %v212, 16
    %v237 = vand.u32 %v207, 65535
    %v238 = vshrl.u32 %v207, 16
    %v239 = vmul.u32 %v235, %v237
    %v240 = vmul.u32 %v235, %v238
    %v241 = vmul.u32 %v236, %v237
    %v242 = vmul.u32 %v236, %v238
    %v243 = vshll.u32 %v240, 16
    %v244 = vshrl.u32 %v240, 16
    %v245 = vshll.u32 %v241, 16
    %v246 = vshrl.u32 %v241, 16
    %vm247 = vc.u32 %v239, %v243
    %v248 = vsel %vm247, 1, 0
    %v249 = vadd.s32 %v239, %v243
    %v250 = vadd.s32 %v242, %v248
    %vm251 = vc.u32 %v249, %v245
    %v252 = vsel %vm251, 1, 0
    %v253 = vadd.s32 %v249, %v245
    %v254 = vadd.s32 %v250, %v252
    %v255 = vadd.s32 %v254, %v244
    %v256 = vadd.s32 %v255, %v246
    %v257 = vmul.u32 %v212, %v203
    %v258 = vadd.s32 %v234, %v253
    %vm259 = vc.u32 %v234, %v253
    %v260 = vadd.s32 %v256, 1
    %v261 = vsel %vm259, %v260, %v256
    %v262 = vadd.s32 %v257, %v261
    %v263 = vadd.s32 %v262, 536870912
    %v264 = vshrl.u32 %v263, 30
    %v265 = vshll.u32 %v264, 30
    %v266 = vsub.s32 %v262, %v265
    %vm267 = vcmp.lt.s32.totalorder %v266, 0
    %v268 = vsub.s32 0, %v266
    %v269 = vsel %vm267, %v268, %v266
    %v270 = vclz %v269
    %v271 = vsub.s32 %v270, 2
    %vm272 = vcmp.gt.s32.totalorder 0, %v271
    %v273 = vsel %vm272, 0, %v271
    %v274 = vsub.s32 32, %v273
    %v275 = vshll.u32 %v266, %v273
    %v276 = vshrl.u32 %v258, %v274
    %v277 = vor.u32 %v275, %v276
    %v278 = vsub.s32 4294967266, %v273
    %v279 = vadd.s32 %v278, 127
    %v280 = vshll.u32 %v279, 23
    %v281 = vor.u32 4788187, %v280
    %v282 = vand.u32 2147483647, %v281
    %v284 = vcvt.s32.f32 %v277
    %v285 = vmul.f32 %v284, %v282
    %v286 = vxor.u32 %v285, 2147483648
    %v287 = vsel %vm166, %v286, %v285
    %v288 = vsub.s32 4, %v264
    %v289 = vsel %vm166, %v288, %v264
    %v290 = vsel %vm165, %v161, %v287
    %v291 = vsel %vm165, 0, %v289
    %v292 = vmul.f32 %v290, %v290
    %v293 = vmul.f32 %v292, -0.001358992
    %v294 = vadd.f32 %v293, 0.041655596
    %v295 = vmul.f32 %v292, %v294
    %v296 = vadd.f32 %v295, -0.4999988
    %v297 = vmul.f32 %v292, %v296
    %v298 = vadd.f32 1.0, %v297
    %v299 = vmul.f32 %v290, %v290
    %v300 = vmul.f32 %v299, -0.00019511016
    %v301 = vadd.f32 %v300, 0.008332121
    %v302 = vmul.f32 %v299, %v301
    %v303 = vadd.f32 %v302, -0.16666654
    %v304 = vmul.f32 %v299, %v303
    %v305 = vadd.f32 %v304, 1.0
    %v306 = vmul.f32 %v305, %v290
    %vm307 = vweird.f32 %v161
    %v308 = vand.u32 %v291, 3
    %vm309 = vcmp.lt.s32.totalorder %v308, 2
    %vm310 = vcmp.eq.s32.totalorder %v308, 0
    %v311 = vxor.u32 %v306, 2147483648
    %v312 = vsel %vm310, %v298, %v311
    %vm313 = vcmp.eq.s32.totalorder %v308, 2
    %v314 = vxor.u32 %v298, 2147483648
    %v315 = vsel %vm313, %v314, %v306
    %v316 = vsel %vm309, %v312, %v315
    %v317 = vsel %vm307, nan, %v316
    %v318 = vand.u32 2147483647, %v162
    %vm319 = vcmp.le.f32.partialorder %v318, 0.7853982
    %vm320 = vcmp.lt.s32.totalorder %v162, 0
    %v321 = vand.u32 %v162, 2139095040
    %v322 = vshrl.u32 %v321, 23
    %v323 = vsub.s32 %v322, 127
    %v324 = vand.u32 2147483647, %v162
    %v325 = vand.u32 %v324, 8388607
    %v326 = vor.u32 %v325, 8388608
    %v327 = vsub.s32 0, %v326
    %v328 = vadd.s32 %v323, 1
    %vm329 = vcmp.gt.s32.totalorder %v328, 0
    %v330 = vsel %vm329, %v328, 0
    %v331 = vshrl.u32 %v330, 5
    %v332 = vand.u32 %v330, 31
    %v333 = vsub.s32 32, %v332
    %v334 = vshrl.u32 683565275, %v333
    %v335 = vshll.u32 683565275, %v332
    %v336 = vshrl.u32 2475754826, %v333
    %v337 = vor.u32 %v335, %v336
    %v338 = vshll.u32 2475754826, %v332
    %v339 = vshrl.u32 2131351028, %v333
    %v340 = vor.u32 %v338, %v339
    %v341 = vshll.u32 2131351028, %v332
    %v342 = vshrl.u32 2102212464, %v333
    %v343 = vor.u32 %v341, %v342
    %v344 = vshll.u32 2102212464, %v332
    %v345 = vshrl.u32 920167782, %v333
    %v346 = vor.u32 %v344, %v345
    %v347 = vshll.u32 920167782, %v332
    %v348 = vshrl.u32 1326507024, %v333
    %v349 = vor.u32 %v347, %v348
    %vm350 = vcmp.lt.s32.totalorder %v331, 1
    %vm351 = vcmp.lt.s32.totalorder %v331, 2
    %vm352 = vcmp.lt.s32.totalorder %v331, 3
    %vm353 = vcmp.lt.s32.totalorder %v331, 4
    %v354 = vsel %vm350, %v334, %v337
    %v355 = vsel %vm353, %v343, 2102212464
    %v356 = vsel %vm352, %v340, %v355
    %v357 = vsel %vm351, %v354, %v356
    %v358 = vsel %vm350, %v337, %v340
    %v359 = vsel %vm353, %v346, 920167782
    %v360 = vsel %vm352, %v343, %v359
    %v361 = vsel %vm351, %v358, %v360
    %v362 = vsel %vm350, %v340, %v343
    %v363 = vsel %vm353, %v349, 1326507024
    %v364 = vsel %vm352, %v346, %v363
    %v365 = vsel %vm351, %v362, %v364
    %v366 = vshll.u32 %v326, 8
    %v367 = vand.u32 %v366, 65535
    %v368 = vshrl.u32 %v366, 16
    %v369 = vand.u32 %v365, 65535
    %v370 = vshrl.u32 %v365, 16
    %v371 = vmul.u32 %v367, %v369
    %v372 = vmul.u32 %v367, %v370
    %v373 = vmul.u32 %v368, %v369
    %v374 = vmul.u32 %v368, %v370
    %v375 = vshll.u32 %v372, 16
    %v376 = vshrl.u32 %v372, 16
    %v377 = vshll.u32 %v373, 16
    %v378 = vshrl.u32 %v373, 16
    %vm379 = vc.u32 %v371, %v375
    %v380 = vsel %vm379, 1, 0
    %v381 = vadd.s32 %v371, %v375
    %v382 = vadd.s32 %v374, %v380
    %vm383 = vc.u32 %v381, %v377
    %v384 = vsel %vm383, 1, 0
    %v385 = vadd.s32 %v381, %v377
    %v386 = vadd.s32 %v382, %v384
    %v387 = vadd.s32 %v386, %v376
    %v388 = vadd.s32 %v387, %v378
    %v389 = vand.u32 %v366, 65535
    %v390 = vshrl.u32 %v366, 16
    %v391 = vand.u32 %v361, 65535
    %v392 = vshrl.u32 %v361, 16
    %v393 = vmul.u32 %v389, %v391
    %v394 = vmul.u32 %v389, %v392
    %v395 = vmul.u32 %v390, %v391
    %v396 = vmul.u32 %v390, %v392
    %v397 = vshll.u32 %v394, 16
    %v398 = vshrl.u32 %v394, 16
    %v399 = vshll.u32 %v395, 16
    %v400 = vshrl.u32 %v395, 16
    %vm401 = vc.u32 %v393, %v397
    %v402 = vsel %vm401, 1, 0
    %v403 = vadd.s32 %v393, %v397
    %v404 = vadd.s32 %v396, %v402
    %vm405 = vc.u32 %v403, %v399
    %v406 = vsel %vm405, 1, 0
    %v407 = vadd.s32 %v403, %v399
    %v408 = vadd.s32 %v404, %v406
    %v409 = vadd.s32 %v408, %v398
    %v410 = vadd.s32 %v409, %v400
    %v411 = vmul.u32 %v366, %v357
    %v412 = vadd.s32 %v388, %v407
    %vm413 = vc.u32 %v388, %v407
    %v414 = vadd.s32 %v410, 1
    %v415 = vsel %vm413, %v414, %v410
    %v416 = vadd.s32 %v411, %v415
    %v417 = vadd.s32 %v416, 536870912
    %v418 = vshrl.u32 %v417, 30
    %v419 = vshll.u32 %v418, 30
    %v420 = vsub.s32 %v416, %v419
    %vm421 = vcmp.lt.s32.totalorder %v420, 0
    %v422 = vsub.s32 0, %v420
    %v423 = vsel %vm421, %v422, %v420
    %v424 = vclz %v423
    %v425 = vsub.s32 %v424, 2
    %vm426 = vcmp.gt.s32.totalorder 0, %v425
    %v427 = vsel %vm426, 0, %v425
    %v428 = vsub.s32 32, %v427
    %v429 = vshll.u32 %v420, %v427
    %v430 = vshrl.u32 %v412, %v428
    %v431 = vor.u32 %v429, %v430
    %v432 = vsub.s32 4294967266, %v427
    %v433 = vadd.s32 %v432, 127
    %v434 = vshll.u32 %v433, 23
    %v435 = vor.u32 4788187, %v434
    %v436 = vand.u32 2147483647, %v435
    %v438 = vcvt.s32.f32 %v431
    %v439 = vmul.f32 %v438, %v436
    %v440 = vxor.u32 %v439, 2147483648
    %v441 = vsel %vm320, %v440, %v439
    %v442 = vsub.s32 4, %v418
    %v443 = vsel %vm320, %v442, %v418
    %v444 = vsel %vm319, %v162, %v441
    %v445 = vsel %vm319, 0, %v443
    %v446 = vmul.f32 %v444, %v444
    %v447 = vmul.f32 %v446, -0.001358992
    %v448 = vadd.f32 %v447, 0.041655596
    %v449 = vmul.f32 %v446, %v448
    %v450 = vadd.f32 %v449, -0.4999988
    %v451 = vmul.f32 %v446, %v450
    %v452 = vadd.f32 1.0, %v451
    %v453 = vmul.f32 %v444, %v444
    %v454 = vmul.f32 %v453, -0.00019511016
    %v455 = vadd.f32 %v454, 0.008332121
    %v456 = vmul.f32 %v453, %v455
    %v457 = vadd.f32 %v456, -0.16666654
    %v458 = vmul.f32 %v453, %v457
    %v459 = vadd.f32 %v458, 1.0
    %v460 = vmul.f32 %v459, %v444
    %vm461 = vweird.f32 %v162
    %v462 = vand.u32 %v445, 3
    %vm463 = vcmp.lt.s32.totalorder %v462, 2
    %vm464 = vcmp.eq.s32.totalorder %v462, 0
    %v465 = vxor.u32 %v460, 2147483648
    %v466 = vsel %vm464, %v452, %v465
    %vm467 = vcmp.eq.s32.totalorder %v462, 2
    %v468 = vxor.u32 %v452, 2147483648
    %v469 = vsel %vm467, %v468, %v460
    %v470 = vsel %vm463, %v466, %v469
    %v471 = vsel %vm461, nan, %v470
    %v472 = vand.u32 2147483647, %v163
    %vm473 = vcmp.le.f32.partialorder %v472, 0.7853982
    %vm474 = vcmp.lt.s32.totalorder %v163, 0
    %v475 = vand.u32 %v163, 2139095040
    %v476 = vshrl.u32 %v475, 23
    %v477 = vsub.s32 %v476, 127
    %v478 = vand.u32 2147483647, %v163
    %v479 = vand.u32 %v478, 8388607
    %v480 = vor.u32 %v479, 8388608
    %v481 = vsub.s32 0, %v480
    %v482 = vadd.s32 %v477, 1
    %vm483 = vcmp.gt.s32.totalorder %v482, 0
    %v484 = vsel %vm483, %v482, 0
    %v485 = vshrl.u32 %v484, 5
    %v486 = vand.u32 %v484, 31
    %v487 = vsub.s32 32, %v486
    %v488 = vshrl.u32 683565275, %v487
    %v489 = vshll.u32 683565275, %v486
    %v490 = vshrl.u32 2475754826, %v487
    %v491 = vor.u32 %v489, %v490
    %v492 = vshll.u32 2475754826, %v486
    %v493 = vshrl.u32 2131351028, %v487
    %v494 = vor.u32 %v492, %v493
    %v495 = vshll.u32 2131351028, %v486
    %v496 = vshrl.u32 2102212464, %v487
    %v497 = vor.u32 %v495, %v496
    %v498 = vshll.u32 2102212464, %v486
    %v499 = vshrl.u32 920167782, %v487
    %v500 = vor.u32 %v498, %v499
    %v501 = vshll.u32 920167782, %v486
    %v502 = vshrl.u32 1326507024, %v487
    %v503 = vor.u32 %v501, %v502
    %vm504 = vcmp.lt.s32.totalorder %v485, 1
    %vm505 = vcmp.lt.s32.totalorder %v485, 2
    %vm506 = vcmp.lt.s32.totalorder %v485, 3
    %vm507 = vcmp.lt.s32.totalorder %v485, 4
    %v508 = vsel %vm504, %v488, %v491
    %v509 = vsel %vm507, %v497, 2102212464
    %v510 = vsel %vm506, %v494, %v509
    %v511 = vsel %vm505, %v508, %v510
    %v512 = vsel %vm504, %v491, %v494
    %v513 = vsel %vm507, %v500, 920167782
    %v514 = vsel %vm506, %v497, %v513
    %v515 = vsel %vm505, %v512, %v514
    %v516 = vsel %vm504, %v494, %v497
    %v517 = vsel %vm507, %v503, 1326507024
    %v518 = vsel %vm506, %v500, %v517
    %v519 = vsel %vm505, %v516, %v518
    %v520 = vshll.u32 %v480, 8
    %v521 = vand.u32 %v520, 65535
    %v522 = vshrl.u32 %v520, 16
    %v523 = vand.u32 %v519, 65535
    %v524 = vshrl.u32 %v519, 16
    %v525 = vmul.u32 %v521, %v523
    %v526 = vmul.u32 %v521, %v524
    %v527 = vmul.u32 %v522, %v523
    %v528 = vmul.u32 %v522, %v524
    %v529 = vshll.u32 %v526, 16
    %v530 = vshrl.u32 %v526, 16
    %v531 = vshll.u32 %v527, 16
    %v532 = vshrl.u32 %v527, 16
    %vm533 = vc.u32 %v525, %v529
    %v534 = vsel %vm533, 1, 0
    %v535 = vadd.s32 %v525, %v529
    %v536 = vadd.s32 %v528, %v534
    %vm537 = vc.u32 %v535, %v531
    %v538 = vsel %vm537, 1, 0
    %v539 = vadd.s32 %v535, %v531
    %v540 = vadd.s32 %v536, %v538
    %v541 = vadd.s32 %v540, %v530
    %v542 = vadd.s32 %v541, %v532
    %v543 = vand.u32 %v520, 65535
    %v544 = vshrl.u32 %v520, 16
    %v545 = vand.u32 %v515, 65535
    %v546 = vshrl.u32 %v515, 16
    %v547 = vmul.u32 %v543, %v545
    %v548 = vmul.u32 %v543, %v546
    %v549 = vmul.u32 %v544, %v545
    %v550 = vmul.u32 %v544, %v546
    %v551 = vshll.u32 %v548, 16
    %v552 = vshrl.u32 %v548, 16
    %v553 = vshll.u32 %v549, 16
    %v554 = vshrl.u32 %v549, 16
    %vm555 = vc.u32 %v547, %v551
    %v556 = vsel %vm555, 1, 0
    %v557 = vadd.s32 %v547, %v551
    %v558 = vadd.s32 %v550, %v556
    %vm559 = vc.u32 %v557, %v553
    %v560 = vsel %vm559, 1, 0
    %v561 = vadd.s32 %v557, %v553
    %v562 = vadd.s32 %v558, %v560
    %v563 = vadd.s32 %v562, %v552
    %v564 = vadd.s32 %v563, %v554
    %v565 = vmul.u32 %v520, %v511
    %v566 = vadd.s32 %v542, %v561
    %vm567 = vc.u32 %v542, %v561
    %v568 = vadd.s32 %v564, 1
    %v569 = vsel %vm567, %v568, %v564
    %v570 = vadd.s32 %v565, %v569
    %v571 = vadd.s32 %v570, 536870912
    %v572 = vshrl.u32 %v571, 30
    %v573 = vshll.u32 %v572, 30
    %v574 = vsub.s32 %v570, %v573
    %vm575 = vcmp.lt.s32.totalorder %v574, 0
    %v576 = vsub.s32 0, %v574
    %v577 = vsel %vm575, %v576, %v574
    %v578 = vclz %v577
    %v579 = vsub.s32 %v578, 2
    %vm580 = vcmp.gt.s32.totalorder 0, %v579
    %v581 = vsel %vm580, 0, %v579
    %v582 = vsub.s32 32, %v581
    %v583 = vshll.u32 %v574, %v581
    %v584 = vshrl.u32 %v566, %v582
    %v585 = vor.u32 %v583, %v584
    %v586 = vsub.s32 4294967266, %v581
    %v587 = vadd.s32 %v586, 127
    %v588 = vshll.u32 %v587, 23
    %v589 = vor.u32 4788187, %v588
    %v590 = vand.u32 2147483647, %v589
    %v592 = vcvt.s32.f32 %v585
    %v593 = vmul.f32 %v592, %v590
    %v594 = vxor.u32 %v593, 2147483648
    %v595 = vsel %vm474, %v594, %v593
    %v596 = vsub.s32 4, %v572
    %v597 = vsel %vm474, %v596, %v572
    %v598 = vsel %vm473, %v163, %v595
    %v599 = vsel %vm473, 0, %v597
    %v600 = vmul.f32 %v598, %v598
    %v601 = vmul.f32 %v600, -0.001358992
    %v602 = vadd.f32 %v601, 0.041655596
    %v603 = vmul.f32 %v600, %v602
    %v604 = vadd.f32 %v603, -0.4999988
    %v605 = vmul.f32 %v600, %v604
    %v606 = vadd.f32 1.0, %v605
    %v607 = vmul.f32 %v598, %v598
    %v608 = vmul.f32 %v607, -0.00019511016
    %v609 = vadd.f32 %v608, 0.008332121
    %v610 = vmul.f32 %v607, %v609
    %v611 = vadd.f32 %v610, -0.16666654
    %v612 = vmul.f32 %v607, %v611
    %v613 = vadd.f32 %v612, 1.0
    %v614 = vmul.f32 %v613, %v598
    %vm615 = vweird.f32 %v163
    %v616 = vand.u32 %v599, 3
    %vm617 = vcmp.lt.s32.totalorder %v616, 2
    %vm618 = vcmp.eq.s32.totalorder %v616, 0
    %v619 = vxor.u32 %v614, 2147483648
    %v620 = vsel %vm618, %v606, %v619
    %vm621 = vcmp.eq.s32.totalorder %v616, 2
    %v622 = vxor.u32 %v606, 2147483648
    %v623 = vsel %vm621, %v622, %v614
    %v624 = vsel %vm617, %v620, %v623
    %v625 = vsel %vm615, nan, %v624
    %v626 = vmul.f32 %v128, %v317
    %v627 = vmul.f32 %v129, %v471
    %v628 = vmul.f32 %v130, %v625
    %v629 = vand.u32 2147483647, %v161
    %vm630 = vcmp.le.f32.partialorder %v629, 0.7853982
    %vm631 = vcmp.lt.s32.totalorder %v161, 0
    %v632 = vand.u32 %v161, 2139095040
    %v633 = vshrl.u32 %v632, 23
    %v634 = vsub.s32 %v633, 127
    %v635 = vand.u32 2147483647, %v161
    %v636 = vand.u32 %v635, 8388607
    %v637 = vor.u32 %v636, 8388608
    %v638 = vsub.s32 0, %v637
    %v639 = vadd.s32 %v634, 1
    %vm640 = vcmp.gt.s32.totalorder %v639, 0
    %v641 = vsel %vm640, %v639, 0
    %v642 = vshrl.u32 %v641, 5
    %v643 = vand.u32 %v641, 31
    %v644 = vsub.s32 32, %v643
    %v645 = vshrl.u32 683565275, %v644
    %v646 = vshll.u32 683565275, %v643
    %v647 = vshrl.u32 2475754826, %v644
    %v648 = vor.u32 %v646, %v647
    %v649 = vshll.u32 2475754826, %v643
    %v650 = vshrl.u32 2131351028, %v644
    %v651 = vor.u32 %v649, %v650
    %v652 = vshll.u32 2131351028, %v643
    %v653 = vshrl.u32 2102212464, %v644
    %v654 = vor.u32 %v652, %v653
    %v655 = vshll.u32 2102212464, %v643
    %v656 = vshrl.u32 920167782, %v644
    %v657 = vor.u32 %v655, %v656
    %v658 = vshll.u32 920167782, %v643
    %v659 = vshrl.u32 1326507024, %v644
    %v660 = vor.u32 %v658, %v659
    %vm661 = vcmp.lt.s32.totalorder %v642, 1
    %vm662 = vcmp.lt.s32.totalorder %v642, 2
    %vm663 = vcmp.lt.s32.totalorder %v642, 3
    %vm664 = vcmp.lt.s32.totalorder %v642, 4
    %v665 = vsel %vm661, %v645, %v648
    %v666 = vsel %vm664, %v654, 2102212464
    %v667 = vsel %vm663, %v651, %v666
    %v668 = vsel %vm662, %v665, %v667
    %v669 = vsel %vm661, %v648, %v651
    %v670 = vsel %vm664, %v657, 920167782
    %v671 = vsel %vm663, %v654, %v670
    %v672 = vsel %vm662, %v669, %v671
    %v673 = vsel %vm661, %v651, %v654
    %v674 = vsel %vm664, %v660, 1326507024
    %v675 = vsel %vm663, %v657, %v674
    %v676 = vsel %vm662, %v673, %v675
    %v677 = vshll.u32 %v637, 8
    %v678 = vand.u32 %v677, 65535
    %v679 = vshrl.u32 %v677, 16
    %v680 = vand.u32 %v676, 65535
    %v681 = vshrl.u32 %v676, 16
    %v682 = vmul.u32 %v678, %v680
    %v683 = vmul.u32 %v678, %v681
    %v684 = vmul.u32 %v679, %v680
    %v685 = vmul.u32 %v679, %v681
    %v686 = vshll.u32 %v683, 16
    %v687 = vshrl.u32 %v683, 16
    %v688 = vshll.u32 %v684, 16
    %v689 = vshrl.u32 %v684, 16
    %vm690 = vc.u32 %v682, %v686
    %v691 = vsel %vm690, 1, 0
    %v692 = vadd.s32 %v682, %v686
    %v693 = vadd.s32 %v685, %v691
    %vm694 = vc.u32 %v692, %v688
    %v695 = vsel %vm694, 1, 0
    %v696 = vadd.s32 %v692, %v688
    %v697 = vadd.s32 %v693, %v695
    %v698 = vadd.s32 %v697, %v687
    %v699 = vadd.s32 %v698, %v689
    %v700 = vand.u32 %v677, 65535
    %v701 = vshrl.u32 %v677, 16
    %v702 = vand.u32 %v672, 65535
    %v703 = vshrl.u32 %v672, 16
    %v704 = vmul.u32 %v700, %v702
    %v705 = vmul.u32 %v700, %v703
    %v706 = vmul.u32 %v701, %v702
    %v707 = vmul.u32 %v701, %v703
    %v708 = vshll.u32 %v705, 16
    %v709 = vshrl.u32 %v705, 16
    %v710 = vshll.u32 %v706, 16
    %v711 = vshrl.u32 %v706, 16
    %vm712 = vc.u32 %v704, %v708
    %v713 = vsel %vm712, 1, 0
    %v714 = vadd.s32 %v704, %v708
    %v715 = vadd.s32 %v707, %v713
    %vm716 = vc.u32 %v714, %v710
    %v717 = vsel %vm716, 1, 0
    %v718 = vadd.s32 %v714, %v710
    %v719 = vadd.s32 %v715, %v717
    %v720 = vadd.s32 %v719, %v709
    %v721 = vadd.s32 %v720, %v711
    %v722 = vmul.u32 %v677, %v668
    %v723 = vadd.s32 %v699, %v718
    %vm724 = vc.u32 %v699, %v718
    %v725 = vadd.s32 %v721, 1
    %v726 = vsel %vm724, %v725, %v721
    %v727 = vadd.s32 %v722, %v726
    %v728 = vadd.s32 %v727, 536870912
    %v729 = vshrl.u32 %v728, 30
    %v730 = vshll.u32 %v729, 30
    %v731 = vsub.s32 %v727, %v730
    %vm732 = vcmp.lt.s32.totalorder %v731, 0
    %v733 = vsub.s32 0, %v731
    %v734 = vsel %vm732, %v733, %v731
    %v735 = vclz %v734
    %v736 = vsub.s32 %v735, 2
    %vm737 = vcmp.gt.s32.totalorder 0, %v736
    %v738 = vsel %vm737, 0, %v736
    %v739 = vsub.s32 32, %v738
    %v740 = vshll.u32 %v731, %v738
    %v741 = vshrl.u32 %v723, %v739
    %v742 = vor.u32 %v740, %v741
    %v743 = vsub.s32 4294967266, %v738
    %v744 = vadd.s32 %v743, 127
    %v745 = vshll.u32 %v744, 23
    %v746 = vor.u32 4788187, %v745
    %v747 = vand.u32 2147483647, %v746
    %v749 = vcvt.s32.f32 %v742
    %v750 = vmul.f32 %v749, %v747
    %v751 = vxor.u32 %v750, 2147483648
    %v752 = vsel %vm631, %v751, %v750
    %v753 = vsub.s32 4, %v729
    %v754 = vsel %vm631, %v753, %v729
    %v755 = vsel %vm630, %v161, %v752
    %v756 = vsel %vm630, 0, %v754
    %v757 = vmul.f32 %v755, %v755
    %v758 = vmul.f32 %v757, -0.001358992
    %v759 = vadd.f32 %v758, 0.041655596
    %v760 = vmul.f32 %v757, %v759
    %v761 = vadd.f32 %v760, -0.4999988
    %v762 = vmul.f32 %v757, %v761
    %v763 = vadd.f32 1.0, %v762
    %v764 = vmul.f32 %v755, %v755
    %v765 = vmul.f32 %v764, -0.00019511016
    %v766 = vadd.f32 %v765, 0.008332121
    %v767 = vmul.f32 %v764, %v766
    %v768 = vadd.f32 %v767, -0.16666654
    %v769 = vmul.f32 %v764, %v768
    %v770 = vadd.f32 %v769, 1.0
    %v771 = vmul.f32 %v770, %v755
    %vm772 = vweird.f32 %v161
    %v773 = vadd.s32 %v756, 3
    %v774 = vand.u32 %v773, 3
    %vm775 = vcmp.lt.s32.totalorder %v774, 2
    %vm776 = vcmp.eq.s32.totalorder %v774, 0
    %v777 = vxor.u32 %v771, 2147483648
    %v778 = vsel %vm776, %v763, %v777
    %vm779 = vcmp.eq.s32.totalorder %v774, 2
    %v780 = vxor.u32 %v763, 2147483648
    %v781 = vsel %vm779, %v780, %v771
    %v782 = vsel %vm775, %v778, %v781
    %v783 = vsel %vm772, nan, %v782
    %v784 = vand.u32 2147483647, %v162
    %vm785 = vcmp.le.f32.partialorder %v784, 0.7853982
    %vm786 = vcmp.lt.s32.totalorder %v162, 0
    %v787 = vand.u32 %v162, 2139095040
    %v788 = vshrl.u32 %v787, 23
    %v789 = vsub.s32 %v788, 127
    %v790 = vand.u32 2147483647, %v162
    %v791 = vand.u32 %v790, 8388607
    %v792 = vor.u32 %v791, 8388608
    %v793 = vsub.s32 0, %v792
    %v794 = vadd.s32 %v789, 1
    %vm795 = vcmp.gt.s32.totalorder %v794, 0
    %v796 = vsel %vm795, %v794, 0
    %v797 = vshrl.u32 %v796, 5
    %v798 = vand.u32 %v796, 31
    %v799 = vsub.s32 32, %v798
    %v800 = vshrl.u32 683565275, %v799
    %v801 = vshll.u32 683565275, %v798
    %v802 = vshrl.u32 2475754826, %v799
    %v803 = vor.u32 %v801, %v802
    %v804 = vshll.u32 2475754826, %v798
    %v805 = vshrl.u32 2131351028, %v799
    %v806 = vor.u32 %v804, %v805
    %v807 = vshll.u32 2131351028, %v798
    %v808 = vshrl.u32 2102212464, %v799
    %v809 = vor.u32 %v807, %v808
    %v810 = vshll.u32 2102212464, %v798
    %v811 = vshrl.u32 920167782, %v799
    %v812 = vor.u32 %v810, %v811
    %v813 = vshll.u32 920167782, %v798
    %v814 = vshrl.u32 1326507024, %v799
    %v815 = vor.u32 %v813, %v814
    %vm816 = vcmp.lt.s32.totalorder %v797, 1
    %vm817 = vcmp.lt.s32.totalorder %v797, 2
    %vm818 = vcmp.lt.s32.totalorder %v797, 3
    %vm819 = vcmp.lt.s32.totalorder %v797, 4
    %v820 = vsel %vm816, %v800, %v803
    %v821 = vsel %vm819, %v809, 2102212464
    %v822 = vsel %vm818, %v806, %v821
    %v823 = vsel %vm817, %v820, %v822
    %v824 = vsel %vm816, %v803, %v806
    %v825 = vsel %vm819, %v812, 920167782
    %v826 = vsel %vm818, %v809, %v825
    %v827 = vsel %vm817, %v824, %v826
    %v828 = vsel %vm816, %v806, %v809
    %v829 = vsel %vm819, %v815, 1326507024
    %v830 = vsel %vm818, %v812, %v829
    %v831 = vsel %vm817, %v828, %v830
    %v832 = vshll.u32 %v792, 8
    %v833 = vand.u32 %v832, 65535
    %v834 = vshrl.u32 %v832, 16
    %v835 = vand.u32 %v831, 65535
    %v836 = vshrl.u32 %v831, 16
    %v837 = vmul.u32 %v833, %v835
    %v838 = vmul.u32 %v833, %v836
    %v839 = vmul.u32 %v834, %v835
    %v840 = vmul.u32 %v834, %v836
    %v841 = vshll.u32 %v838, 16
    %v842 = vshrl.u32 %v838, 16
    %v843 = vshll.u32 %v839, 16
    %v844 = vshrl.u32 %v839, 16
    %vm845 = vc.u32 %v837, %v841
    %v846 = vsel %vm845, 1, 0
    %v847 = vadd.s32 %v837, %v841
    %v848 = vadd.s32 %v840, %v846
    %vm849 = vc.u32 %v847, %v843
    %v850 = vsel %vm849, 1, 0
    %v851 = vadd.s32 %v847, %v843
    %v852 = vadd.s32 %v848, %v850
    %v853 = vadd.s32 %v852, %v842
    %v854 = vadd.s32 %v853, %v844
    %v855 = vand.u32 %v832, 65535
    %v856 = vshrl.u32 %v832, 16
    %v857 = vand.u32 %v827, 65535
    %v858 = vshrl.u32 %v827, 16
    %v859 = vmul.u32 %v855, %v857
    %v860 = vmul.u32 %v855, %v858
    %v861 = vmul.u32 %v856, %v857
    %v862 = vmul.u32 %v856, %v858
    %v863 = vshll.u32 %v860, 16
    %v864 = vshrl.u32 %v860, 16
    %v865 = vshll.u32 %v861, 16
    %v866 = vshrl.u32 %v861, 16
    %vm867 = vc.u32 %v859, %v863
    %v868 = vsel %vm867, 1, 0
    %v869 = vadd.s32 %v859, %v863
    %v870 = vadd.s32 %v862, %v868
    %vm871 = vc.u32 %v869, %v865
    %v872 = vsel %vm871, 1, 0
    %v873 = vadd.s32 %v869, %v865
    %v874 = vadd.s32 %v870, %v872
    %v875 = vadd.s32 %v874, %v864
    %v876 = vadd.s32 %v875, %v866
    %v877 = vmul.u32 %v832, %v823
    %v878 = vadd.s32 %v854, %v873
    %vm879 = vc.u32 %v854, %v873
    %v880 = vadd.s32 %v876, 1
    %v881 = vsel %vm879, %v880, %v876
    %v882 = vadd.s32 %v877, %v881
    %v883 = vadd.s32 %v882, 536870912
    %v884 = vshrl.u32 %v883, 30
    %v885 = vshll.u32 %v884, 30
    %v886 = vsub.s32 %v882, %v885
    %vm887 = vcmp.lt.s32.totalorder %v886, 0
    %v888 = vsub.s32 0, %v886
    %v889 = vsel %vm887, %v888, %v886
    %v890 = vclz %v889
    %v891 = vsub.s32 %v890, 2
    %vm892 = vcmp.gt.s32.totalorder 0, %v891
    %v893 = vsel %vm892, 0, %v891
    %v894 = vsub.s32 32, %v893
    %v895 = vshll.u32 %v886, %v893
    %v896 = vshrl.u32 %v878, %v894
    %v897 = vor.u32 %v895, %v896
    %v898 = vsub.s32 4294967266, %v893
    %v899 = vadd.s32 %v898, 127
    %v900 = vshll.u32 %v899, 23
    %v901 = vor.u32 4788187, %v900
    %v902 = vand.u32 2147483647, %v901
    %v904 = vcvt.s32.f32 %v897
    %v905 = vmul.f32 %v904, %v902
    %v906 = vxor.u32 %v905, 2147483648
    %v907 = vsel %vm786, %v906, %v905
    %v908 = vsub.s32 4, %v884
    %v909 = vsel %vm786, %v908, %v884
    %v910 = vsel %vm785, %v162, %v907
    %v911 = vsel %vm785, 0, %v909
    %v912 = vmul.f32 %v910, %v910
    %v913 = vmul.f32 %v912, -0.001358992
    %v914 = vadd.f32 %v913, 0.041655596
    %v915 = vmul.f32 %v912, %v914
    %v916 = vadd.f32 %v915, -0.4999988
    %v917 = vmul.f32 %v912, %v916
    %v918 = vadd.f32 1.0, %v917
    %v919 = vmul.f32 %v910, %v910
    %v920 = vmul.f32 %v919, -0.00019511016
    %v921 = vadd.f32 %v920, 0.008332121
    %v922 = vmul.f32 %v919, %v921
    %v923 = vadd.f32 %v922, -0.16666654
    %v924 = vmul.f32 %v919, %v923
    %v925 = vadd.f32 %v924, 1.0
    %v926 = vmul.f32 %v925, %v910
    %vm927 = vweird.f32 %v162
    %v928 = vadd.s32 %v911, 3
    %v929 = vand.u32 %v928, 3
    %vm930 = vcmp.lt.s32.totalorder %v929, 2
    %vm931 = vcmp.eq.s32.totalorder %v929, 0
    %v932 = vxor.u32 %v926, 2147483648
    %v933 = vsel %vm931, %v918, %v932
    %vm934 = vcmp.eq.s32.totalorder %v929, 2
    %v935 = vxor.u32 %v918, 2147483648
    %v936 = vsel %vm934, %v935, %v926
    %v937 = vsel %vm930, %v933, %v936
    %v938 = vsel %vm927, nan, %v937
    %v939 = vand.u32 2147483647, %v163
    %vm940 = vcmp.le.f32.partialorder %v939, 0.7853982
    %vm941 = vcmp.lt.s32.totalorder %v163, 0
    %v942 = vand.u32 %v163, 2139095040
    %v943 = vshrl.u32 %v942, 23
    %v944 = vsub.s32 %v943, 127
    %v945 = vand.u32 2147483647, %v163
    %v946 = vand.u32 %v945, 8388607
    %v947 = vor.u32 %v946, 8388608
    %v948 = vsub.s32 0, %v947
    %v949 = vadd.s32 %v944, 1
    %vm950 = vcmp.gt.s32.totalorder %v949, 0
    %v951 = vsel %vm950, %v949, 0
    %v952 = vshrl.u32 %v951, 5
    %v953 = vand.u32 %v951, 31
    %v954 = vsub.s32 32, %v953
    %v955 = vshrl.u32 683565275, %v954
    %v956 = vshll.u32 683565275, %v953
    %v957 = vshrl.u32 2475754826, %v954
    %v958 = vor.u32 %v956, %v957
    %v959 = vshll.u32 2475754826, %v953
    %v960 = vshrl.u32 2131351028, %v954
    %v961 = vor.u32 %v959, %v960
    %v962 = vshll.u32 2131351028, %v953
    %v963 = vshrl.u32 2102212464, %v954
    %v964 = vor.u32 %v962, %v963
    %v965 = vshll.u32 2102212464, %v953
    %v966 = vshrl.u32 920167782, %v954
    %v967 = vor.u32 %v965, %v966
    %v968 = vshll.u32 920167782, %v953
    %v969 = vshrl.u32 1326507024, %v954
    %v970 = vor.u32 %v968, %v969
    %vm971 = vcmp.lt.s32.totalorder %v952, 1
    %vm972 = vcmp.lt.s32.totalorder %v952, 2
    %vm973 = vcmp.lt.s32.totalorder %v952, 3
    %vm974 = vcmp.lt.s32.totalorder %v952, 4
    %v975 = vsel %vm971, %v955, %v958
    %v976 = vsel %vm974, %v964, 2102212464
    %v977 = vsel %vm973, %v961, %v976
    %v978 = vsel %vm972, %v975, %v977
    %v979 = vsel %vm971, %v958, %v961
    %v980 = vsel %vm974, %v967, 920167782
    %v981 = vsel %vm973, %v964, %v980
    %v982 = vsel %vm972, %v979, %v981
    %v983 = vsel %vm971, %v961, %v964
    %v984 = vsel %vm974, %v970, 1326507024
    %v985 = vsel %vm973, %v967, %v984
    %v986 = vsel %vm972, %v983, %v985
    %v987 = vshll.u32 %v947, 8
    %v988 = vand.u32 %v987, 65535
    %v989 = vshrl.u32 %v987, 16
    %v990 = vand.u32 %v986, 65535
    %v991 = vshrl.u32 %v986, 16
    %v992 = vmul.u32 %v988, %v990
    %v993 = vmul.u32 %v988, %v991
    %v994 = vmul.u32 %v989, %v990
    %v995 = vmul.u32 %v989, %v991
    %v996 = vshll.u32 %v993, 16
    %v997 = vshrl.u32 %v993, 16
    %v998 = vshll.u32 %v994, 16
    %v999 = vshrl.u32 %v994, 16
    %vm1000 = vc.u32 %v992, %v996
    %v1001 = vsel %vm1000, 1, 0
    %v1002 = vadd.s32 %v992, %v996
    %v1003 = vadd.s32 %v995, %v1001
    %vm1004 = vc.u32 %v1002, %v998
    %v1005 = vsel %vm1004, 1, 0
    %v1006 = vadd.s32 %v1002, %v998
    %v1007 = vadd.s32 %v1003, %v1005
    %v1008 = vadd.s32 %v1007, %v997
    %v1009 = vadd.s32 %v1008, %v999
    %v1010 = vand.u32 %v987, 65535
    %v1011 = vshrl.u32 %v987, 16
    %v1012 = vand.u32 %v982, 65535
    %v1013 = vshrl.u32 %v982, 16
    %v1014 = vmul.u32 %v1010, %v1012
    %v1015 = vmul.u32 %v1010, %v1013
    %v1016 = vmul.u32 %v1011, %v1012
    %v1017 = vmul.u32 %v1011, %v1013
    %v1018 = vshll.u32 %v1015, 16
    %v1019 = vshrl.u32 %v1015, 16
    %v1020 = vshll.u32 %v1016, 16
    %v1021 = vshrl.u32 %v1016, 16
    %vm1022 = vc.u32 %v1014, %v1018
    %v1023 = vsel %vm1022, 1, 0
    %v1024 = vadd.s32 %v1014, %v1018
    %v1025 = vadd.s32 %v1017, %v1023
    %vm1026 = vc.u32 %v1024, %v1020
    %v1027 = vsel %vm1026, 1, 0
    %v1028 = vadd.s32 %v1024, %v1020
    %v1029 = vadd.s32 %v1025, %v1027
    %v1030 = vadd.s32 %v1029, %v1019
    %v1031 = vadd.s32 %v1030, %v1021
    %v1032 = vmul.u32 %v987, %v978
    %v1033 = vadd.s32 %v1009, %v1028
    %vm1034 = vc.u32 %v1009, %v1028
    %v1035 = vadd.s32 %v1031, 1
    %v1036 = vsel %vm1034, %v1035, %v1031
    %v1037 = vadd.s32 %v1032, %v1036
    %v1038 = vadd.s32 %v1037, 536870912
    %v1039 = vshrl.u32 %v1038, 30
    %v1040 = vshll.u32 %v1039, 30
    %v1041 = vsub.s32 %v1037, %v1040
    %vm1042 = vcmp.lt.s32.totalorder %v1041, 0
    %v1043 = vsub.s32 0, %v1041
    %v1044 = vsel %vm1042, %v1043, %v1041
    %v1045 = vclz %v1044
    %v1046 = vsub.s32 %v1045, 2
    %vm1047 = vcmp.gt.s32.totalorder 0, %v1046
    %v1048 = vsel %vm1047, 0, %v1046
    %v1049 = vsub.s32 32, %v1048
    %v1050 = vshll.u32 %v1041, %v1048
    %v1051 = vshrl.u32 %v1033, %v1049
    %v1052 = vor.u32 %v1050, %v1051
    %v1053 = vsub.s32 4294967266, %v1048
    %v1054 = vadd.s32 %v1053, 127
    %v1055 = vshll.u32 %v1054, 23
    %v1056 = vor.u32 4788187, %v1055
    %v1057 = vand.u32 2147483647, %v1056
    %v1059 = vcvt.s32.f32 %v1052
    %v1060 = vmul.f32 %v1059, %v1057
    %v1061 = vxor.u32 %v1060, 2147483648
    %v1062 = vsel %vm941, %v1061, %v1060
    %v1063 = vsub.s32 4, %v1039
    %v1064 = vsel %vm941, %v1063, %v1039
    %v1065 = vsel %vm940, %v163, %v1062
    %v1066 = vsel %vm940, 0, %v1064
    %v1067 = vmul.f32 %v1065, %v1065
    %v1068 = vmul.f32 %v1067, -0.001358992
    %v1069 = vadd.f32 %v1068, 0.041655596
    %v1070 = vmul.f32 %v1067, %v1069
    %v1071 = vadd.f32 %v1070, -0.4999988
    %v1072 = vmul.f32 %v1067, %v1071
    %v1073 = vadd.f32 1.0, %v1072
    %v1074 = vmul.f32 %v1065, %v1065
    %v1075 = vmul.f32 %v1074, -0.00019511016
    %v1076 = vadd.f32 %v1075, 0.008332121
    %v1077 = vmul.f32 %v1074, %v1076
    %v1078 = vadd.f32 %v1077, -0.16666654
    %v1079 = vmul.f32 %v1074, %v1078
    %v1080 = vadd.f32 %v1079, 1.0
    %v1081 = vmul.f32 %v1080, %v1065
    %vm1082 = vweird.f32 %v163
    %v1083 = vadd.s32 %v1066, 3
    %v1084 = vand.u32 %v1083, 3
    %vm1085 = vcmp.lt.s32.totalorder %v1084, 2
    %vm1086 = vcmp.eq.s32.totalorder %v1084, 0
    %v1087 = vxor.u32 %v1081, 2147483648
    %v1088 = vsel %vm1086, %v1073, %v1087
    %vm1089 = vcmp.eq.s32.totalorder %v1084, 2
    %v1090 = vxor.u32 %v1073, 2147483648
    %v1091 = vsel %vm1089, %v1090, %v1081
    %v1092 = vsel %vm1085, %v1088, %v1091
    %v1093 = vsel %vm1082, nan, %v1092
    %v1094 = vmul.f32 %v131, %v783
    %v1095 = vmul.f32 %v132, %v938
    %v1096 = vmul.f32 %v133, %v1093
    %v1097 = vadd.f32 %v626, %v1094
    %v1098 = vadd.f32 %v627, %v1095
    %v1099 = vadd.f32 %v628, %v1096
    %v1100 = vmul.f32 %v1097, %v111
    %v1101 = vmul.f32 %v1098, %v112
    %v1102 = vmul.f32 %v1099, %v113
    %v1103 = vld [vmem:[%s5] sm:$0xff]
    %v1104 = vld [vmem:[%s5 + $0x8] sm:$0xff]
    %v1105 = vld [vmem:[%s5 + $0x10] sm:$0xff]
    %v1106 = vld [vmem:[%s5 + $0x18] sm:$0xff]
    %v1107 = vld [vmem:[%s6] sm:$0xff]
    %v1108 = vld [vmem:[%s6 + $0x8] sm:$0xff]
    %v1109 = vld [vmem:[%s6 + $0x10] sm:$0xff]
    %v1110 = vld [vmem:[%s6 + $0x18] sm:$0xff]
    %1112 = vset.pattern.permute.xlu0 0
    %1113 = vperm.xlu0 %1112, %v1107
    %v1114 = vpop.permute.xlu0 %1113
    %1117 = vset.pattern.permute.xlu0 0
    %1118 = vperm.xlu0 %1117, %v1108
    %v1119 = vpop.permute.xlu0 %1118
    %1122 = vset.pattern.permute.xlu0 0
    %1123 = vperm.xlu0 %1122, %v1109
    %v1124 = vpop.permute.xlu0 %1123
    %1127 = vset.pattern.permute.xlu0 0
    %1128 = vperm.xlu0 %1127, %v1110
    %v1129 = vpop.permute.xlu0 %1128
    %vm1131 = vcmask 195584
    %v1133 = vsel %vm1131, %v1103, 0
    %v1136 = vsel %vm1131, %v1104, 0
    %v1139 = vsel %vm1131, %v1105, 0
    %v1142 = vsel %vm1131, %v1106, 0
    %1144 = vmatpush.msra.mxu0 0.0
    %1145 = vmatpush.msra.mxu0 0.0
    %1146 = vmatpush.msra.mxu0 0.0
    %1147 = vmatpush.msra.mxu0 0.0
    %1148 = vmatpush.msra.mxu0 0.0
    %1149 = vmatpush.msra.mxu0 0.0
    %1150 = vmatpush.msra.mxu0 0.0
    %1151 = vmatpush.msra.mxu0 0.0
    %1152 = vmatpush.msra.mxu0 0.0
    %1153 = vmatpush.msra.mxu0 0.0
    %1154 = vmatpush.msra.mxu0 0.0
    %1155 = vmatpush.msra.mxu0 0.0
    %1156 = vmatpush.msra.mxu0 0.0
    %1157 = vmatpush.msra.mxu0 %v1102
    %1158 = vmatpush.msra.mxu0 %v1101
    %1159 = vmatpush.msra.mxu0 %v1100
    %1160 = vmatmul.f32.gmra.mxu0 %v1133
    %v1161 = vpop.f32.mrf.mxu0
    %v1162 = vadd.f32 %v1114, %v1161
    %1163 = vmatmul.f32.gmra.mxu0 %v1136
    %v1164 = vpop.f32.mrf.mxu0
    %v1165 = vadd.f32 %v1119, %v1164
    %1166 = vmatmul.f32.gmra.mxu0 %v1139
    %v1167 = vpop.f32.mrf.mxu0
    %v1168 = vadd.f32 %v1124, %v1167
    %1169 = vmatmul.f32.gmra.mxu0 %v1142
    %v1170 = vpop.f32.mrf.mxu0
    %v1171 = vadd.f32 %v1129, %v1170
    %1172 = vdwg.mxu0
    %v1173 = vmax.f32 %v1162, 0.0
    %v1174 = vmax.f32 %v1165, 0.0
    %v1175 = vmax.f32 %v1168, 0.0
    %v1176 = vmax.f32 %v1171, 0.0
    %v1177 = vld [vmem:[%s7] sm:$0xff]
    %v1178 = vld [vmem:[%s8] sm:$0xff]
    %1180 = vset.pattern.permute.xlu0 0
    %1181 = vperm.xlu0 %1180, %v1178
    %v1182 = vpop.permute.xlu0 %1181
    %vm1184 = vcmask 261120
    %v1186 = vsel %vm1184, %v1177, 0
    %1188 = vmatpush.msra.mxu0 0.0
    %1189 = vmatpush.msra.mxu0 0.0
    %1190 = vmatpush.msra.mxu0 0.0
    %1191 = vmatpush.msra.mxu0 0.0
    %1192 = vmatpush.msra.mxu0 0.0
    %1193 = vmatpush.msra.mxu0 0.0
    %1194 = vmatpush.msra.mxu0 0.0
    %1195 = vmatpush.msra.mxu0 0.0
    %1196 = vmatpush.msra.mxu0 0.0
    %1197 = vmatpush.msra.mxu0 0.0
    %1198 = vmatpush.msra.mxu0 0.0
    %1199 = vmatpush.msra.mxu0 0.0
    %1200 = vmatpush.msra.mxu0 %v1176
    %1201 = vmatpush.msra.mxu0 %v1175
    %1202 = vmatpush.msra.mxu0 %v1174
    %1203 = vmatpush.msra.mxu0 %v1173
    %1204 = vmatmul.f32.gmra.mxu0 %v1186
    %v1205 = vpop.f32.mrf.mxu0
    %v1206 = vadd.f32 %v1182, %v1205
    %1207 = vdwg.mxu0
    %v1208 = vperm.slane %v146, 2
    %v1209 = vmul.f32 %v1206, %v1208
    %v1210 = vadd.f32 %v1209, 0.0
    %v1211 = vld [vmem:[#allocation2 + $0x18] sm:$0xf]
    %v1212 = vld [vmem:[#allocation2 + $0x1c] sm:$0xf]
    %v1213 = vld [vmem:[#allocation2 + $0x20] sm:$0xf]
    %v1214 = vld [vmem:[#allocation2 + $0x24] sm:$0xf]
    %v1215 = vld [vmem:[#allocation2 + $0x28] sm:$0xf]
    %v1216 = vld [vmem:[#allocation2 + $0x2c] sm:$0xf]
    %v1217 = vunpack.c.l.bf16 %v1211
    %v1218 = vunpack.c.l.bf16 %v1212
    %v1219 = vunpack.c.l.bf16 %v1213
    %v1220 = vunpack.c.l.bf16 %v1214
    %v1221 = vunpack.c.l.bf16 %v1215
    %v1222 = vunpack.c.l.bf16 %v1216
    %v1223 = vld [vmem:[#allocation5 + $0x18] sm:$0xf]
    %v1224 = vld [vmem:[#allocation5 + $0x1c] sm:$0xf]
    %v1225 = vld [vmem:[#allocation5 + $0x20] sm:$0xf]
    %v1226 = vld [vmem:[#allocation5 + $0x24] sm:$0xf]
    %v1227 = vld [vmem:[#allocation5 + $0x28] sm:$0xf]
    %v1228 = vld [vmem:[#allocation5 + $0x2c] sm:$0xf]
    %v1229 = vunpack.c.l.bf16 %v1223
    %v1230 = vunpack.c.l.bf16 %v1224
    %v1231 = vunpack.c.l.bf16 %v1225
    %v1232 = vunpack.c.l.bf16 %v1226
    %v1233 = vunpack.c.l.bf16 %v1227
    %v1234 = vunpack.c.l.bf16 %v1228
    %v1235 = vld [vmem:[%s3 + $0x8] sm:$0xff]
    %v1236 = vperm.slane %v1235, 0
    %v1237 = vmul.f32 %v1229, %v1236
    %v1238 = vmul.f32 %v1230, %v1236
    %v1239 = vmul.f32 %v1231, %v1236
    %v1240 = vperm.slane %v1235, 1
    %v1241 = vmul.f32 %v1232, %v1240
    %v1242 = vmul.f32 %v1233, %v1240
    %v1243 = vmul.f32 %v1234, %v1240
    %v1244 = vadd.f32 %v1237, %v1241
    %v1245 = vadd.f32 %v1238, %v1242
    %v1246 = vadd.f32 %v1239, %v1243
    %v1247 = vadd.f32 %v1244, %v119
    %v1248 = vadd.f32 %v1245, %v119
    %v1249 = vadd.f32 %v1246, %v119
    %v1250 = vmul.f32 %v1247, 3.1415927
    %v1251 = vmul.f32 %v1248, 3.1415927
    %v1252 = vmul.f32 %v1249, 3.1415927
    %v1253 = vand.u32 2147483647, %v1250
    %vm1254 = vcmp.le.f32.partialorder %v1253, 0.7853982
    %vm1255 = vcmp.lt.s32.totalorder %v1250, 0
    %v1256 = vand.u32 %v1250, 2139095040
    %v1257 = vshrl.u32 %v1256, 23
    %v1258 = vsub.s32 %v1257, 127
    %v1259 = vand.u32 2147483647, %v1250
    %v1260 = vand.u32 %v1259, 8388607
    %v1261 = vor.u32 %v1260, 8388608
    %v1262 = vsub.s32 0, %v1261
    %v1263 = vadd.s32 %v1258, 1
    %vm1264 = vcmp.gt.s32.totalorder %v1263, 0
    %v1265 = vsel %vm1264, %v1263, 0
    %v1266 = vshrl.u32 %v1265, 5
    %v1267 = vand.u32 %v1265, 31
    %v1268 = vsub.s32 32, %v1267
    %v1269 = vshrl.u32 683565275, %v1268
    %v1270 = vshll.u32 683565275, %v1267
    %v1271 = vshrl.u32 2475754826, %v1268
    %v1272 = vor.u32 %v1270, %v1271
    %v1273 = vshll.u32 2475754826, %v1267
    %v1274 = vshrl.u32 2131351028, %v1268
    %v1275 = vor.u32 %v1273, %v1274
    %v1276 = vshll.u32 2131351028, %v1267
    %v1277 = vshrl.u32 2102212464, %v1268
    %v1278 = vor.u32 %v1276, %v1277
    %v1279 = vshll.u32 2102212464, %v1267
    %v1280 = vshrl.u32 920167782, %v1268
    %v1281 = vor.u32 %v1279, %v1280
    %v1282 = vshll.u32 920167782, %v1267
    %v1283 = vshrl.u32 1326507024, %v1268
    %v1284 = vor.u32 %v1282, %v1283
    %vm1285 = vcmp.lt.s32.totalorder %v1266, 1
    %vm1286 = vcmp.lt.s32.totalorder %v1266, 2
    %vm1287 = vcmp.lt.s32.totalorder %v1266, 3
    %vm1288 = vcmp.lt.s32.totalorder %v1266, 4
    %v1289 = vsel %vm1285, %v1269, %v1272
    %v1290 = vsel %vm1288, %v1278, 2102212464
    %v1291 = vsel %vm1287, %v1275, %v1290
    %v1292 = vsel %vm1286, %v1289, %v1291
    %v1293 = vsel %vm1285, %v1272, %v1275
    %v1294 = vsel %vm1288, %v1281, 920167782
    %v1295 = vsel %vm1287, %v1278, %v1294
    %v1296 = vsel %vm1286, %v1293, %v1295
    %v1297 = vsel %vm1285, %v1275, %v1278
    %v1298 = vsel %vm1288, %v1284, 1326507024
    %v1299 = vsel %vm1287, %v1281, %v1298
    %v1300 = vsel %vm1286, %v1297, %v1299
    %v1301 = vshll.u32 %v1261, 8
    %v1302 = vand.u32 %v1301, 65535
    %v1303 = vshrl.u32 %v1301, 16
    %v1304 = vand.u32 %v1300, 65535
    %v1305 = vshrl.u32 %v1300, 16
    %v1306 = vmul.u32 %v1302, %v1304
    %v1307 = vmul.u32 %v1302, %v1305
    %v1308 = vmul.u32 %v1303, %v1304
    %v1309 = vmul.u32 %v1303, %v1305
    %v1310 = vshll.u32 %v1307, 16
    %v1311 = vshrl.u32 %v1307, 16
    %v1312 = vshll.u32 %v1308, 16
    %v1313 = vshrl.u32 %v1308, 16
    %vm1314 = vc.u32 %v1306, %v1310
    %v1315 = vsel %vm1314, 1, 0
    %v1316 = vadd.s32 %v1306, %v1310
    %v1317 = vadd.s32 %v1309, %v1315
    %vm1318 = vc.u32 %v1316, %v1312
    %v1319 = vsel %vm1318, 1, 0
    %v1320 = vadd.s32 %v1316, %v1312
    %v1321 = vadd.s32 %v1317, %v1319
    %v1322 = vadd.s32 %v1321, %v1311
    %v1323 = vadd.s32 %v1322, %v1313
    %v1324 = vand.u32 %v1301, 65535
    %v1325 = vshrl.u32 %v1301, 16
    %v1326 = vand.u32 %v1296, 65535
    %v1327 = vshrl.u32 %v1296, 16
    %v1328 = vmul.u32 %v1324, %v1326
    %v1329 = vmul.u32 %v1324, %v1327
    %v1330 = vmul.u32 %v1325, %v1326
    %v1331 = vmul.u32 %v1325, %v1327
    %v1332 = vshll.u32 %v1329, 16
    %v1333 = vshrl.u32 %v1329, 16
    %v1334 = vshll.u32 %v1330, 16
    %v1335 = vshrl.u32 %v1330, 16
    %vm1336 = vc.u32 %v1328, %v1332
    %v1337 = vsel %vm1336, 1, 0
    %v1338 = vadd.s32 %v1328, %v1332
    %v1339 = vadd.s32 %v1331, %v1337
    %vm1340 = vc.u32 %v1338, %v1334
    %v1341 = vsel %vm1340, 1, 0
    %v1342 = vadd.s32 %v1338, %v1334
    %v1343 = vadd.s32 %v1339, %v1341
    %v1344 = vadd.s32 %v1343, %v1333
    %v1345 = vadd.s32 %v1344, %v1335
    %v1346 = vmul.u32 %v1301, %v1292
    %v1347 = vadd.s32 %v1323, %v1342
    %vm1348 = vc.u32 %v1323, %v1342
    %v1349 = vadd.s32 %v1345, 1
    %v1350 = vsel %vm1348, %v1349, %v1345
    %v1351 = vadd.s32 %v1346, %v1350
    %v1352 = vadd.s32 %v1351, 536870912
    %v1353 = vshrl.u32 %v1352, 30
    %v1354 = vshll.u32 %v1353, 30
    %v1355 = vsub.s32 %v1351, %v1354
    %vm1356 = vcmp.lt.s32.totalorder %v1355, 0
    %v1357 = vsub.s32 0, %v1355
    %v1358 = vsel %vm1356, %v1357, %v1355
    %v1359 = vclz %v1358
    %v1360 = vsub.s32 %v1359, 2
    %vm1361 = vcmp.gt.s32.totalorder 0, %v1360
    %v1362 = vsel %vm1361, 0, %v1360
    %v1363 = vsub.s32 32, %v1362
    %v1364 = vshll.u32 %v1355, %v1362
    %v1365 = vshrl.u32 %v1347, %v1363
    %v1366 = vor.u32 %v1364, %v1365
    %v1367 = vsub.s32 4294967266, %v1362
    %v1368 = vadd.s32 %v1367, 127
    %v1369 = vshll.u32 %v1368, 23
    %v1370 = vor.u32 4788187, %v1369
    %v1371 = vand.u32 2147483647, %v1370
    %v1373 = vcvt.s32.f32 %v1366
    %v1374 = vmul.f32 %v1373, %v1371
    %v1375 = vxor.u32 %v1374, 2147483648
    %v1376 = vsel %vm1255, %v1375, %v1374
    %v1377 = vsub.s32 4, %v1353
    %v1378 = vsel %vm1255, %v1377, %v1353
    %v1379 = vsel %vm1254, %v1250, %v1376
    %v1380 = vsel %vm1254, 0, %v1378
    %v1381 = vmul.f32 %v1379, %v1379
    %v1382 = vmul.f32 %v1381, -0.001358992
    %v1383 = vadd.f32 %v1382, 0.041655596
    %v1384 = vmul.f32 %v1381, %v1383
    %v1385 = vadd.f32 %v1384, -0.4999988
    %v1386 = vmul.f32 %v1381, %v1385
    %v1387 = vadd.f32 1.0, %v1386
    %v1388 = vmul.f32 %v1379, %v1379
    %v1389 = vmul.f32 %v1388, -0.00019511016
    %v1390 = vadd.f32 %v1389, 0.008332121
    %v1391 = vmul.f32 %v1388, %v1390
    %v1392 = vadd.f32 %v1391, -0.16666654
    %v1393 = vmul.f32 %v1388, %v1392
    %v1394 = vadd.f32 %v1393, 1.0
    %v1395 = vmul.f32 %v1394, %v1379
    %vm1396 = vweird.f32 %v1250
    %v1397 = vand.u32 %v1380, 3
    %vm1398 = vcmp.lt.s32.totalorder %v1397, 2
    %vm1399 = vcmp.eq.s32.totalorder %v1397, 0
    %v1400 = vxor.u32 %v1395, 2147483648
    %v1401 = vsel %vm1399, %v1387, %v1400
    %vm1402 = vcmp.eq.s32.totalorder %v1397, 2
    %v1403 = vxor.u32 %v1387, 2147483648
    %v1404 = vsel %vm1402, %v1403, %v1395
    %v1405 = vsel %vm1398, %v1401, %v1404
    %v1406 = vsel %vm1396, nan, %v1405
    %v1407 = vand.u32 2147483647, %v1251
    %vm1408 = vcmp.le.f32.partialorder %v1407, 0.7853982
    %vm1409 = vcmp.lt.s32.totalorder %v1251, 0
    %v1410 = vand.u32 %v1251, 2139095040
    %v1411 = vshrl.u32 %v1410, 23
    %v1412 = vsub.s32 %v1411, 127
    %v1413 = vand.u32 2147483647, %v1251
    %v1414 = vand.u32 %v1413, 8388607
    %v1415 = vor.u32 %v1414, 8388608
    %v1416 = vsub.s32 0, %v1415
    %v1417 = vadd.s32 %v1412, 1
    %vm1418 = vcmp.gt.s32.totalorder %v1417, 0
    %v1419 = vsel %vm1418, %v1417, 0
    %v1420 = vshrl.u32 %v1419, 5
    %v1421 = vand.u32 %v1419, 31
    %v1422 = vsub.s32 32, %v1421
    %v1423 = vshrl.u32 683565275, %v1422
    %v1424 = vshll.u32 683565275, %v1421
    %v1425 = vshrl.u32 2475754826, %v1422
    %v1426 = vor.u32 %v1424, %v1425
    %v1427 = vshll.u32 2475754826, %v1421
    %v1428 = vshrl.u32 2131351028, %v1422
    %v1429 = vor.u32 %v1427, %v1428
    %v1430 = vshll.u32 2131351028, %v1421
    %v1431 = vshrl.u32 2102212464, %v1422
    %v1432 = vor.u32 %v1430, %v1431
    %v1433 = vshll.u32 2102212464, %v1421
    %v1434 = vshrl.u32 920167782, %v1422
    %v1435 = vor.u32 %v1433, %v1434
    %v1436 = vshll.u32 920167782, %v1421
    %v1437 = vshrl.u32 1326507024, %v1422
    %v1438 = vor.u32 %v1436, %v1437
    %vm1439 = vcmp.lt.s32.totalorder %v1420, 1
    %vm1440 = vcmp.lt.s32.totalorder %v1420, 2
    %vm1441 = vcmp.lt.s32.totalorder %v1420, 3
    %vm1442 = vcmp.lt.s32.totalorder %v1420, 4
    %v1443 = vsel %vm1439, %v1423, %v1426
    %v1444 = vsel %vm1442, %v1432, 2102212464
    %v1445 = vsel %vm1441, %v1429, %v1444
    %v1446 = vsel %vm1440, %v1443, %v1445
    %v1447 = vsel %vm1439, %v1426, %v1429
    %v1448 = vsel %vm1442, %v1435, 920167782
    %v1449 = vsel %vm1441, %v1432, %v1448
    %v1450 = vsel %vm1440, %v1447, %v1449
    %v1451 = vsel %vm1439, %v1429, %v1432
    %v1452 = vsel %vm1442, %v1438, 1326507024
    %v1453 = vsel %vm1441, %v1435, %v1452
    %v1454 = vsel %vm1440, %v1451, %v1453
    %v1455 = vshll.u32 %v1415, 8
    %v1456 = vand.u32 %v1455, 65535
    %v1457 = vshrl.u32 %v1455, 16
    %v1458 = vand.u32 %v1454, 65535
    %v1459 = vshrl.u32 %v1454, 16
    %v1460 = vmul.u32 %v1456, %v1458
    %v1461 = vmul.u32 %v1456, %v1459
    %v1462 = vmul.u32 %v1457, %v1458
    %v1463 = vmul.u32 %v1457, %v1459
    %v1464 = vshll.u32 %v1461, 16
    %v1465 = vshrl.u32 %v1461, 16
    %v1466 = vshll.u32 %v1462, 16
    %v1467 = vshrl.u32 %v1462, 16
    %vm1468 = vc.u32 %v1460, %v1464
    %v1469 = vsel %vm1468, 1, 0
    %v1470 = vadd.s32 %v1460, %v1464
    %v1471 = vadd.s32 %v1463, %v1469
    %vm1472 = vc.u32 %v1470, %v1466
    %v1473 = vsel %vm1472, 1, 0
    %v1474 = vadd.s32 %v1470, %v1466
    %v1475 = vadd.s32 %v1471, %v1473
    %v1476 = vadd.s32 %v1475, %v1465
    %v1477 = vadd.s32 %v1476, %v1467
    %v1478 = vand.u32 %v1455, 65535
    %v1479 = vshrl.u32 %v1455, 16
    %v1480 = vand.u32 %v1450, 65535
    %v1481 = vshrl.u32 %v1450, 16
    %v1482 = vmul.u32 %v1478, %v1480
    %v1483 = vmul.u32 %v1478, %v1481
    %v1484 = vmul.u32 %v1479, %v1480
    %v1485 = vmul.u32 %v1479, %v1481
    %v1486 = vshll.u32 %v1483, 16
    %v1487 = vshrl.u32 %v1483, 16
    %v1488 = vshll.u32 %v1484, 16
    %v1489 = vshrl.u32 %v1484, 16
    %vm1490 = vc.u32 %v1482, %v1486
    %v1491 = vsel %vm1490, 1, 0
    %v1492 = vadd.s32 %v1482, %v1486
    %v1493 = vadd.s32 %v1485, %v1491
    %vm1494 = vc.u32 %v1492, %v1488
    %v1495 = vsel %vm1494, 1, 0
    %v1496 = vadd.s32 %v1492, %v1488
    %v1497 = vadd.s32 %v1493, %v1495
    %v1498 = vadd.s32 %v1497, %v1487
    %v1499 = vadd.s32 %v1498, %v1489
    %v1500 = vmul.u32 %v1455, %v1446
    %v1501 = vadd.s32 %v1477, %v1496
    %vm1502 = vc.u32 %v1477, %v1496
    %v1503 = vadd.s32 %v1499, 1
    %v1504 = vsel %vm1502, %v1503, %v1499
    %v1505 = vadd.s32 %v1500, %v1504
    %v1506 = vadd.s32 %v1505, 536870912
    %v1507 = vshrl.u32 %v1506, 30
    %v1508 = vshll.u32 %v1507, 30
    %v1509 = vsub.s32 %v1505, %v1508
    %vm1510 = vcmp.lt.s32.totalorder %v1509, 0
    %v1511 = vsub.s32 0, %v1509
    %v1512 = vsel %vm1510, %v1511, %v1509
    %v1513 = vclz %v1512
    %v1514 = vsub.s32 %v1513, 2
    %vm1515 = vcmp.gt.s32.totalorder 0, %v1514
    %v1516 = vsel %vm1515, 0, %v1514
    %v1517 = vsub.s32 32, %v1516
    %v1518 = vshll.u32 %v1509, %v1516
    %v1519 = vshrl.u32 %v1501, %v1517
    %v1520 = vor.u32 %v1518, %v1519
    %v1521 = vsub.s32 4294967266, %v1516
    %v1522 = vadd.s32 %v1521, 127
    %v1523 = vshll.u32 %v1522, 23
    %v1524 = vor.u32 4788187, %v1523
    %v1525 = vand.u32 2147483647, %v1524
    %v1527 = vcvt.s32.f32 %v1520
    %v1528 = vmul.f32 %v1527, %v1525
    %v1529 = vxor.u32 %v1528, 2147483648
    %v1530 = vsel %vm1409, %v1529, %v1528
    %v1531 = vsub.s32 4, %v1507
    %v1532 = vsel %vm1409, %v1531, %v1507
    %v1533 = vsel %vm1408, %v1251, %v1530
    %v1534 = vsel %vm1408, 0, %v1532
    %v1535 = vmul.f32 %v1533, %v1533
    %v1536 = vmul.f32 %v1535, -0.001358992
    %v1537 = vadd.f32 %v1536, 0.041655596
    %v1538 = vmul.f32 %v1535, %v1537
    %v1539 = vadd.f32 %v1538, -0.4999988
    %v1540 = vmul.f32 %v1535, %v1539
    %v1541 = vadd.f32 1.0, %v1540
    %v1542 = vmul.f32 %v1533, %v1533
    %v1543 = vmul.f32 %v1542, -0.00019511016
    %v1544 = vadd.f32 %v1543, 0.008332121
    %v1545 = vmul.f32 %v1542, %v1544
    %v1546 = vadd.f32 %v1545, -0.16666654
    %v1547 = vmul.f32 %v1542, %v1546
    %v1548 = vadd.f32 %v1547, 1.0
    %v1549 = vmul.f32 %v1548, %v1533
    %vm1550 = vweird.f32 %v1251
    %v1551 = vand.u32 %v1534, 3
    %vm1552 = vcmp.lt.s32.totalorder %v1551, 2
    %vm1553 = vcmp.eq.s32.totalorder %v1551, 0
    %v1554 = vxor.u32 %v1549, 2147483648
    %v1555 = vsel %vm1553, %v1541, %v1554
    %vm1556 = vcmp.eq.s32.totalorder %v1551, 2
    %v1557 = vxor.u32 %v1541, 2147483648
    %v1558 = vsel %vm1556, %v1557, %v1549
    %v1559 = vsel %vm1552, %v1555, %v1558
    %v1560 = vsel %vm1550, nan, %v1559
    %v1561 = vand.u32 2147483647, %v1252
    %vm1562 = vcmp.le.f32.partialorder %v1561, 0.7853982
    %vm1563 = vcmp.lt.s32.totalorder %v1252, 0
    %v1564 = vand.u32 %v1252, 2139095040
    %v1565 = vshrl.u32 %v1564, 23
    %v1566 = vsub.s32 %v1565, 127
    %v1567 = vand.u32 2147483647, %v1252
    %v1568 = vand.u32 %v1567, 8388607
    %v1569 = vor.u32 %v1568, 8388608
    %v1570 = vsub.s32 0, %v1569
    %v1571 = vadd.s32 %v1566, 1
    %vm1572 = vcmp.gt.s32.totalorder %v1571, 0
    %v1573 = vsel %vm1572, %v1571, 0
    %v1574 = vshrl.u32 %v1573, 5
    %v1575 = vand.u32 %v1573, 31
    %v1576 = vsub.s32 32, %v1575
    %v1577 = vshrl.u32 683565275, %v1576
    %v1578 = vshll.u32 683565275, %v1575
    %v1579 = vshrl.u32 2475754826, %v1576
    %v1580 = vor.u32 %v1578, %v1579
    %v1581 = vshll.u32 2475754826, %v1575
    %v1582 = vshrl.u32 2131351028, %v1576
    %v1583 = vor.u32 %v1581, %v1582
    %v1584 = vshll.u32 2131351028, %v1575
    %v1585 = vshrl.u32 2102212464, %v1576
    %v1586 = vor.u32 %v1584, %v1585
    %v1587 = vshll.u32 2102212464, %v1575
    %v1588 = vshrl.u32 920167782, %v1576
    %v1589 = vor.u32 %v1587, %v1588
    %v1590 = vshll.u32 920167782, %v1575
    %v1591 = vshrl.u32 1326507024, %v1576
    %v1592 = vor.u32 %v1590, %v1591
    %vm1593 = vcmp.lt.s32.totalorder %v1574, 1
    %vm1594 = vcmp.lt.s32.totalorder %v1574, 2
    %vm1595 = vcmp.lt.s32.totalorder %v1574, 3
    %vm1596 = vcmp.lt.s32.totalorder %v1574, 4
    %v1597 = vsel %vm1593, %v1577, %v1580
    %v1598 = vsel %vm1596, %v1586, 2102212464
    %v1599 = vsel %vm1595, %v1583, %v1598
    %v1600 = vsel %vm1594, %v1597, %v1599
    %v1601 = vsel %vm1593, %v1580, %v1583
    %v1602 = vsel %vm1596, %v1589, 920167782
    %v1603 = vsel %vm1595, %v1586, %v1602
    %v1604 = vsel %vm1594, %v1601, %v1603
    %v1605 = vsel %vm1593, %v1583, %v1586
    %v1606 = vsel %vm1596, %v1592, 1326507024
    %v1607 = vsel %vm1595, %v1589, %v1606
    %v1608 = vsel %vm1594, %v1605, %v1607
    %v1609 = vshll.u32 %v1569, 8
    %v1610 = vand.u32 %v1609, 65535
    %v1611 = vshrl.u32 %v1609, 16
    %v1612 = vand.u32 %v1608, 65535
    %v1613 = vshrl.u32 %v1608, 16
    %v1614 = vmul.u32 %v1610, %v1612
    %v1615 = vmul.u32 %v1610, %v1613
    %v1616 = vmul.u32 %v1611, %v1612
    %v1617 = vmul.u32 %v1611, %v1613
    %v1618 = vshll.u32 %v1615, 16
    %v1619 = vshrl.u32 %v1615, 16
    %v1620 = vshll.u32 %v1616, 16
    %v1621 = vshrl.u32 %v1616, 16
    %vm1622 = vc.u32 %v1614, %v1618
    %v1623 = vsel %vm1622, 1, 0
    %v1624 = vadd.s32 %v1614, %v1618
    %v1625 = vadd.s32 %v1617, %v1623
    %vm1626 = vc.u32 %v1624, %v1620
    %v1627 = vsel %vm1626, 1, 0
    %v1628 = vadd.s32 %v1624, %v1620
    %v1629 = vadd.s32 %v1625, %v1627
    %v1630 = vadd.s32 %v1629, %v1619
    %v1631 = vadd.s32 %v1630, %v1621
    %v1632 = vand.u32 %v1609, 65535
    %v1633 = vshrl.u32 %v1609, 16
    %v1634 = vand.u32 %v1604, 65535
    %v1635 = vshrl.u32 %v1604, 16
    %v1636 = vmul.u32 %v1632, %v1634
    %v1637 = vmul.u32 %v1632, %v1635
    %v1638 = vmul.u32 %v1633, %v1634
    %v1639 = vmul.u32 %v1633, %v1635
    %v1640 = vshll.u32 %v1637, 16
    %v1641 = vshrl.u32 %v1637, 16
    %v1642 = vshll.u32 %v1638, 16
    %v1643 = vshrl.u32 %v1638, 16
    %vm1644 = vc.u32 %v1636, %v1640
    %v1645 = vsel %vm1644, 1, 0
    %v1646 = vadd.s32 %v1636, %v1640
    %v1647 = vadd.s32 %v1639, %v1645
    %vm1648 = vc.u32 %v1646, %v1642
    %v1649 = vsel %vm1648, 1, 0
    %v1650 = vadd.s32 %v1646, %v1642
    %v1651 = vadd.s32 %v1647, %v1649
    %v1652 = vadd.s32 %v1651, %v1641
    %v1653 = vadd.s32 %v1652, %v1643
    %v1654 = vmul.u32 %v1609, %v1600
    %v1655 = vadd.s32 %v1631, %v1650
    %vm1656 = vc.u32 %v1631, %v1650
    %v1657 = vadd.s32 %v1653, 1
    %v1658 = vsel %vm1656, %v1657, %v1653
    %v1659 = vadd.s32 %v1654, %v1658
    %v1660 = vadd.s32 %v1659, 536870912
    %v1661 = vshrl.u32 %v1660, 30
    %v1662 = vshll.u32 %v1661, 30
    %v1663 = vsub.s32 %v1659, %v1662
    %vm1664 = vcmp.lt.s32.totalorder %v1663, 0
    %v1665 = vsub.s32 0, %v1663
    %v1666 = vsel %vm1664, %v1665, %v1663
    %v1667 = vclz %v1666
    %v1668 = vsub.s32 %v1667, 2
    %vm1669 = vcmp.gt.s32.totalorder 0, %v1668
    %v1670 = vsel %vm1669, 0, %v1668
    %v1671 = vsub.s32 32, %v1670
    %v1672 = vshll.u32 %v1663, %v1670
    %v1673 = vshrl.u32 %v1655, %v1671
    %v1674 = vor.u32 %v1672, %v1673
    %v1675 = vsub.s32 4294967266, %v1670
    %v1676 = vadd.s32 %v1675, 127
    %v1677 = vshll.u32 %v1676, 23
    %v1678 = vor.u32 4788187, %v1677
    %v1679 = vand.u32 2147483647, %v1678
    %v1681 = vcvt.s32.f32 %v1674
    %v1682 = vmul.f32 %v1681, %v1679
    %v1683 = vxor.u32 %v1682, 2147483648
    %v1684 = vsel %vm1563, %v1683, %v1682
    %v1685 = vsub.s32 4, %v1661
    %v1686 = vsel %vm1563, %v1685, %v1661
    %v1687 = vsel %vm1562, %v1252, %v1684
    %v1688 = vsel %vm1562, 0, %v1686
    %v1689 = vmul.f32 %v1687, %v1687
    %v1690 = vmul.f32 %v1689, -0.001358992
    %v1691 = vadd.f32 %v1690, 0.041655596
    %v1692 = vmul.f32 %v1689, %v1691
    %v1693 = vadd.f32 %v1692, -0.4999988
    %v1694 = vmul.f32 %v1689, %v1693
    %v1695 = vadd.f32 1.0, %v1694
    %v1696 = vmul.f32 %v1687, %v1687
    %v1697 = vmul.f32 %v1696, -0.00019511016
    %v1698 = vadd.f32 %v1697, 0.008332121
    %v1699 = vmul.f32 %v1696, %v1698
    %v1700 = vadd.f32 %v1699, -0.16666654
    %v1701 = vmul.f32 %v1696, %v1700
    %v1702 = vadd.f32 %v1701, 1.0
    %v1703 = vmul.f32 %v1702, %v1687
    %vm1704 = vweird.f32 %v1252
    %v1705 = vand.u32 %v1688, 3
    %vm1706 = vcmp.lt.s32.totalorder %v1705, 2
    %vm1707 = vcmp.eq.s32.totalorder %v1705, 0
    %v1708 = vxor.u32 %v1703, 2147483648
    %v1709 = vsel %vm1707, %v1695, %v1708
    %vm1710 = vcmp.eq.s32.totalorder %v1705, 2
    %v1711 = vxor.u32 %v1695, 2147483648
    %v1712 = vsel %vm1710, %v1711, %v1703
    %v1713 = vsel %vm1706, %v1709, %v1712
    %v1714 = vsel %vm1704, nan, %v1713
    %v1715 = vmul.f32 %v1217, %v1406
    %v1716 = vmul.f32 %v1218, %v1560
    %v1717 = vmul.f32 %v1219, %v1714
    %v1718 = vand.u32 2147483647, %v1250
    %vm1719 = vcmp.le.f32.partialorder %v1718, 0.7853982
    %vm1720 = vcmp.lt.s32.totalorder %v1250, 0
    %v1721 = vand.u32 %v1250, 2139095040
    %v1722 = vshrl.u32 %v1721, 23
    %v1723 = vsub.s32 %v1722, 127
    %v1724 = vand.u32 2147483647, %v1250
    %v1725 = vand.u32 %v1724, 8388607
    %v1726 = vor.u32 %v1725, 8388608
    %v1727 = vsub.s32 0, %v1726
    %v1728 = vadd.s32 %v1723, 1
    %vm1729 = vcmp.gt.s32.totalorder %v1728, 0
    %v1730 = vsel %vm1729, %v1728, 0
    %v1731 = vshrl.u32 %v1730, 5
    %v1732 = vand.u32 %v1730, 31
    %v1733 = vsub.s32 32, %v1732
    %v1734 = vshrl.u32 683565275, %v1733
    %v1735 = vshll.u32 683565275, %v1732
    %v1736 = vshrl.u32 2475754826, %v1733
    %v1737 = vor.u32 %v1735, %v1736
    %v1738 = vshll.u32 2475754826, %v1732
    %v1739 = vshrl.u32 2131351028, %v1733
    %v1740 = vor.u32 %v1738, %v1739
    %v1741 = vshll.u32 2131351028, %v1732
    %v1742 = vshrl.u32 2102212464, %v1733
    %v1743 = vor.u32 %v1741, %v1742
    %v1744 = vshll.u32 2102212464, %v1732
    %v1745 = vshrl.u32 920167782, %v1733
    %v1746 = vor.u32 %v1744, %v1745
    %v1747 = vshll.u32 920167782, %v1732
    %v1748 = vshrl.u32 1326507024, %v1733
    %v1749 = vor.u32 %v1747, %v1748
    %vm1750 = vcmp.lt.s32.totalorder %v1731, 1
    %vm1751 = vcmp.lt.s32.totalorder %v1731, 2
    %vm1752 = vcmp.lt.s32.totalorder %v1731, 3
    %vm1753 = vcmp.lt.s32.totalorder %v1731, 4
    %v1754 = vsel %vm1750, %v1734, %v1737
    %v1755 = vsel %vm1753, %v1743, 2102212464
    %v1756 = vsel %vm1752, %v1740, %v1755
    %v1757 = vsel %vm1751, %v1754, %v1756
    %v1758 = vsel %vm1750, %v1737, %v1740
    %v1759 = vsel %vm1753, %v1746, 920167782
    %v1760 = vsel %vm1752, %v1743, %v1759
    %v1761 = vsel %vm1751, %v1758, %v1760
    %v1762 = vsel %vm1750, %v1740, %v1743
    %v1763 = vsel %vm1753, %v1749, 1326507024
    %v1764 = vsel %vm1752, %v1746, %v1763
    %v1765 = vsel %vm1751, %v1762, %v1764
    %v1766 = vshll.u32 %v1726, 8
    %v1767 = vand.u32 %v1766, 65535
    %v1768 = vshrl.u32 %v1766, 16
    %v1769 = vand.u32 %v1765, 65535
    %v1770 = vshrl.u32 %v1765, 16
    %v1771 = vmul.u32 %v1767, %v1769
    %v1772 = vmul.u32 %v1767, %v1770
    %v1773 = vmul.u32 %v1768, %v1769
    %v1774 = vmul.u32 %v1768, %v1770
    %v1775 = vshll.u32 %v1772, 16
    %v1776 = vshrl.u32 %v1772, 16
    %v1777 = vshll.u32 %v1773, 16
    %v1778 = vshrl.u32 %v1773, 16
    %vm1779 = vc.u32 %v1771, %v1775
    %v1780 = vsel %vm1779, 1, 0
    %v1781 = vadd.s32 %v1771, %v1775
    %v1782 = vadd.s32 %v1774, %v1780
    %vm1783 = vc.u32 %v1781, %v1777
    %v1784 = vsel %vm1783, 1, 0
    %v1785 = vadd.s32 %v1781, %v1777
    %v1786 = vadd.s32 %v1782, %v1784
    %v1787 = vadd.s32 %v1786, %v1776
    %v1788 = vadd.s32 %v1787, %v1778
    %v1789 = vand.u32 %v1766, 65535
    %v1790 = vshrl.u32 %v1766, 16
    %v1791 = vand.u32 %v1761, 65535
    %v1792 = vshrl.u32 %v1761, 16
    %v1793 = vmul.u32 %v1789, %v1791
    %v1794 = vmul.u32 %v1789, %v1792
    %v1795 = vmul.u32 %v1790, %v1791
    %v1796 = vmul.u32 %v1790, %v1792
    %v1797 = vshll.u32 %v1794, 16
    %v1798 = vshrl.u32 %v1794, 16
    %v1799 = vshll.u32 %v1795, 16
    %v1800 = vshrl.u32 %v1795, 16
    %vm1801 = vc.u32 %v1793, %v1797
    %v1802 = vsel %vm1801, 1, 0
    %v1803 = vadd.s32 %v1793, %v1797
    %v1804 = vadd.s32 %v1796, %v1802
    %vm1805 = vc.u32 %v1803, %v1799
    %v1806 = vsel %vm1805, 1, 0
    %v1807 = vadd.s32 %v1803, %v1799
    %v1808 = vadd.s32 %v1804, %v1806
    %v1809 = vadd.s32 %v1808, %v1798
    %v1810 = vadd.s32 %v1809, %v1800
    %v1811 = vmul.u32 %v1766, %v1757
    %v1812 = vadd.s32 %v1788, %v1807
    %vm1813 = vc.u32 %v1788, %v1807
    %v1814 = vadd.s32 %v1810, 1
    %v1815 = vsel %vm1813, %v1814, %v1810
    %v1816 = vadd.s32 %v1811, %v1815
    %v1817 = vadd.s32 %v1816, 536870912
    %v1818 = vshrl.u32 %v1817, 30
    %v1819 = vshll.u32 %v1818, 30
    %v1820 = vsub.s32 %v1816, %v1819
    %vm1821 = vcmp.lt.s32.totalorder %v1820, 0
    %v1822 = vsub.s32 0, %v1820
    %v1823 = vsel %vm1821, %v1822, %v1820
    %v1824 = vclz %v1823
    %v1825 = vsub.s32 %v1824, 2
    %vm1826 = vcmp.gt.s32.totalorder 0, %v1825
    %v1827 = vsel %vm1826, 0, %v1825
    %v1828 = vsub.s32 32, %v1827
    %v1829 = vshll.u32 %v1820, %v1827
    %v1830 = vshrl.u32 %v1812, %v1828
    %v1831 = vor.u32 %v1829, %v1830
    %v1832 = vsub.s32 4294967266, %v1827
    %v1833 = vadd.s32 %v1832, 127
    %v1834 = vshll.u32 %v1833, 23
    %v1835 = vor.u32 4788187, %v1834
    %v1836 = vand.u32 2147483647, %v1835
    %v1838 = vcvt.s32.f32 %v1831
    %v1839 = vmul.f32 %v1838, %v1836
    %v1840 = vxor.u32 %v1839, 2147483648
    %v1841 = vsel %vm1720, %v1840, %v1839
    %v1842 = vsub.s32 4, %v1818
    %v1843 = vsel %vm1720, %v1842, %v1818
    %v1844 = vsel %vm1719, %v1250, %v1841
    %v1845 = vsel %vm1719, 0, %v1843
    %v1846 = vmul.f32 %v1844, %v1844
    %v1847 = vmul.f32 %v1846, -0.001358992
    %v1848 = vadd.f32 %v1847, 0.041655596
    %v1849 = vmul.f32 %v1846, %v1848
    %v1850 = vadd.f32 %v1849, -0.4999988
    %v1851 = vmul.f32 %v1846, %v1850
    %v1852 = vadd.f32 1.0, %v1851
    %v1853 = vmul.f32 %v1844, %v1844
    %v1854 = vmul.f32 %v1853, -0.00019511016
    %v1855 = vadd.f32 %v1854, 0.008332121
    %v1856 = vmul.f32 %v1853, %v1855
    %v1857 = vadd.f32 %v1856, -0.16666654
    %v1858 = vmul.f32 %v1853, %v1857
    %v1859 = vadd.f32 %v1858, 1.0
    %v1860 = vmul.f32 %v1859, %v1844
    %vm1861 = vweird.f32 %v1250
    %v1862 = vadd.s32 %v1845, 3
    %v1863 = vand.u32 %v1862, 3
    %vm1864 = vcmp.lt.s32.totalorder %v1863, 2
    %vm1865 = vcmp.eq.s32.totalorder %v1863, 0
    %v1866 = vxor.u32 %v1860, 2147483648
    %v1867 = vsel %vm1865, %v1852, %v1866
    %vm1868 = vcmp.eq.s32.totalorder %v1863, 2
    %v1869 = vxor.u32 %v1852, 2147483648
    %v1870 = vsel %vm1868, %v1869, %v1860
    %v1871 = vsel %vm1864, %v1867, %v1870
    %v1872 = vsel %vm1861, nan, %v1871
    %v1873 = vand.u32 2147483647, %v1251
    %vm1874 = vcmp.le.f32.partialorder %v1873, 0.7853982
    %vm1875 = vcmp.lt.s32.totalorder %v1251, 0
    %v1876 = vand.u32 %v1251, 2139095040
    %v1877 = vshrl.u32 %v1876, 23
    %v1878 = vsub.s32 %v1877, 127
    %v1879 = vand.u32 2147483647, %v1251
    %v1880 = vand.u32 %v1879, 8388607
    %v1881 = vor.u32 %v1880, 8388608
    %v1882 = vsub.s32 0, %v1881
    %v1883 = vadd.s32 %v1878, 1
    %vm1884 = vcmp.gt.s32.totalorder %v1883, 0
    %v1885 = vsel %vm1884, %v1883, 0
    %v1886 = vshrl.u32 %v1885, 5
    %v1887 = vand.u32 %v1885, 31
    %v1888 = vsub.s32 32, %v1887
    %v1889 = vshrl.u32 683565275, %v1888
    %v1890 = vshll.u32 683565275, %v1887
    %v1891 = vshrl.u32 2475754826, %v1888
    %v1892 = vor.u32 %v1890, %v1891
    %v1893 = vshll.u32 2475754826, %v1887
    %v1894 = vshrl.u32 2131351028, %v1888
    %v1895 = vor.u32 %v1893, %v1894
    %v1896 = vshll.u32 2131351028, %v1887
    %v1897 = vshrl.u32 2102212464, %v1888
    %v1898 = vor.u32 %v1896, %v1897
    %v1899 = vshll.u32 2102212464, %v1887
    %v1900 = vshrl.u32 920167782, %v1888
    %v1901 = vor.u32 %v1899, %v1900
    %v1902 = vshll.u32 920167782, %v1887
    %v1903 = vshrl.u32 1326507024, %v1888
    %v1904 = vor.u32 %v1902, %v1903
    %vm1905 = vcmp.lt.s32.totalorder %v1886, 1
    %vm1906 = vcmp.lt.s32.totalorder %v1886, 2
    %vm1907 = vcmp.lt.s32.totalorder %v1886, 3
    %vm1908 = vcmp.lt.s32.totalorder %v1886, 4
    %v1909 = vsel %vm1905, %v1889, %v1892
    %v1910 = vsel %vm1908, %v1898, 2102212464
    %v1911 = vsel %vm1907, %v1895, %v1910
    %v1912 = vsel %vm1906, %v1909, %v1911
    %v1913 = vsel %vm1905, %v1892, %v1895
    %v1914 = vsel %vm1908, %v1901, 920167782
    %v1915 = vsel %vm1907, %v1898, %v1914
    %v1916 = vsel %vm1906, %v1913, %v1915
    %v1917 = vsel %vm1905, %v1895, %v1898
    %v1918 = vsel %vm1908, %v1904, 1326507024
    %v1919 = vsel %vm1907, %v1901, %v1918
    %v1920 = vsel %vm1906, %v1917, %v1919
    %v1921 = vshll.u32 %v1881, 8
    %v1922 = vand.u32 %v1921, 65535
    %v1923 = vshrl.u32 %v1921, 16
    %v1924 = vand.u32 %v1920, 65535
    %v1925 = vshrl.u32 %v1920, 16
    %v1926 = vmul.u32 %v1922, %v1924
    %v1927 = vmul.u32 %v1922, %v1925
    %v1928 = vmul.u32 %v1923, %v1924
    %v1929 = vmul.u32 %v1923, %v1925
    %v1930 = vshll.u32 %v1927, 16
    %v1931 = vshrl.u32 %v1927, 16
    %v1932 = vshll.u32 %v1928, 16
    %v1933 = vshrl.u32 %v1928, 16
    %vm1934 = vc.u32 %v1926, %v1930
    %v1935 = vsel %vm1934, 1, 0
    %v1936 = vadd.s32 %v1926, %v1930
    %v1937 = vadd.s32 %v1929, %v1935
    %vm1938 = vc.u32 %v1936, %v1932
    %v1939 = vsel %vm1938, 1, 0
    %v1940 = vadd.s32 %v1936, %v1932
    %v1941 = vadd.s32 %v1937, %v1939
    %v1942 = vadd.s32 %v1941, %v1931
    %v1943 = vadd.s32 %v1942, %v1933
    %v1944 = vand.u32 %v1921, 65535
    %v1945 = vshrl.u32 %v1921, 16
    %v1946 = vand.u32 %v1916, 65535
    %v1947 = vshrl.u32 %v1916, 16
    %v1948 = vmul.u32 %v1944, %v1946
    %v1949 = vmul.u32 %v1944, %v1947
    %v1950 = vmul.u32 %v1945, %v1946
    %v1951 = vmul.u32 %v1945, %v1947
    %v1952 = vshll.u32 %v1949, 16
    %v1953 = vshrl.u32 %v1949, 16
    %v1954 = vshll.u32 %v1950, 16
    %v1955 = vshrl.u32 %v1950, 16
    %vm1956 = vc.u32 %v1948, %v1952
    %v1957 = vsel %vm1956, 1, 0
    %v1958 = vadd.s32 %v1948, %v1952
    %v1959 = vadd.s32 %v1951, %v1957
    %vm1960 = vc.u32 %v1958, %v1954
    %v1961 = vsel %vm1960, 1, 0
    %v1962 = vadd.s32 %v1958, %v1954
    %v1963 = vadd.s32 %v1959, %v1961
    %v1964 = vadd.s32 %v1963, %v1953
    %v1965 = vadd.s32 %v1964, %v1955
    %v1966 = vmul.u32 %v1921, %v1912
    %v1967 = vadd.s32 %v1943, %v1962
    %vm1968 = vc.u32 %v1943, %v1962
    %v1969 = vadd.s32 %v1965, 1
    %v1970 = vsel %vm1968, %v1969, %v1965
    %v1971 = vadd.s32 %v1966, %v1970
    %v1972 = vadd.s32 %v1971, 536870912
    %v1973 = vshrl.u32 %v1972, 30
    %v1974 = vshll.u32 %v1973, 30
    %v1975 = vsub.s32 %v1971, %v1974
    %vm1976 = vcmp.lt.s32.totalorder %v1975, 0
    %v1977 = vsub.s32 0, %v1975
    %v1978 = vsel %vm1976, %v1977, %v1975
    %v1979 = vclz %v1978
    %v1980 = vsub.s32 %v1979, 2
    %vm1981 = vcmp.gt.s32.totalorder 0, %v1980
    %v1982 = vsel %vm1981, 0, %v1980
    %v1983 = vsub.s32 32, %v1982
    %v1984 = vshll.u32 %v1975, %v1982
    %v1985 = vshrl.u32 %v1967, %v1983
    %v1986 = vor.u32 %v1984, %v1985
    %v1987 = vsub.s32 4294967266, %v1982
    %v1988 = vadd.s32 %v1987, 127
    %v1989 = vshll.u32 %v1988, 23
    %v1990 = vor.u32 4788187, %v1989
    %v1991 = vand.u32 2147483647, %v1990
    %v1993 = vcvt.s32.f32 %v1986
    %v1994 = vmul.f32 %v1993, %v1991
    %v1995 = vxor.u32 %v1994, 2147483648
    %v1996 = vsel %vm1875, %v1995, %v1994
    %v1997 = vsub.s32 4, %v1973
    %v1998 = vsel %vm1875, %v1997, %v1973
    %v1999 = vsel %vm1874, %v1251, %v1996
    %v2000 = vsel %vm1874, 0, %v1998
    %v2001 = vmul.f32 %v1999, %v1999
    %v2002 = vmul.f32 %v2001, -0.001358992
    %v2003 = vadd.f32 %v2002, 0.041655596
    %v2004 = vmul.f32 %v2001, %v2003
    %v2005 = vadd.f32 %v2004, -0.4999988
    %v2006 = vmul.f32 %v2001, %v2005
    %v2007 = vadd.f32 1.0, %v2006
    %v2008 = vmul.f32 %v1999, %v1999
    %v2009 = vmul.f32 %v2008, -0.00019511016
    %v2010 = vadd.f32 %v2009, 0.008332121
    %v2011 = vmul.f32 %v2008, %v2010
    %v2012 = vadd.f32 %v2011, -0.16666654
    %v2013 = vmul.f32 %v2008, %v2012
    %v2014 = vadd.f32 %v2013, 1.0
    %v2015 = vmul.f32 %v2014, %v1999
    %vm2016 = vweird.f32 %v1251
    %v2017 = vadd.s32 %v2000, 3
    %v2018 = vand.u32 %v2017, 3
    %vm2019 = vcmp.lt.s32.totalorder %v2018, 2
    %vm2020 = vcmp.eq.s32.totalorder %v2018, 0
    %v2021 = vxor.u32 %v2015, 2147483648
    %v2022 = vsel %vm2020, %v2007, %v2021
    %vm2023 = vcmp.eq.s32.totalorder %v2018, 2
    %v2024 = vxor.u32 %v2007, 2147483648
    %v2025 = vsel %vm2023, %v2024, %v2015
    %v2026 = vsel %vm2019, %v2022, %v2025
    %v2027 = vsel %vm2016, nan, %v2026
    %v2028 = vand.u32 2147483647, %v1252
    %vm2029 = vcmp.le.f32.partialorder %v2028, 0.7853982
    %vm2030 = vcmp.lt.s32.totalorder %v1252, 0
    %v2031 = vand.u32 %v1252, 2139095040
    %v2032 = vshrl.u32 %v2031, 23
    %v2033 = vsub.s32 %v2032, 127
    %v2034 = vand.u32 2147483647, %v1252
    %v2035 = vand.u32 %v2034, 8388607
    %v2036 = vor.u32 %v2035, 8388608
    %v2037 = vsub.s32 0, %v2036
    %v2038 = vadd.s32 %v2033, 1
    %vm2039 = vcmp.gt.s32.totalorder %v2038, 0
    %v2040 = vsel %vm2039, %v2038, 0
    %v2041 = vshrl.u32 %v2040, 5
    %v2042 = vand.u32 %v2040, 31
    %v2043 = vsub.s32 32, %v2042
    %v2044 = vshrl.u32 683565275, %v2043
    %v2045 = vshll.u32 683565275, %v2042
    %v2046 = vshrl.u32 2475754826, %v2043
    %v2047 = vor.u32 %v2045, %v2046
    %v2048 = vshll.u32 2475754826, %v2042
    %v2049 = vshrl.u32 2131351028, %v2043
    %v2050 = vor.u32 %v2048, %v2049
    %v2051 = vshll.u32 2131351028, %v2042
    %v2052 = vshrl.u32 2102212464, %v2043
    %v2053 = vor.u32 %v2051, %v2052
    %v2054 = vshll.u32 2102212464, %v2042
    %v2055 = vshrl.u32 920167782, %v2043
    %v2056 = vor.u32 %v2054, %v2055
    %v2057 = vshll.u32 920167782, %v2042
    %v2058 = vshrl.u32 1326507024, %v2043
    %v2059 = vor.u32 %v2057, %v2058
    %vm2060 = vcmp.lt.s32.totalorder %v2041, 1
    %vm2061 = vcmp.lt.s32.totalorder %v2041, 2
    %vm2062 = vcmp.lt.s32.totalorder %v2041, 3
    %vm2063 = vcmp.lt.s32.totalorder %v2041, 4
    %v2064 = vsel %vm2060, %v2044, %v2047
    %v2065 = vsel %vm2063, %v2053, 2102212464
    %v2066 = vsel %vm2062, %v2050, %v2065
    %v2067 = vsel %vm2061, %v2064, %v2066
    %v2068 = vsel %vm2060, %v2047, %v2050
    %v2069 = vsel %vm2063, %v2056, 920167782
    %v2070 = vsel %vm2062, %v2053, %v2069
    %v2071 = vsel %vm2061, %v2068, %v2070
    %v2072 = vsel %vm2060, %v2050, %v2053
    %v2073 = vsel %vm2063, %v2059, 1326507024
    %v2074 = vsel %vm2062, %v2056, %v2073
    %v2075 = vsel %vm2061, %v2072, %v2074
    %v2076 = vshll.u32 %v2036, 8
    %v2077 = vand.u32 %v2076, 65535
    %v2078 = vshrl.u32 %v2076, 16
    %v2079 = vand.u32 %v2075, 65535
    %v2080 = vshrl.u32 %v2075, 16
    %v2081 = vmul.u32 %v2077, %v2079
    %v2082 = vmul.u32 %v2077, %v2080
    %v2083 = vmul.u32 %v2078, %v2079
    %v2084 = vmul.u32 %v2078, %v2080
    %v2085 = vshll.u32 %v2082, 16
    %v2086 = vshrl.u32 %v2082, 16
    %v2087 = vshll.u32 %v2083, 16
    %v2088 = vshrl.u32 %v2083, 16
    %vm2089 = vc.u32 %v2081, %v2085
    %v2090 = vsel %vm2089, 1, 0
    %v2091 = vadd.s32 %v2081, %v2085
    %v2092 = vadd.s32 %v2084, %v2090
    %vm2093 = vc.u32 %v2091, %v2087
    %v2094 = vsel %vm2093, 1, 0
    %v2095 = vadd.s32 %v2091, %v2087
    %v2096 = vadd.s32 %v2092, %v2094
    %v2097 = vadd.s32 %v2096, %v2086
    %v2098 = vadd.s32 %v2097, %v2088
    %v2099 = vand.u32 %v2076, 65535
    %v2100 = vshrl.u32 %v2076, 16
    %v2101 = vand.u32 %v2071, 65535
    %v2102 = vshrl.u32 %v2071, 16
    %v2103 = vmul.u32 %v2099, %v2101
    %v2104 = vmul.u32 %v2099, %v2102
    %v2105 = vmul.u32 %v2100, %v2101
    %v2106 = vmul.u32 %v2100, %v2102
    %v2107 = vshll.u32 %v2104, 16
    %v2108 = vshrl.u32 %v2104, 16
    %v2109 = vshll.u32 %v2105, 16
    %v2110 = vshrl.u32 %v2105, 16
    %vm2111 = vc.u32 %v2103, %v2107
    %v2112 = vsel %vm2111, 1, 0
    %v2113 = vadd.s32 %v2103, %v2107
    %v2114 = vadd.s32 %v2106, %v2112
    %vm2115 = vc.u32 %v2113, %v2109
    %v2116 = vsel %vm2115, 1, 0
    %v2117 = vadd.s32 %v2113, %v2109
    %v2118 = vadd.s32 %v2114, %v2116
    %v2119 = vadd.s32 %v2118, %v2108
    %v2120 = vadd.s32 %v2119, %v2110
    %v2121 = vmul.u32 %v2076, %v2067
    %v2122 = vadd.s32 %v2098, %v2117
    %vm2123 = vc.u32 %v2098, %v2117
    %v2124 = vadd.s32 %v2120, 1
    %v2125 = vsel %vm2123, %v2124, %v2120
    %v2126 = vadd.s32 %v2121, %v2125
    %v2127 = vadd.s32 %v2126, 536870912
    %v2128 = vshrl.u32 %v2127, 30
    %v2129 = vshll.u32 %v2128, 30
    %v2130 = vsub.s32 %v2126, %v2129
    %vm2131 = vcmp.lt.s32.totalorder %v2130, 0
    %v2132 = vsub.s32 0, %v2130
    %v2133 = vsel %vm2131, %v2132, %v2130
    %v2134 = vclz %v2133
    %v2135 = vsub.s32 %v2134, 2
    %vm2136 = vcmp.gt.s32.totalorder 0, %v2135
    %v2137 = vsel %vm2136, 0, %v2135
    %v2138 = vsub.s32 32, %v2137
    %v2139 = vshll.u32 %v2130, %v2137
    %v2140 = vshrl.u32 %v2122, %v2138
    %v2141 = vor.u32 %v2139, %v2140
    %v2142 = vsub.s32 4294967266, %v2137
    %v2143 = vadd.s32 %v2142, 127
    %v2144 = vshll.u32 %v2143, 23
    %v2145 = vor.u32 4788187, %v2144
    %v2146 = vand.u32 2147483647, %v2145
    %v2148 = vcvt.s32.f32 %v2141
    %v2149 = vmul.f32 %v2148, %v2146
    %v2150 = vxor.u32 %v2149, 2147483648
    %v2151 = vsel %vm2030, %v2150, %v2149
    %v2152 = vsub.s32 4, %v2128
    %v2153 = vsel %vm2030, %v2152, %v2128
    %v2154 = vsel %vm2029, %v1252, %v2151
    %v2155 = vsel %vm2029, 0, %v2153
    %v2156 = vmul.f32 %v2154, %v2154
    %v2157 = vmul.f32 %v2156, -0.001358992
    %v2158 = vadd.f32 %v2157, 0.041655596
    %v2159 = vmul.f32 %v2156, %v2158
    %v2160 = vadd.f32 %v2159, -0.4999988
    %v2161 = vmul.f32 %v2156, %v2160
    %v2162 = vadd.f32 1.0, %v2161
    %v2163 = vmul.f32 %v2154, %v2154
    %v2164 = vmul.f32 %v2163, -0.00019511016
    %v2165 = vadd.f32 %v2164, 0.008332121
    %v2166 = vmul.f32 %v2163, %v2165
    %v2167 = vadd.f32 %v2166, -0.16666654
    %v2168 = vmul.f32 %v2163, %v2167
    %v2169 = vadd.f32 %v2168, 1.0
    %v2170 = vmul.f32 %v2169, %v2154
    %vm2171 = vweird.f32 %v1252
    %v2172 = vadd.s32 %v2155, 3
    %v2173 = vand.u32 %v2172, 3
    %vm2174 = vcmp.lt.s32.totalorder %v2173, 2
    %vm2175 = vcmp.eq.s32.totalorder %v2173, 0
    %v2176 = vxor.u32 %v2170, 2147483648
    %v2177 = vsel %vm2175, %v2162, %v2176
    %vm2178 = vcmp.eq.s32.totalorder %v2173, 2
    %v2179 = vxor.u32 %v2162, 2147483648
    %v2180 = vsel %vm2178, %v2179, %v2170
    %v2181 = vsel %vm2174, %v2177, %v2180
    %v2182 = vsel %vm2171, nan, %v2181
    %v2183 = vmul.f32 %v1220, %v1872
    %v2184 = vmul.f32 %v1221, %v2027
    %v2185 = vmul.f32 %v1222, %v2182
    %v2186 = vadd.f32 %v1715, %v2183
    %v2187 = vadd.f32 %v1716, %v2184
    %v2188 = vadd.f32 %v1717, %v2185
    %v2189 = vmul.f32 %v2186, %v111
    %v2190 = vmul.f32 %v2187, %v112
    %v2191 = vmul.f32 %v2188, %v113
    %2192 = vmatpush.msra.mxu0 0.0
    %2193 = vmatpush.msra.mxu0 0.0
    %2194 = vmatpush.msra.mxu0 0.0
    %2195 = vmatpush.msra.mxu0 0.0
    %2196 = vmatpush.msra.mxu0 0.0
    %2197 = vmatpush.msra.mxu0 0.0
    %2198 = vmatpush.msra.mxu0 0.0
    %2199 = vmatpush.msra.mxu0 0.0
    %2200 = vmatpush.msra.mxu0 0.0
    %2201 = vmatpush.msra.mxu0 0.0
    %2202 = vmatpush.msra.mxu0 0.0
    %2203 = vmatpush.msra.mxu0 0.0
    %2204 = vmatpush.msra.mxu0 0.0
    %2205 = vmatpush.msra.mxu0 %v2191
    %2206 = vmatpush.msra.mxu0 %v2190
    %2207 = vmatpush.msra.mxu0 %v2189
    %2208 = vmatmul.f32.gmra.mxu0 %v1133
    %v2209 = vpop.f32.mrf.mxu0
    %v2210 = vadd.f32 %v1114, %v2209
    %2211 = vmatmul.f32.gmra.mxu0 %v1136
    %v2212 = vpop.f32.mrf.mxu0
    %v2213 = vadd.f32 %v1119, %v2212
    %2214 = vmatmul.f32.gmra.mxu0 %v1139
    %v2215 = vpop.f32.mrf.mxu0
    %v2216 = vadd.f32 %v1124, %v2215
    %2217 = vmatmul.f32.gmra.mxu0 %v1142
    %v2218 = vpop.f32.mrf.mxu0
    %v2219 = vadd.f32 %v1129, %v2218
    %2220 = vdwg.mxu0
    %v2221 = vmax.f32 %v2210, 0.0
    %v2222 = vmax.f32 %v2213, 0.0
    %v2223 = vmax.f32 %v2216, 0.0
    %v2224 = vmax.f32 %v2219, 0.0
    %2225 = vmatpush.msra.mxu0 0.0
    %2226 = vmatpush.msra.mxu0 0.0
    %2227 = vmatpush.msra.mxu0 0.0
    %2228 = vmatpush.msra.mxu0 0.0
    %2229 = vmatpush.msra.mxu0 0.0
    %2230 = vmatpush.msra.mxu0 0.0
    %2231 = vmatpush.msra.mxu0 0.0
    %2232 = vmatpush.msra.mxu0 0.0
    %2233 = vmatpush.msra.mxu0 0.0
    %2234 = vmatpush.msra.mxu0 0.0
    %2235 = vmatpush.msra.mxu0 0.0
    %2236 = vmatpush.msra.mxu0 0.0
    %2237 = vmatpush.msra.mxu0 %v2224
    %2238 = vmatpush.msra.mxu0 %v2223
    %2239 = vmatpush.msra.mxu0 %v2222
    %2240 = vmatpush.msra.mxu0 %v2221
    %2241 = vmatmul.f32.gmra.mxu0 %v1186
    %v2242 = vpop.f32.mrf.mxu0
    %v2243 = vadd.f32 %v1182, %v2242
    %2244 = vdwg.mxu0
    %v2245 = vperm.slane %v1235, 2
    %v2246 = vmul.f32 %v2243, %v2245
    %v2247 = vadd.f32 %v1210, %v2246
    %v2248 = vld [vmem:[#allocation2 + $0x30] sm:$0xf]
    %v2249 = vld [vmem:[#allocation2 + $0x34] sm:$0xf]
    %v2250 = vld [vmem:[#allocation2 + $0x38] sm:$0xf]
    %v2251 = vld [vmem:[#allocation2 + $0x3c] sm:$0xf]
    %v2252 = vld [vmem:[#allocation2 + $0x40] sm:$0xf]
    %v2253 = vld [vmem:[#allocation2 + $0x44] sm:$0xf]
    %v2254 = vunpack.c.l.bf16 %v2248
    %v2255 = vunpack.c.l.bf16 %v2249
    %v2256 = vunpack.c.l.bf16 %v2250
    %v2257 = vunpack.c.l.bf16 %v2251
    %v2258 = vunpack.c.l.bf16 %v2252
    %v2259 = vunpack.c.l.bf16 %v2253
    %v2260 = vld [vmem:[#allocation5 + $0x30] sm:$0xf]
    %v2261 = vld [vmem:[#allocation5 + $0x34] sm:$0xf]
    %v2262 = vld [vmem:[#allocation5 + $0x38] sm:$0xf]
    %v2263 = vld [vmem:[#allocation5 + $0x3c] sm:$0xf]
    %v2264 = vld [vmem:[#allocation5 + $0x40] sm:$0xf]
    %v2265 = vld [vmem:[#allocation5 + $0x44] sm:$0xf]
    %v2266 = vunpack.c.l.bf16 %v2260
    %v2267 = vunpack.c.l.bf16 %v2261
    %v2268 = vunpack.c.l.bf16 %v2262
    %v2269 = vunpack.c.l.bf16 %v2263
    %v2270 = vunpack.c.l.bf16 %v2264
    %v2271 = vunpack.c.l.bf16 %v2265
    %v2272 = vld [vmem:[%s3 + $0x10] sm:$0xff]
    %v2273 = vperm.slane %v2272, 0
    %v2274 = vmul.f32 %v2266, %v2273
    %v2275 = vmul.f32 %v2267, %v2273
    %v2276 = vmul.f32 %v2268, %v2273
    %v2277 = vperm.slane %v2272, 1
    %v2278 = vmul.f32 %v2269, %v2277
    %v2279 = vmul.f32 %v2270, %v2277
    %v2280 = vmul.f32 %v2271, %v2277
    %v2281 = vadd.f32 %v2274, %v2278
    %v2282 = vadd.f32 %v2275, %v2279
    %v2283 = vadd.f32 %v2276, %v2280
    %v2284 = vadd.f32 %v2281, %v120
    %v2285 = vadd.f32 %v2282, %v120
    %v2286 = vadd.f32 %v2283, %v120
    %v2287 = vmul.f32 %v2284, 3.1415927
    %v2288 = vmul.f32 %v2285, 3.1415927
    %v2289 = vmul.f32 %v2286, 3.1415927
    %v2290 = vand.u32 2147483647, %v2287
    %vm2291 = vcmp.le.f32.partialorder %v2290, 0.7853982
    %vm2292 = vcmp.lt.s32.totalorder %v2287, 0
    %v2293 = vand.u32 %v2287, 2139095040
    %v2294 = vshrl.u32 %v2293, 23
    %v2295 = vsub.s32 %v2294, 127
    %v2296 = vand.u32 2147483647, %v2287
    %v2297 = vand.u32 %v2296, 8388607
    %v2298 = vor.u32 %v2297, 8388608
    %v2299 = vsub.s32 0, %v2298
    %v2300 = vadd.s32 %v2295, 1
    %vm2301 = vcmp.gt.s32.totalorder %v2300, 0
    %v2302 = vsel %vm2301, %v2300, 0
    %v2303 = vshrl.u32 %v2302, 5
    %v2304 = vand.u32 %v2302, 31
    %v2305 = vsub.s32 32, %v2304
    %v2306 = vshrl.u32 683565275, %v2305
    %v2307 = vshll.u32 683565275, %v2304
    %v2308 = vshrl.u32 2475754826, %v2305
    %v2309 = vor.u32 %v2307, %v2308
    %v2310 = vshll.u32 2475754826, %v2304
    %v2311 = vshrl.u32 2131351028, %v2305
    %v2312 = vor.u32 %v2310, %v2311
    %v2313 = vshll.u32 2131351028, %v2304
    %v2314 = vshrl.u32 2102212464, %v2305
    %v2315 = vor.u32 %v2313, %v2314
    %v2316 = vshll.u32 2102212464, %v2304
    %v2317 = vshrl.u32 920167782, %v2305
    %v2318 = vor.u32 %v2316, %v2317
    %v2319 = vshll.u32 920167782, %v2304
    %v2320 = vshrl.u32 1326507024, %v2305
    %v2321 = vor.u32 %v2319, %v2320
    %vm2322 = vcmp.lt.s32.totalorder %v2303, 1
    %vm2323 = vcmp.lt.s32.totalorder %v2303, 2
    %vm2324 = vcmp.lt.s32.totalorder %v2303, 3
    %vm2325 = vcmp.lt.s32.totalorder %v2303, 4
    %v2326 = vsel %vm2322, %v2306, %v2309
    %v2327 = vsel %vm2325, %v2315, 2102212464
    %v2328 = vsel %vm2324, %v2312, %v2327
    %v2329 = vsel %vm2323, %v2326, %v2328
    %v2330 = vsel %vm2322, %v2309, %v2312
    %v2331 = vsel %vm2325, %v2318, 920167782
    %v2332 = vsel %vm2324, %v2315, %v2331
    %v2333 = vsel %vm2323, %v2330, %v2332
    %v2334 = vsel %vm2322, %v2312, %v2315
    %v2335 = vsel %vm2325, %v2321, 1326507024
    %v2336 = vsel %vm2324, %v2318, %v2335
    %v2337 = vsel %vm2323, %v2334, %v2336
    %v2338 = vshll.u32 %v2298, 8
    %v2339 = vand.u32 %v2338, 65535
    %v2340 = vshrl.u32 %v2338, 16
    %v2341 = vand.u32 %v2337, 65535
    %v2342 = vshrl.u32 %v2337, 16
    %v2343 = vmul.u32 %v2339, %v2341
    %v2344 = vmul.u32 %v2339, %v2342
    %v2345 = vmul.u32 %v2340, %v2341
    %v2346 = vmul.u32 %v2340, %v2342
    %v2347 = vshll.u32 %v2344, 16
    %v2348 = vshrl.u32 %v2344, 16
    %v2349 = vshll.u32 %v2345, 16
    %v2350 = vshrl.u32 %v2345, 16
    %vm2351 = vc.u32 %v2343, %v2347
    %v2352 = vsel %vm2351, 1, 0
    %v2353 = vadd.s32 %v2343, %v2347
    %v2354 = vadd.s32 %v2346, %v2352
    %vm2355 = vc.u32 %v2353, %v2349
    %v2356 = vsel %vm2355, 1, 0
    %v2357 = vadd.s32 %v2353, %v2349
    %v2358 = vadd.s32 %v2354, %v2356
    %v2359 = vadd.s32 %v2358, %v2348
    %v2360 = vadd.s32 %v2359, %v2350
    %v2361 = vand.u32 %v2338, 65535
    %v2362 = vshrl.u32 %v2338, 16
    %v2363 = vand.u32 %v2333, 65535
    %v2364 = vshrl.u32 %v2333, 16
    %v2365 = vmul.u32 %v2361, %v2363
    %v2366 = vmul.u32 %v2361, %v2364
    %v2367 = vmul.u32 %v2362, %v2363
    %v2368 = vmul.u32 %v2362, %v2364
    %v2369 = vshll.u32 %v2366, 16
    %v2370 = vshrl.u32 %v2366, 16
    %v2371 = vshll.u32 %v2367, 16
    %v2372 = vshrl.u32 %v2367, 16
    %vm2373 = vc.u32 %v2365, %v2369
    %v2374 = vsel %vm2373, 1, 0
    %v2375 = vadd.s32 %v2365, %v2369
    %v2376 = vadd.s32 %v2368, %v2374
    %vm2377 = vc.u32 %v2375, %v2371
    %v2378 = vsel %vm2377, 1, 0
    %v2379 = vadd.s32 %v2375, %v2371
    %v2380 = vadd.s32 %v2376, %v2378
    %v2381 = vadd.s32 %v2380, %v2370
    %v2382 = vadd.s32 %v2381, %v2372
    %v2383 = vmul.u32 %v2338, %v2329
    %v2384 = vadd.s32 %v2360, %v2379
    %vm2385 = vc.u32 %v2360, %v2379
    %v2386 = vadd.s32 %v2382, 1
    %v2387 = vsel %vm2385, %v2386, %v2382
    %v2388 = vadd.s32 %v2383, %v2387
    %v2389 = vadd.s32 %v2388, 536870912
    %v2390 = vshrl.u32 %v2389, 30
    %v2391 = vshll.u32 %v2390, 30
    %v2392 = vsub.s32 %v2388, %v2391
    %vm2393 = vcmp.lt.s32.totalorder %v2392, 0
    %v2394 = vsub.s32 0, %v2392
    %v2395 = vsel %vm2393, %v2394, %v2392
    %v2396 = vclz %v2395
    %v2397 = vsub.s32 %v2396, 2
    %vm2398 = vcmp.gt.s32.totalorder 0, %v2397
    %v2399 = vsel %vm2398, 0, %v2397
    %v2400 = vsub.s32 32, %v2399
    %v2401 = vshll.u32 %v2392, %v2399
    %v2402 = vshrl.u32 %v2384, %v2400
    %v2403 = vor.u32 %v2401, %v2402
    %v2404 = vsub.s32 4294967266, %v2399
    %v2405 = vadd.s32 %v2404, 127
    %v2406 = vshll.u32 %v2405, 23
    %v2407 = vor.u32 4788187, %v2406
    %v2408 = vand.u32 2147483647, %v2407
    %v2410 = vcvt.s32.f32 %v2403
    %v2411 = vmul.f32 %v2410, %v2408
    %v2412 = vxor.u32 %v2411, 2147483648
    %v2413 = vsel %vm2292, %v2412, %v2411
    %v2414 = vsub.s32 4, %v2390
    %v2415 = vsel %vm2292, %v2414, %v2390
    %v2416 = vsel %vm2291, %v2287, %v2413
    %v2417 = vsel %vm2291, 0, %v2415
    %v2418 = vmul.f32 %v2416, %v2416
    %v2419 = vmul.f32 %v2418, -0.001358992
    %v2420 = vadd.f32 %v2419, 0.041655596
    %v2421 = vmul.f32 %v2418, %v2420
    %v2422 = vadd.f32 %v2421, -0.4999988
    %v2423 = vmul.f32 %v2418, %v2422
    %v2424 = vadd.f32 1.0, %v2423
    %v2425 = vmul.f32 %v2416, %v2416
    %v2426 = vmul.f32 %v2425, -0.00019511016
    %v2427 = vadd.f32 %v2426, 0.008332121
    %v2428 = vmul.f32 %v2425, %v2427
    %v2429 = vadd.f32 %v2428, -0.16666654
    %v2430 = vmul.f32 %v2425, %v2429
    %v2431 = vadd.f32 %v2430, 1.0
    %v2432 = vmul.f32 %v2431, %v2416
    %vm2433 = vweird.f32 %v2287
    %v2434 = vand.u32 %v2417, 3
    %vm2435 = vcmp.lt.s32.totalorder %v2434, 2
    %vm2436 = vcmp.eq.s32.totalorder %v2434, 0
    %v2437 = vxor.u32 %v2432, 2147483648
    %v2438 = vsel %vm2436, %v2424, %v2437
    %vm2439 = vcmp.eq.s32.totalorder %v2434, 2
    %v2440 = vxor.u32 %v2424, 2147483648
    %v2441 = vsel %vm2439, %v2440, %v2432
    %v2442 = vsel %vm2435, %v2438, %v2441
    %v2443 = vsel %vm2433, nan, %v2442
    %v2444 = vand.u32 2147483647, %v2288
    %vm2445 = vcmp.le.f32.partialorder %v2444, 0.7853982
    %vm2446 = vcmp.lt.s32.totalorder %v2288, 0
    %v2447 = vand.u32 %v2288, 2139095040
    %v2448 = vshrl.u32 %v2447, 23
    %v2449 = vsub.s32 %v2448, 127
    %v2450 = vand.u32 2147483647, %v2288
    %v2451 = vand.u32 %v2450, 8388607
    %v2452 = vor.u32 %v2451, 8388608
    %v2453 = vsub.s32 0, %v2452
    %v2454 = vadd.s32 %v2449, 1
    %vm2455 = vcmp.gt.s32.totalorder %v2454, 0
    %v2456 = vsel %vm2455, %v2454, 0
    %v2457 = vshrl.u32 %v2456, 5
    %v2458 = vand.u32 %v2456, 31
    %v2459 = vsub.s32 32, %v2458
    %v2460 = vshrl.u32 683565275, %v2459
    %v2461 = vshll.u32 683565275, %v2458
    %v2462 = vshrl.u32 2475754826, %v2459
    %v2463 = vor.u32 %v2461, %v2462
    %v2464 = vshll.u32 2475754826, %v2458
    %v2465 = vshrl.u32 2131351028, %v2459
    %v2466 = vor.u32 %v2464, %v2465
    %v2467 = vshll.u32 2131351028, %v2458
    %v2468 = vshrl.u32 2102212464, %v2459
    %v2469 = vor.u32 %v2467, %v2468
    %v2470 = vshll.u32 2102212464, %v2458
    %v2471 = vshrl.u32 920167782, %v2459
    %v2472 = vor.u32 %v2470, %v2471
    %v2473 = vshll.u32 920167782, %v2458
    %v2474 = vshrl.u32 1326507024, %v2459
    %v2475 = vor.u32 %v2473, %v2474
    %vm2476 = vcmp.lt.s32.totalorder %v2457, 1
    %vm2477 = vcmp.lt.s32.totalorder %v2457, 2
    %vm2478 = vcmp.lt.s32.totalorder %v2457, 3
    %vm2479 = vcmp.lt.s32.totalorder %v2457, 4
    %v2480 = vsel %vm2476, %v2460, %v2463
    %v2481 = vsel %vm2479, %v2469, 2102212464
    %v2482 = vsel %vm2478, %v2466, %v2481
    %v2483 = vsel %vm2477, %v2480, %v2482
    %v2484 = vsel %vm2476, %v2463, %v2466
    %v2485 = vsel %vm2479, %v2472, 920167782
    %v2486 = vsel %vm2478, %v2469, %v2485
    %v2487 = vsel %vm2477, %v2484, %v2486
    %v2488 = vsel %vm2476, %v2466, %v2469
    %v2489 = vsel %vm2479, %v2475, 1326507024
    %v2490 = vsel %vm2478, %v2472, %v2489
    %v2491 = vsel %vm2477, %v2488, %v2490
    %v2492 = vshll.u32 %v2452, 8
    %v2493 = vand.u32 %v2492, 65535
    %v2494 = vshrl.u32 %v2492, 16
    %v2495 = vand.u32 %v2491, 65535
    %v2496 = vshrl.u32 %v2491, 16
    %v2497 = vmul.u32 %v2493, %v2495
    %v2498 = vmul.u32 %v2493, %v2496
    %v2499 = vmul.u32 %v2494, %v2495
    %v2500 = vmul.u32 %v2494, %v2496
    %v2501 = vshll.u32 %v2498, 16
    %v2502 = vshrl.u32 %v2498, 16
    %v2503 = vshll.u32 %v2499, 16
    %v2504 = vshrl.u32 %v2499, 16
    %vm2505 = vc.u32 %v2497, %v2501
    %v2506 = vsel %vm2505, 1, 0
    %v2507 = vadd.s32 %v2497, %v2501
    %v2508 = vadd.s32 %v2500, %v2506
    %vm2509 = vc.u32 %v2507, %v2503
    %v2510 = vsel %vm2509, 1, 0
    %v2511 = vadd.s32 %v2507, %v2503
    %v2512 = vadd.s32 %v2508, %v2510
    %v2513 = vadd.s32 %v2512, %v2502
    %v2514 = vadd.s32 %v2513, %v2504
    %v2515 = vand.u32 %v2492, 65535
    %v2516 = vshrl.u32 %v2492, 16
    %v2517 = vand.u32 %v2487, 65535
    %v2518 = vshrl.u32 %v2487, 16
    %v2519 = vmul.u32 %v2515, %v2517
    %v2520 = vmul.u32 %v2515, %v2518
    %v2521 = vmul.u32 %v2516, %v2517
    %v2522 = vmul.u32 %v2516, %v2518
    %v2523 = vshll.u32 %v2520, 16
    %v2524 = vshrl.u32 %v2520, 16
    %v2525 = vshll.u32 %v2521, 16
    %v2526 = vshrl.u32 %v2521, 16
    %vm2527 = vc.u32 %v2519, %v2523
    %v2528 = vsel %vm2527, 1, 0
    %v2529 = vadd.s32 %v2519, %v2523
    %v2530 = vadd.s32 %v2522, %v2528
    %vm2531 = vc.u32 %v2529, %v2525
    %v2532 = vsel %vm2531, 1, 0
    %v2533 = vadd.s32 %v2529, %v2525
    %v2534 = vadd.s32 %v2530, %v2532
    %v2535 = vadd.s32 %v2534, %v2524
    %v2536 = vadd.s32 %v2535, %v2526
    %v2537 = vmul.u32 %v2492, %v2483
    %v2538 = vadd.s32 %v2514, %v2533
    %vm2539 = vc.u32 %v2514, %v2533
    %v2540 = vadd.s32 %v2536, 1
    %v2541 = vsel %vm2539, %v2540, %v2536
    %v2542 = vadd.s32 %v2537, %v2541
    %v2543 = vadd.s32 %v2542, 536870912
    %v2544 = vshrl.u32 %v2543, 30
    %v2545 = vshll.u32 %v2544, 30
    %v2546 = vsub.s32 %v2542, %v2545
    %vm2547 = vcmp.lt.s32.totalorder %v2546, 0
    %v2548 = vsub.s32 0, %v2546
    %v2549 = vsel %vm2547, %v2548, %v2546
    %v2550 = vclz %v2549
    %v2551 = vsub.s32 %v2550, 2
    %vm2552 = vcmp.gt.s32.totalorder 0, %v2551
    %v2553 = vsel %vm2552, 0, %v2551
    %v2554 = vsub.s32 32, %v2553
    %v2555 = vshll.u32 %v2546, %v2553
    %v2556 = vshrl.u32 %v2538, %v2554
    %v2557 = vor.u32 %v2555, %v2556
    %v2558 = vsub.s32 4294967266, %v2553
    %v2559 = vadd.s32 %v2558, 127
    %v2560 = vshll.u32 %v2559, 23
    %v2561 = vor.u32 4788187, %v2560
    %v2562 = vand.u32 2147483647, %v2561
    %v2564 = vcvt.s32.f32 %v2557
    %v2565 = vmul.f32 %v2564, %v2562
    %v2566 = vxor.u32 %v2565, 2147483648
    %v2567 = vsel %vm2446, %v2566, %v2565
    %v2568 = vsub.s32 4, %v2544
    %v2569 = vsel %vm2446, %v2568, %v2544
    %v2570 = vsel %vm2445, %v2288, %v2567
    %v2571 = vsel %vm2445, 0, %v2569
    %v2572 = vmul.f32 %v2570, %v2570
    %v2573 = vmul.f32 %v2572, -0.001358992
    %v2574 = vadd.f32 %v2573, 0.041655596
    %v2575 = vmul.f32 %v2572, %v2574
    %v2576 = vadd.f32 %v2575, -0.4999988
    %v2577 = vmul.f32 %v2572, %v2576
    %v2578 = vadd.f32 1.0, %v2577
    %v2579 = vmul.f32 %v2570, %v2570
    %v2580 = vmul.f32 %v2579, -0.00019511016
    %v2581 = vadd.f32 %v2580, 0.008332121
    %v2582 = vmul.f32 %v2579, %v2581
    %v2583 = vadd.f32 %v2582, -0.16666654
    %v2584 = vmul.f32 %v2579, %v2583
    %v2585 = vadd.f32 %v2584, 1.0
    %v2586 = vmul.f32 %v2585, %v2570
    %vm2587 = vweird.f32 %v2288
    %v2588 = vand.u32 %v2571, 3
    %vm2589 = vcmp.lt.s32.totalorder %v2588, 2
    %vm2590 = vcmp.eq.s32.totalorder %v2588, 0
    %v2591 = vxor.u32 %v2586, 2147483648
    %v2592 = vsel %vm2590, %v2578, %v2591
    %vm2593 = vcmp.eq.s32.totalorder %v2588, 2
    %v2594 = vxor.u32 %v2578, 2147483648
    %v2595 = vsel %vm2593, %v2594, %v2586
    %v2596 = vsel %vm2589, %v2592, %v2595
    %v2597 = vsel %vm2587, nan, %v2596
    %v2598 = vand.u32 2147483647, %v2289
    %vm2599 = vcmp.le.f32.partialorder %v2598, 0.7853982
    %vm2600 = vcmp.lt.s32.totalorder %v2289, 0
    %v2601 = vand.u32 %v2289, 2139095040
    %v2602 = vshrl.u32 %v2601, 23
    %v2603 = vsub.s32 %v2602, 127
    %v2604 = vand.u32 2147483647, %v2289
    %v2605 = vand.u32 %v2604, 8388607
    %v2606 = vor.u32 %v2605, 8388608
    %v2607 = vsub.s32 0, %v2606
    %v2608 = vadd.s32 %v2603, 1
    %vm2609 = vcmp.gt.s32.totalorder %v2608, 0
    %v2610 = vsel %vm2609, %v2608, 0
    %v2611 = vshrl.u32 %v2610, 5
    %v2612 = vand.u32 %v2610, 31
    %v2613 = vsub.s32 32, %v2612
    %v2614 = vshrl.u32 683565275, %v2613
    %v2615 = vshll.u32 683565275, %v2612
    %v2616 = vshrl.u32 2475754826, %v2613
    %v2617 = vor.u32 %v2615, %v2616
    %v2618 = vshll.u32 2475754826, %v2612
    %v2619 = vshrl.u32 2131351028, %v2613
    %v2620 = vor.u32 %v2618, %v2619
    %v2621 = vshll.u32 2131351028, %v2612
    %v2622 = vshrl.u32 2102212464, %v2613
    %v2623 = vor.u32 %v2621, %v2622
    %v2624 = vshll.u32 2102212464, %v2612
    %v2625 = vshrl.u32 920167782, %v2613
    %v2626 = vor.u32 %v2624, %v2625
    %v2627 = vshll.u32 920167782, %v2612
    %v2628 = vshrl.u32 1326507024, %v2613
    %v2629 = vor.u32 %v2627, %v2628
    %vm2630 = vcmp.lt.s32.totalorder %v2611, 1
    %vm2631 = vcmp.lt.s32.totalorder %v2611, 2
    %vm2632 = vcmp.lt.s32.totalorder %v2611, 3
    %vm2633 = vcmp.lt.s32.totalorder %v2611, 4
    %v2634 = vsel %vm2630, %v2614, %v2617
    %v2635 = vsel %vm2633, %v2623, 2102212464
    %v2636 = vsel %vm2632, %v2620, %v2635
    %v2637 = vsel %vm2631, %v2634, %v2636
    %v2638 = vsel %vm2630, %v2617, %v2620
    %v2639 = vsel %vm2633, %v2626, 920167782
    %v2640 = vsel %vm2632, %v2623, %v2639
    %v2641 = vsel %vm2631, %v2638, %v2640
    %v2642 = vsel %vm2630, %v2620, %v2623
    %v2643 = vsel %vm2633, %v2629, 1326507024
    %v2644 = vsel %vm2632, %v2626, %v2643
    %v2645 = vsel %vm2631, %v2642, %v2644
    %v2646 = vshll.u32 %v2606, 8
    %v2647 = vand.u32 %v2646, 65535
    %v2648 = vshrl.u32 %v2646, 16
    %v2649 = vand.u32 %v2645, 65535
    %v2650 = vshrl.u32 %v2645, 16
    %v2651 = vmul.u32 %v2647, %v2649
    %v2652 = vmul.u32 %v2647, %v2650
    %v2653 = vmul.u32 %v2648, %v2649
    %v2654 = vmul.u32 %v2648, %v2650
    %v2655 = vshll.u32 %v2652, 16
    %v2656 = vshrl.u32 %v2652, 16
    %v2657 = vshll.u32 %v2653, 16
    %v2658 = vshrl.u32 %v2653, 16
    %vm2659 = vc.u32 %v2651, %v2655
    %v2660 = vsel %vm2659, 1, 0
    %v2661 = vadd.s32 %v2651, %v2655
    %v2662 = vadd.s32 %v2654, %v2660
    %vm2663 = vc.u32 %v2661, %v2657
    %v2664 = vsel %vm2663, 1, 0
    %v2665 = vadd.s32 %v2661, %v2657
    %v2666 = vadd.s32 %v2662, %v2664
    %v2667 = vadd.s32 %v2666, %v2656
    %v2668 = vadd.s32 %v2667, %v2658
    %v2669 = vand.u32 %v2646, 65535
    %v2670 = vshrl.u32 %v2646, 16
    %v2671 = vand.u32 %v2641, 65535
    %v2672 = vshrl.u32 %v2641, 16
    %v2673 = vmul.u32 %v2669, %v2671
    %v2674 = vmul.u32 %v2669, %v2672
    %v2675 = vmul.u32 %v2670, %v2671
    %v2676 = vmul.u32 %v2670, %v2672
    %v2677 = vshll.u32 %v2674, 16
    %v2678 = vshrl.u32 %v2674, 16
    %v2679 = vshll.u32 %v2675, 16
    %v2680 = vshrl.u32 %v2675, 16
    %vm2681 = vc.u32 %v2673, %v2677
    %v2682 = vsel %vm2681, 1, 0
    %v2683 = vadd.s32 %v2673, %v2677
    %v2684 = vadd.s32 %v2676, %v2682
    %vm2685 = vc.u32 %v2683, %v2679
    %v2686 = vsel %vm2685, 1, 0
    %v2687 = vadd.s32 %v2683, %v2679
    %v2688 = vadd.s32 %v2684, %v2686
    %v2689 = vadd.s32 %v2688, %v2678
    %v2690 = vadd.s32 %v2689, %v2680
    %v2691 = vmul.u32 %v2646, %v2637
    %v2692 = vadd.s32 %v2668, %v2687
    %vm2693 = vc.u32 %v2668, %v2687
    %v2694 = vadd.s32 %v2690, 1
    %v2695 = vsel %vm2693, %v2694, %v2690
    %v2696 = vadd.s32 %v2691, %v2695
    %v2697 = vadd.s32 %v2696, 536870912
    %v2698 = vshrl.u32 %v2697, 30
    %v2699 = vshll.u32 %v2698, 30
    %v2700 = vsub.s32 %v2696, %v2699
    %vm2701 = vcmp.lt.s32.totalorder %v2700, 0
    %v2702 = vsub.s32 0, %v2700
    %v2703 = vsel %vm2701, %v2702, %v2700
    %v2704 = vclz %v2703
    %v2705 = vsub.s32 %v2704, 2
    %vm2706 = vcmp.gt.s32.totalorder 0, %v2705
    %v2707 = vsel %vm2706, 0, %v2705
    %v2708 = vsub.s32 32, %v2707
    %v2709 = vshll.u32 %v2700, %v2707
    %v2710 = vshrl.u32 %v2692, %v2708
    %v2711 = vor.u32 %v2709, %v2710
    %v2712 = vsub.s32 4294967266, %v2707
    %v2713 = vadd.s32 %v2712, 127
    %v2714 = vshll.u32 %v2713, 23
    %v2715 = vor.u32 4788187, %v2714
    %v2716 = vand.u32 2147483647, %v2715
    %v2718 = vcvt.s32.f32 %v2711
    %v2719 = vmul.f32 %v2718, %v2716
    %v2720 = vxor.u32 %v2719, 2147483648
    %v2721 = vsel %vm2600, %v2720, %v2719
    %v2722 = vsub.s32 4, %v2698
    %v2723 = vsel %vm2600, %v2722, %v2698
    %v2724 = vsel %vm2599, %v2289, %v2721
    %v2725 = vsel %vm2599, 0, %v2723
    %v2726 = vmul.f32 %v2724, %v2724
    %v2727 = vmul.f32 %v2726, -0.001358992
    %v2728 = vadd.f32 %v2727, 0.041655596
    %v2729 = vmul.f32 %v2726, %v2728
    %v2730 = vadd.f32 %v2729, -0.4999988
    %v2731 = vmul.f32 %v2726, %v2730
    %v2732 = vadd.f32 1.0, %v2731
    %v2733 = vmul.f32 %v2724, %v2724
    %v2734 = vmul.f32 %v2733, -0.00019511016
    %v2735 = vadd.f32 %v2734, 0.008332121
    %v2736 = vmul.f32 %v2733, %v2735
    %v2737 = vadd.f32 %v2736, -0.16666654
    %v2738 = vmul.f32 %v2733, %v2737
    %v2739 = vadd.f32 %v2738, 1.0
    %v2740 = vmul.f32 %v2739, %v2724
    %vm2741 = vweird.f32 %v2289
    %v2742 = vand.u32 %v2725, 3
    %vm2743 = vcmp.lt.s32.totalorder %v2742, 2
    %vm2744 = vcmp.eq.s32.totalorder %v2742, 0
    %v2745 = vxor.u32 %v2740, 2147483648
    %v2746 = vsel %vm2744, %v2732, %v2745
    %vm2747 = vcmp.eq.s32.totalorder %v2742, 2
    %v2748 = vxor.u32 %v2732, 2147483648
    %v2749 = vsel %vm2747, %v2748, %v2740
    %v2750 = vsel %vm2743, %v2746, %v2749
    %v2751 = vsel %vm2741, nan, %v2750
    %v2752 = vmul.f32 %v2254, %v2443
    %v2753 = vmul.f32 %v2255, %v2597
    %v2754 = vmul.f32 %v2256, %v2751
    %v2755 = vand.u32 2147483647, %v2287
    %vm2756 = vcmp.le.f32.partialorder %v2755, 0.7853982
    %vm2757 = vcmp.lt.s32.totalorder %v2287, 0
    %v2758 = vand.u32 %v2287, 2139095040
    %v2759 = vshrl.u32 %v2758, 23
    %v2760 = vsub.s32 %v2759, 127
    %v2761 = vand.u32 2147483647, %v2287
    %v2762 = vand.u32 %v2761, 8388607
    %v2763 = vor.u32 %v2762, 8388608
    %v2764 = vsub.s32 0, %v2763
    %v2765 = vadd.s32 %v2760, 1
    %vm2766 = vcmp.gt.s32.totalorder %v2765, 0
    %v2767 = vsel %vm2766, %v2765, 0
    %v2768 = vshrl.u32 %v2767, 5
    %v2769 = vand.u32 %v2767, 31
    %v2770 = vsub.s32 32, %v2769
    %v2771 = vshrl.u32 683565275, %v2770
    %v2772 = vshll.u32 683565275, %v2769
    %v2773 = vshrl.u32 2475754826, %v2770
    %v2774 = vor.u32 %v2772, %v2773
    %v2775 = vshll.u32 2475754826, %v2769
    %v2776 = vshrl.u32 2131351028, %v2770
    %v2777 = vor.u32 %v2775, %v2776
    %v2778 = vshll.u32 2131351028, %v2769
    %v2779 = vshrl.u32 2102212464, %v2770
    %v2780 = vor.u32 %v2778, %v2779
    %v2781 = vshll.u32 2102212464, %v2769
    %v2782 = vshrl.u32 920167782, %v2770
    %v2783 = vor.u32 %v2781, %v2782
    %v2784 = vshll.u32 920167782, %v2769
    %v2785 = vshrl.u32 1326507024, %v2770
    %v2786 = vor.u32 %v2784, %v2785
    %vm2787 = vcmp.lt.s32.totalorder %v2768, 1
    %vm2788 = vcmp.lt.s32.totalorder %v2768, 2
    %vm2789 = vcmp.lt.s32.totalorder %v2768, 3
    %vm2790 = vcmp.lt.s32.totalorder %v2768, 4
    %v2791 = vsel %vm2787, %v2771, %v2774
    %v2792 = vsel %vm2790, %v2780, 2102212464
    %v2793 = vsel %vm2789, %v2777, %v2792
    %v2794 = vsel %vm2788, %v2791, %v2793
    %v2795 = vsel %vm2787, %v2774, %v2777
    %v2796 = vsel %vm2790, %v2783, 920167782
    %v2797 = vsel %vm2789, %v2780, %v2796
    %v2798 = vsel %vm2788, %v2795, %v2797
    %v2799 = vsel %vm2787, %v2777, %v2780
    %v2800 = vsel %vm2790, %v2786, 1326507024
    %v2801 = vsel %vm2789, %v2783, %v2800
    %v2802 = vsel %vm2788, %v2799, %v2801
    %v2803 = vshll.u32 %v2763, 8
    %v2804 = vand.u32 %v2803, 65535
    %v2805 = vshrl.u32 %v2803, 16
    %v2806 = vand.u32 %v2802, 65535
    %v2807 = vshrl.u32 %v2802, 16
    %v2808 = vmul.u32 %v2804, %v2806
    %v2809 = vmul.u32 %v2804, %v2807
    %v2810 = vmul.u32 %v2805, %v2806
    %v2811 = vmul.u32 %v2805, %v2807
    %v2812 = vshll.u32 %v2809, 16
    %v2813 = vshrl.u32 %v2809, 16
    %v2814 = vshll.u32 %v2810, 16
    %v2815 = vshrl.u32 %v2810, 16
    %vm2816 = vc.u32 %v2808, %v2812
    %v2817 = vsel %vm2816, 1, 0
    %v2818 = vadd.s32 %v2808, %v2812
    %v2819 = vadd.s32 %v2811, %v2817
    %vm2820 = vc.u32 %v2818, %v2814
    %v2821 = vsel %vm2820, 1, 0
    %v2822 = vadd.s32 %v2818, %v2814
    %v2823 = vadd.s32 %v2819, %v2821
    %v2824 = vadd.s32 %v2823, %v2813
    %v2825 = vadd.s32 %v2824, %v2815
    %v2826 = vand.u32 %v2803, 65535
    %v2827 = vshrl.u32 %v2803, 16
    %v2828 = vand.u32 %v2798, 65535
    %v2829 = vshrl.u32 %v2798, 16
    %v2830 = vmul.u32 %v2826, %v2828
    %v2831 = vmul.u32 %v2826, %v2829
    %v2832 = vmul.u32 %v2827, %v2828
    %v2833 = vmul.u32 %v2827, %v2829
    %v2834 = vshll.u32 %v2831, 16
    %v2835 = vshrl.u32 %v2831, 16
    %v2836 = vshll.u32 %v2832, 16
    %v2837 = vshrl.u32 %v2832, 16
    %vm2838 = vc.u32 %v2830, %v2834
    %v2839 = vsel %vm2838, 1, 0
    %v2840 = vadd.s32 %v2830, %v2834
    %v2841 = vadd.s32 %v2833, %v2839
    %vm2842 = vc.u32 %v2840, %v2836
    %v2843 = vsel %vm2842, 1, 0
    %v2844 = vadd.s32 %v2840, %v2836
    %v2845 = vadd.s32 %v2841, %v2843
    %v2846 = vadd.s32 %v2845, %v2835
    %v2847 = vadd.s32 %v2846, %v2837
    %v2848 = vmul.u32 %v2803, %v2794
    %v2849 = vadd.s32 %v2825, %v2844
    %vm2850 = vc.u32 %v2825, %v2844
    %v2851 = vadd.s32 %v2847, 1
    %v2852 = vsel %vm2850, %v2851, %v2847
    %v2853 = vadd.s32 %v2848, %v2852
    %v2854 = vadd.s32 %v2853, 536870912
    %v2855 = vshrl.u32 %v2854, 30
    %v2856 = vshll.u32 %v2855, 30
    %v2857 = vsub.s32 %v2853, %v2856
    %vm2858 = vcmp.lt.s32.totalorder %v2857, 0
    %v2859 = vsub.s32 0, %v2857
    %v2860 = vsel %vm2858, %v2859, %v2857
    %v2861 = vclz %v2860
    %v2862 = vsub.s32 %v2861, 2
    %vm2863 = vcmp.gt.s32.totalorder 0, %v2862
    %v2864 = vsel %vm2863, 0, %v2862
    %v2865 = vsub.s32 32, %v2864
    %v2866 = vshll.u32 %v2857, %v2864
    %v2867 = vshrl.u32 %v2849, %v2865
    %v2868 = vor.u32 %v2866, %v2867
    %v2869 = vsub.s32 4294967266, %v2864
    %v2870 = vadd.s32 %v2869, 127
    %v2871 = vshll.u32 %v2870, 23
    %v2872 = vor.u32 4788187, %v2871
    %v2873 = vand.u32 2147483647, %v2872
    %v2875 = vcvt.s32.f32 %v2868
    %v2876 = vmul.f32 %v2875, %v2873
    %v2877 = vxor.u32 %v2876, 2147483648
    %v2878 = vsel %vm2757, %v2877, %v2876
    %v2879 = vsub.s32 4, %v2855
    %v2880 = vsel %vm2757, %v2879, %v2855
    %v2881 = vsel %vm2756, %v2287, %v2878
    %v2882 = vsel %vm2756, 0, %v2880
    %v2883 = vmul.f32 %v2881, %v2881
    %v2884 = vmul.f32 %v2883, -0.001358992
    %v2885 = vadd.f32 %v2884, 0.041655596
    %v2886 = vmul.f32 %v2883, %v2885
    %v2887 = vadd.f32 %v2886, -0.4999988
    %v2888 = vmul.f32 %v2883, %v2887
    %v2889 = vadd.f32 1.0, %v2888
    %v2890 = vmul.f32 %v2881, %v2881
    %v2891 = vmul.f32 %v2890, -0.00019511016
    %v2892 = vadd.f32 %v2891, 0.008332121
    %v2893 = vmul.f32 %v2890, %v2892
    %v2894 = vadd.f32 %v2893, -0.16666654
    %v2895 = vmul.f32 %v2890, %v2894
    %v2896 = vadd.f32 %v2895, 1.0
    %v2897 = vmul.f32 %v2896, %v2881
    %vm2898 = vweird.f32 %v2287
    %v2899 = vadd.s32 %v2882, 3
    %v2900 = vand.u32 %v2899, 3
    %vm2901 = vcmp.lt.s32.totalorder %v2900, 2
    %vm2902 = vcmp.eq.s32.totalorder %v2900, 0
    %v2903 = vxor.u32 %v2897, 2147483648
    %v2904 = vsel %vm2902, %v2889, %v2903
    %vm2905 = vcmp.eq.s32.totalorder %v2900, 2
    %v2906 = vxor.u32 %v2889, 2147483648
    %v2907 = vsel %vm2905, %v2906, %v2897
    %v2908 = vsel %vm2901, %v2904, %v2907
    %v2909 = vsel %vm2898, nan, %v2908
    %v2910 = vand.u32 2147483647, %v2288
    %vm2911 = vcmp.le.f32.partialorder %v2910, 0.7853982
    %vm2912 = vcmp.lt.s32.totalorder %v2288, 0
    %v2913 = vand.u32 %v2288, 2139095040
    %v2914 = vshrl.u32 %v2913, 23
    %v2915 = vsub.s32 %v2914, 127
    %v2916 = vand.u32 2147483647, %v2288
    %v2917 = vand.u32 %v2916, 8388607
    %v2918 = vor.u32 %v2917, 8388608
    %v2919 = vsub.s32 0, %v2918
    %v2920 = vadd.s32 %v2915, 1
    %vm2921 = vcmp.gt.s32.totalorder %v2920, 0
    %v2922 = vsel %vm2921, %v2920, 0
    %v2923 = vshrl.u32 %v2922, 5
    %v2924 = vand.u32 %v2922, 31
    %v2925 = vsub.s32 32, %v2924
    %v2926 = vshrl.u32 683565275, %v2925
    %v2927 = vshll.u32 683565275, %v2924
    %v2928 = vshrl.u32 2475754826, %v2925
    %v2929 = vor.u32 %v2927, %v2928
    %v2930 = vshll.u32 2475754826, %v2924
    %v2931 = vshrl.u32 2131351028, %v2925
    %v2932 = vor.u32 %v2930, %v2931
    %v2933 = vshll.u32 2131351028, %v2924
    %v2934 = vshrl.u32 2102212464, %v2925
    %v2935 = vor.u32 %v2933, %v2934
    %v2936 = vshll.u32 2102212464, %v2924
    %v2937 = vshrl.u32 920167782, %v2925
    %v2938 = vor.u32 %v2936, %v2937
    %v2939 = vshll.u32 920167782, %v2924
    %v2940 = vshrl.u32 1326507024, %v2925
    %v2941 = vor.u32 %v2939, %v2940
    %vm2942 = vcmp.lt.s32.totalorder %v2923, 1
    %vm2943 = vcmp.lt.s32.totalorder %v2923, 2
    %vm2944 = vcmp.lt.s32.totalorder %v2923, 3
    %vm2945 = vcmp.lt.s32.totalorder %v2923, 4
    %v2946 = vsel %vm2942, %v2926, %v2929
    %v2947 = vsel %vm2945, %v2935, 2102212464
    %v2948 = vsel %vm2944, %v2932, %v2947
    %v2949 = vsel %vm2943, %v2946, %v2948
    %v2950 = vsel %vm2942, %v2929, %v2932
    %v2951 = vsel %vm2945, %v2938, 920167782
    %v2952 = vsel %vm2944, %v2935, %v2951
    %v2953 = vsel %vm2943, %v2950, %v2952
    %v2954 = vsel %vm2942, %v2932, %v2935
    %v2955 = vsel %vm2945, %v2941, 1326507024
    %v2956 = vsel %vm2944, %v2938, %v2955
    %v2957 = vsel %vm2943, %v2954, %v2956
    %v2958 = vshll.u32 %v2918, 8
    %v2959 = vand.u32 %v2958, 65535
    %v2960 = vshrl.u32 %v2958, 16
    %v2961 = vand.u32 %v2957, 65535
    %v2962 = vshrl.u32 %v2957, 16
    %v2963 = vmul.u32 %v2959, %v2961
    %v2964 = vmul.u32 %v2959, %v2962
    %v2965 = vmul.u32 %v2960, %v2961
    %v2966 = vmul.u32 %v2960, %v2962
    %v2967 = vshll.u32 %v2964, 16
    %v2968 = vshrl.u32 %v2964, 16
    %v2969 = vshll.u32 %v2965, 16
    %v2970 = vshrl.u32 %v2965, 16
    %vm2971 = vc.u32 %v2963, %v2967
    %v2972 = vsel %vm2971, 1, 0
    %v2973 = vadd.s32 %v2963, %v2967
    %v2974 = vadd.s32 %v2966, %v2972
    %vm2975 = vc.u32 %v2973, %v2969
    %v2976 = vsel %vm2975, 1, 0
    %v2977 = vadd.s32 %v2973, %v2969
    %v2978 = vadd.s32 %v2974, %v2976
    %v2979 = vadd.s32 %v2978, %v2968
    %v2980 = vadd.s32 %v2979, %v2970
    %v2981 = vand.u32 %v2958, 65535
    %v2982 = vshrl.u32 %v2958, 16
    %v2983 = vand.u32 %v2953, 65535
    %v2984 = vshrl.u32 %v2953, 16
    %v2985 = vmul.u32 %v2981, %v2983
    %v2986 = vmul.u32 %v2981, %v2984
    %v2987 = vmul.u32 %v2982, %v2983
    %v2988 = vmul.u32 %v2982, %v2984
    %v2989 = vshll.u32 %v2986, 16
    %v2990 = vshrl.u32 %v2986, 16
    %v2991 = vshll.u32 %v2987, 16
    %v2992 = vshrl.u32 %v2987, 16
    %vm2993 = vc.u32 %v2985, %v2989
    %v2994 = vsel %vm2993, 1, 0
    %v2995 = vadd.s32 %v2985, %v2989
    %v2996 = vadd.s32 %v2988, %v2994
    %vm2997 = vc.u32 %v2995, %v2991
    %v2998 = vsel %vm2997, 1, 0
    %v2999 = vadd.s32 %v2995, %v2991
    %v3000 = vadd.s32 %v2996, %v2998
    %v3001 = vadd.s32 %v3000, %v2990
    %v3002 = vadd.s32 %v3001, %v2992
    %v3003 = vmul.u32 %v2958, %v2949
    %v3004 = vadd.s32 %v2980, %v2999
    %vm3005 = vc.u32 %v2980, %v2999
    %v3006 = vadd.s32 %v3002, 1
    %v3007 = vsel %vm3005, %v3006, %v3002
    %v3008 = vadd.s32 %v3003, %v3007
    %v3009 = vadd.s32 %v3008, 536870912
    %v3010 = vshrl.u32 %v3009, 30
    %v3011 = vshll.u32 %v3010, 30
    %v3012 = vsub.s32 %v3008, %v3011
    %vm3013 = vcmp.lt.s32.totalorder %v3012, 0
    %v3014 = vsub.s32 0, %v3012
    %v3015 = vsel %vm3013, %v3014, %v3012
    %v3016 = vclz %v3015
    %v3017 = vsub.s32 %v3016, 2
    %vm3018 = vcmp.gt.s32.totalorder 0, %v3017
    %v3019 = vsel %vm3018, 0, %v3017
    %v3020 = vsub.s32 32, %v3019
    %v3021 = vshll.u32 %v3012, %v3019
    %v3022 = vshrl.u32 %v3004, %v3020
    %v3023 = vor.u32 %v3021, %v3022
    %v3024 = vsub.s32 4294967266, %v3019
    %v3025 = vadd.s32 %v3024, 127
    %v3026 = vshll.u32 %v3025, 23
    %v3027 = vor.u32 4788187, %v3026
    %v3028 = vand.u32 2147483647, %v3027
    %v3030 = vcvt.s32.f32 %v3023
    %v3031 = vmul.f32 %v3030, %v3028
    %v3032 = vxor.u32 %v3031, 2147483648
    %v3033 = vsel %vm2912, %v3032, %v3031
    %v3034 = vsub.s32 4, %v3010
    %v3035 = vsel %vm2912, %v3034, %v3010
    %v3036 = vsel %vm2911, %v2288, %v3033
    %v3037 = vsel %vm2911, 0, %v3035
    %v3038 = vmul.f32 %v3036, %v3036
    %v3039 = vmul.f32 %v3038, -0.001358992
    %v3040 = vadd.f32 %v3039, 0.041655596
    %v3041 = vmul.f32 %v3038, %v3040
    %v3042 = vadd.f32 %v3041, -0.4999988
    %v3043 = vmul.f32 %v3038, %v3042
    %v3044 = vadd.f32 1.0, %v3043
    %v3045 = vmul.f32 %v3036, %v3036
    %v3046 = vmul.f32 %v3045, -0.00019511016
    %v3047 = vadd.f32 %v3046, 0.008332121
    %v3048 = vmul.f32 %v3045, %v3047
    %v3049 = vadd.f32 %v3048, -0.16666654
    %v3050 = vmul.f32 %v3045, %v3049
    %v3051 = vadd.f32 %v3050, 1.0
    %v3052 = vmul.f32 %v3051, %v3036
    %vm3053 = vweird.f32 %v2288
    %v3054 = vadd.s32 %v3037, 3
    %v3055 = vand.u32 %v3054, 3
    %vm3056 = vcmp.lt.s32.totalorder %v3055, 2
    %vm3057 = vcmp.eq.s32.totalorder %v3055, 0
    %v3058 = vxor.u32 %v3052, 2147483648
    %v3059 = vsel %vm3057, %v3044, %v3058
    %vm3060 = vcmp.eq.s32.totalorder %v3055, 2
    %v3061 = vxor.u32 %v3044, 2147483648
    %v3062 = vsel %vm3060, %v3061, %v3052
    %v3063 = vsel %vm3056, %v3059, %v3062
    %v3064 = vsel %vm3053, nan, %v3063
    %v3065 = vand.u32 2147483647, %v2289
    %vm3066 = vcmp.le.f32.partialorder %v3065, 0.7853982
    %vm3067 = vcmp.lt.s32.totalorder %v2289, 0
    %v3068 = vand.u32 %v2289, 2139095040
    %v3069 = vshrl.u32 %v3068, 23
    %v3070 = vsub.s32 %v3069, 127
    %v3071 = vand.u32 2147483647, %v2289
    %v3072 = vand.u32 %v3071, 8388607
    %v3073 = vor.u32 %v3072, 8388608
    %v3074 = vsub.s32 0, %v3073
    %v3075 = vadd.s32 %v3070, 1
    %vm3076 = vcmp.gt.s32.totalorder %v3075, 0
    %v3077 = vsel %vm3076, %v3075, 0
    %v3078 = vshrl.u32 %v3077, 5
    %v3079 = vand.u32 %v3077, 31
    %v3080 = vsub.s32 32, %v3079
    %v3081 = vshrl.u32 683565275, %v3080
    %v3082 = vshll.u32 683565275, %v3079
    %v3083 = vshrl.u32 2475754826, %v3080
    %v3084 = vor.u32 %v3082, %v3083
    %v3085 = vshll.u32 2475754826, %v3079
    %v3086 = vshrl.u32 2131351028, %v3080
    %v3087 = vor.u32 %v3085, %v3086
    %v3088 = vshll.u32 2131351028, %v3079
    %v3089 = vshrl.u32 2102212464, %v3080
    %v3090 = vor.u32 %v3088, %v3089
    %v3091 = vshll.u32 2102212464, %v3079
    %v3092 = vshrl.u32 920167782, %v3080
    %v3093 = vor.u32 %v3091, %v3092
    %v3094 = vshll.u32 920167782, %v3079
    %v3095 = vshrl.u32 1326507024, %v3080
    %v3096 = vor.u32 %v3094, %v3095
    %vm3097 = vcmp.lt.s32.totalorder %v3078, 1
    %vm3098 = vcmp.lt.s32.totalorder %v3078, 2
    %vm3099 = vcmp.lt.s32.totalorder %v3078, 3
    %vm3100 = vcmp.lt.s32.totalorder %v3078, 4
    %v3101 = vsel %vm3097, %v3081, %v3084
    %v3102 = vsel %vm3100, %v3090, 2102212464
    %v3103 = vsel %vm3099, %v3087, %v3102
    %v3104 = vsel %vm3098, %v3101, %v3103
    %v3105 = vsel %vm3097, %v3084, %v3087
    %v3106 = vsel %vm3100, %v3093, 920167782
    %v3107 = vsel %vm3099, %v3090, %v3106
    %v3108 = vsel %vm3098, %v3105, %v3107
    %v3109 = vsel %vm3097, %v3087, %v3090
    %v3110 = vsel %vm3100, %v3096, 1326507024
    %v3111 = vsel %vm3099, %v3093, %v3110
    %v3112 = vsel %vm3098, %v3109, %v3111
    %v3113 = vshll.u32 %v3073, 8
    %v3114 = vand.u32 %v3113, 65535
    %v3115 = vshrl.u32 %v3113, 16
    %v3116 = vand.u32 %v3112, 65535
    %v3117 = vshrl.u32 %v3112, 16
    %v3118 = vmul.u32 %v3114, %v3116
    %v3119 = vmul.u32 %v3114, %v3117
    %v3120 = vmul.u32 %v3115, %v3116
    %v3121 = vmul.u32 %v3115, %v3117
    %v3122 = vshll.u32 %v3119, 16
    %v3123 = vshrl.u32 %v3119, 16
    %v3124 = vshll.u32 %v3120, 16
    %v3125 = vshrl.u32 %v3120, 16
    %vm3126 = vc.u32 %v3118, %v3122
    %v3127 = vsel %vm3126, 1, 0
    %v3128 = vadd.s32 %v3118, %v3122
    %v3129 = vadd.s32 %v3121, %v3127
    %vm3130 = vc.u32 %v3128, %v3124
    %v3131 = vsel %vm3130, 1, 0
    %v3132 = vadd.s32 %v3128, %v3124
    %v3133 = vadd.s32 %v3129, %v3131
    %v3134 = vadd.s32 %v3133, %v3123
    %v3135 = vadd.s32 %v3134, %v3125
    %v3136 = vand.u32 %v3113, 65535
    %v3137 = vshrl.u32 %v3113, 16
    %v3138 = vand.u32 %v3108, 65535
    %v3139 = vshrl.u32 %v3108, 16
    %v3140 = vmul.u32 %v3136, %v3138
    %v3141 = vmul.u32 %v3136, %v3139
    %v3142 = vmul.u32 %v3137, %v3138
    %v3143 = vmul.u32 %v3137, %v3139
    %v3144 = vshll.u32 %v3141, 16
    %v3145 = vshrl.u32 %v3141, 16
    %v3146 = vshll.u32 %v3142, 16
    %v3147 = vshrl.u32 %v3142, 16
    %vm3148 = vc.u32 %v3140, %v3144
    %v3149 = vsel %vm3148, 1, 0
    %v3150 = vadd.s32 %v3140, %v3144
    %v3151 = vadd.s32 %v3143, %v3149
    %vm3152 = vc.u32 %v3150, %v3146
    %v3153 = vsel %vm3152, 1, 0
    %v3154 = vadd.s32 %v3150, %v3146
    %v3155 = vadd.s32 %v3151, %v3153
    %v3156 = vadd.s32 %v3155, %v3145
    %v3157 = vadd.s32 %v3156, %v3147
    %v3158 = vmul.u32 %v3113, %v3104
    %v3159 = vadd.s32 %v3135, %v3154
    %vm3160 = vc.u32 %v3135, %v3154
    %v3161 = vadd.s32 %v3157, 1
    %v3162 = vsel %vm3160, %v3161, %v3157
    %v3163 = vadd.s32 %v3158, %v3162
    %v3164 = vadd.s32 %v3163, 536870912
    %v3165 = vshrl.u32 %v3164, 30
    %v3166 = vshll.u32 %v3165, 30
    %v3167 = vsub.s32 %v3163, %v3166
    %vm3168 = vcmp.lt.s32.totalorder %v3167, 0
    %v3169 = vsub.s32 0, %v3167
    %v3170 = vsel %vm3168, %v3169, %v3167
    %v3171 = vclz %v3170
    %v3172 = vsub.s32 %v3171, 2
    %vm3173 = vcmp.gt.s32.totalorder 0, %v3172
    %v3174 = vsel %vm3173, 0, %v3172
    %v3175 = vsub.s32 32, %v3174
    %v3176 = vshll.u32 %v3167, %v3174
    %v3177 = vshrl.u32 %v3159, %v3175
    %v3178 = vor.u32 %v3176, %v3177
    %v3179 = vsub.s32 4294967266, %v3174
    %v3180 = vadd.s32 %v3179, 127
    %v3181 = vshll.u32 %v3180, 23
    %v3182 = vor.u32 4788187, %v3181
    %v3183 = vand.u32 2147483647, %v3182
    %v3185 = vcvt.s32.f32 %v3178
    %v3186 = vmul.f32 %v3185, %v3183
    %v3187 = vxor.u32 %v3186, 2147483648
    %v3188 = vsel %vm3067, %v3187, %v3186
    %v3189 = vsub.s32 4, %v3165
    %v3190 = vsel %vm3067, %v3189, %v3165
    %v3191 = vsel %vm3066, %v2289, %v3188
    %v3192 = vsel %vm3066, 0, %v3190
    %v3193 = vmul.f32 %v3191, %v3191
    %v3194 = vmul.f32 %v3193, -0.001358992
    %v3195 = vadd.f32 %v3194, 0.041655596
    %v3196 = vmul.f32 %v3193, %v3195
    %v3197 = vadd.f32 %v3196, -0.4999988
    %v3198 = vmul.f32 %v3193, %v3197
    %v3199 = vadd.f32 1.0, %v3198
    %v3200 = vmul.f32 %v3191, %v3191
    %v3201 = vmul.f32 %v3200, -0.00019511016
    %v3202 = vadd.f32 %v3201, 0.008332121
    %v3203 = vmul.f32 %v3200, %v3202
    %v3204 = vadd.f32 %v3203, -0.16666654
    %v3205 = vmul.f32 %v3200, %v3204
    %v3206 = vadd.f32 %v3205, 1.0
    %v3207 = vmul.f32 %v3206, %v3191
    %vm3208 = vweird.f32 %v2289
    %v3209 = vadd.s32 %v3192, 3
    %v3210 = vand.u32 %v3209, 3
    %vm3211 = vcmp.lt.s32.totalorder %v3210, 2
    %vm3212 = vcmp.eq.s32.totalorder %v3210, 0
    %v3213 = vxor.u32 %v3207, 2147483648
    %v3214 = vsel %vm3212, %v3199, %v3213
    %vm3215 = vcmp.eq.s32.totalorder %v3210, 2
    %v3216 = vxor.u32 %v3199, 2147483648
    %v3217 = vsel %vm3215, %v3216, %v3207
    %v3218 = vsel %vm3211, %v3214, %v3217
    %v3219 = vsel %vm3208, nan, %v3218
    %v3220 = vmul.f32 %v2257, %v2909
    %v3221 = vmul.f32 %v2258, %v3064
    %v3222 = vmul.f32 %v2259, %v3219
    %v3223 = vadd.f32 %v2752, %v3220
    %v3224 = vadd.f32 %v2753, %v3221
    %v3225 = vadd.f32 %v2754, %v3222
    %v3226 = vmul.f32 %v3223, %v111
    %v3227 = vmul.f32 %v3224, %v112
    %v3228 = vmul.f32 %v3225, %v113
    %3229 = vmatpush.msra.mxu0 0.0
    %3230 = vmatpush.msra.mxu0 0.0
    %3231 = vmatpush.msra.mxu0 0.0
    %3232 = vmatpush.msra.mxu0 0.0
    %3233 = vmatpush.msra.mxu0 0.0
    %3234 = vmatpush.msra.mxu0 0.0
    %3235 = vmatpush.msra.mxu0 0.0
    %3236 = vmatpush.msra.mxu0 0.0
    %3237 = vmatpush.msra.mxu0 0.0
    %3238 = vmatpush.msra.mxu0 0.0
    %3239 = vmatpush.msra.mxu0 0.0
    %3240 = vmatpush.msra.mxu0 0.0
    %3241 = vmatpush.msra.mxu0 0.0
    %3242 = vmatpush.msra.mxu0 %v3228
    %3243 = vmatpush.msra.mxu0 %v3227
    %3244 = vmatpush.msra.mxu0 %v3226
    %3245 = vmatmul.f32.gmra.mxu0 %v1133
    %v3246 = vpop.f32.mrf.mxu0
    %v3247 = vadd.f32 %v1114, %v3246
    %3248 = vmatmul.f32.gmra.mxu0 %v1136
    %v3249 = vpop.f32.mrf.mxu0
    %v3250 = vadd.f32 %v1119, %v3249
    %3251 = vmatmul.f32.gmra.mxu0 %v1139
    %v3252 = vpop.f32.mrf.mxu0
    %v3253 = vadd.f32 %v1124, %v3252
    %3254 = vmatmul.f32.gmra.mxu0 %v1142
    %v3255 = vpop.f32.mrf.mxu0
    %v3256 = vadd.f32 %v1129, %v3255
    %3257 = vdwg.mxu0
    %v3258 = vmax.f32 %v3247, 0.0
    %v3259 = vmax.f32 %v3250, 0.0
    %v3260 = vmax.f32 %v3253, 0.0
    %v3261 = vmax.f32 %v3256, 0.0
    %3262 = vmatpush.msra.mxu0 0.0
    %3263 = vmatpush.msra.mxu0 0.0
    %3264 = vmatpush.msra.mxu0 0.0
    %3265 = vmatpush.msra.mxu0 0.0
    %3266 = vmatpush.msra.mxu0 0.0
    %3267 = vmatpush.msra.mxu0 0.0
    %3268 = vmatpush.msra.mxu0 0.0
    %3269 = vmatpush.msra.mxu0 0.0
    %3270 = vmatpush.msra.mxu0 0.0
    %3271 = vmatpush.msra.mxu0 0.0
    %3272 = vmatpush.msra.mxu0 0.0
    %3273 = vmatpush.msra.mxu0 0.0
    %3274 = vmatpush.msra.mxu0 %v3261
    %3275 = vmatpush.msra.mxu0 %v3260
    %3276 = vmatpush.msra.mxu0 %v3259
    %3277 = vmatpush.msra.mxu0 %v3258
    %3278 = vmatmul.f32.gmra.mxu0 %v1186
    %v3279 = vpop.f32.mrf.mxu0
    %v3280 = vadd.f32 %v1182, %v3279
    %3281 = vdwg.mxu0
    %v3282 = vperm.slane %v2272, 2
    %v3283 = vmul.f32 %v3280, %v3282
    %v3284 = vadd.f32 %v2247, %v3283
    %v3285 = vld [vmem:[#allocation2 + $0x48] sm:$0xf]
    %v3286 = vld [vmem:[#allocation2 + $0x4c] sm:$0xf]
    %v3287 = vld [vmem:[#allocation2 + $0x50] sm:$0xf]
    %v3288 = vld [vmem:[#allocation2 + $0x54] sm:$0xf]
    %v3289 = vld [vmem:[#allocation2 + $0x58] sm:$0xf]
    %v3290 = vld [vmem:[#allocation2 + $0x5c] sm:$0xf]
    %v3291 = vunpack.c.l.bf16 %v3285
    %v3292 = vunpack.c.l.bf16 %v3286
    %v3293 = vunpack.c.l.bf16 %v3287
    %v3294 = vunpack.c.l.bf16 %v3288
    %v3295 = vunpack.c.l.bf16 %v3289
    %v3296 = vunpack.c.l.bf16 %v3290
    %v3297 = vld [vmem:[#allocation5 + $0x48] sm:$0xf]
    %v3298 = vld [vmem:[#allocation5 + $0x4c] sm:$0xf]
    %v3299 = vld [vmem:[#allocation5 + $0x50] sm:$0xf]
    %v3300 = vld [vmem:[#allocation5 + $0x54] sm:$0xf]
    %v3301 = vld [vmem:[#allocation5 + $0x58] sm:$0xf]
    %v3302 = vld [vmem:[#allocation5 + $0x5c] sm:$0xf]
    %v3303 = vunpack.c.l.bf16 %v3297
    %v3304 = vunpack.c.l.bf16 %v3298
    %v3305 = vunpack.c.l.bf16 %v3299
    %v3306 = vunpack.c.l.bf16 %v3300
    %v3307 = vunpack.c.l.bf16 %v3301
    %v3308 = vunpack.c.l.bf16 %v3302
    %v3309 = vld [vmem:[%s3 + $0x18] sm:$0xff]
    %v3310 = vperm.slane %v3309, 0
    %v3311 = vmul.f32 %v3303, %v3310
    %v3312 = vmul.f32 %v3304, %v3310
    %v3313 = vmul.f32 %v3305, %v3310
    %v3314 = vperm.slane %v3309, 1
    %v3315 = vmul.f32 %v3306, %v3314
    %v3316 = vmul.f32 %v3307, %v3314
    %v3317 = vmul.f32 %v3308, %v3314
    %v3318 = vadd.f32 %v3311, %v3315
    %v3319 = vadd.f32 %v3312, %v3316
    %v3320 = vadd.f32 %v3313, %v3317
    %v3321 = vadd.f32 %v3318, %v121
    %v3322 = vadd.f32 %v3319, %v121
    %v3323 = vadd.f32 %v3320, %v121
    %v3324 = vmul.f32 %v3321, 3.1415927
    %v3325 = vmul.f32 %v3322, 3.1415927
    %v3326 = vmul.f32 %v3323, 3.1415927
    %v3327 = vand.u32 2147483647, %v3324
    %vm3328 = vcmp.le.f32.partialorder %v3327, 0.7853982
    %vm3329 = vcmp.lt.s32.totalorder %v3324, 0
    %v3330 = vand.u32 %v3324, 2139095040
    %v3331 = vshrl.u32 %v3330, 23
    %v3332 = vsub.s32 %v3331, 127
    %v3333 = vand.u32 2147483647, %v3324
    %v3334 = vand.u32 %v3333, 8388607
    %v3335 = vor.u32 %v3334, 8388608
    %v3336 = vsub.s32 0, %v3335
    %v3337 = vadd.s32 %v3332, 1
    %vm3338 = vcmp.gt.s32.totalorder %v3337, 0
    %v3339 = vsel %vm3338, %v3337, 0
    %v3340 = vshrl.u32 %v3339, 5
    %v3341 = vand.u32 %v3339, 31
    %v3342 = vsub.s32 32, %v3341
    %v3343 = vshrl.u32 683565275, %v3342
    %v3344 = vshll.u32 683565275, %v3341
    %v3345 = vshrl.u32 2475754826, %v3342
    %v3346 = vor.u32 %v3344, %v3345
    %v3347 = vshll.u32 2475754826, %v3341
    %v3348 = vshrl.u32 2131351028, %v3342
    %v3349 = vor.u32 %v3347, %v3348
    %v3350 = vshll.u32 2131351028, %v3341
    %v3351 = vshrl.u32 2102212464, %v3342
    %v3352 = vor.u32 %v3350, %v3351
    %v3353 = vshll.u32 2102212464, %v3341
    %v3354 = vshrl.u32 920167782, %v3342
    %v3355 = vor.u32 %v3353, %v3354
    %v3356 = vshll.u32 920167782, %v3341
    %v3357 = vshrl.u32 1326507024, %v3342
    %v3358 = vor.u32 %v3356, %v3357
    %vm3359 = vcmp.lt.s32.totalorder %v3340, 1
    %vm3360 = vcmp.lt.s32.totalorder %v3340, 2
    %vm3361 = vcmp.lt.s32.totalorder %v3340, 3
    %vm3362 = vcmp.lt.s32.totalorder %v3340, 4
    %v3363 = vsel %vm3359, %v3343, %v3346
    %v3364 = vsel %vm3362, %v3352, 2102212464
    %v3365 = vsel %vm3361, %v3349, %v3364
    %v3366 = vsel %vm3360, %v3363, %v3365
    %v3367 = vsel %vm3359, %v3346, %v3349
    %v3368 = vsel %vm3362, %v3355, 920167782
    %v3369 = vsel %vm3361, %v3352, %v3368
    %v3370 = vsel %vm3360, %v3367, %v3369
    %v3371 = vsel %vm3359, %v3349, %v3352
    %v3372 = vsel %vm3362, %v3358, 1326507024
    %v3373 = vsel %vm3361, %v3355, %v3372
    %v3374 = vsel %vm3360, %v3371, %v3373
    %v3375 = vshll.u32 %v3335, 8
    %v3376 = vand.u32 %v3375, 65535
    %v3377 = vshrl.u32 %v3375, 16
    %v3378 = vand.u32 %v3374, 65535
    %v3379 = vshrl.u32 %v3374, 16
    %v3380 = vmul.u32 %v3376, %v3378
    %v3381 = vmul.u32 %v3376, %v3379
    %v3382 = vmul.u32 %v3377, %v3378
    %v3383 = vmul.u32 %v3377, %v3379
    %v3384 = vshll.u32 %v3381, 16
    %v3385 = vshrl.u32 %v3381, 16
    %v3386 = vshll.u32 %v3382, 16
    %v3387 = vshrl.u32 %v3382, 16
    %vm3388 = vc.u32 %v3380, %v3384
    %v3389 = vsel %vm3388, 1, 0
    %v3390 = vadd.s32 %v3380, %v3384
    %v3391 = vadd.s32 %v3383, %v3389
    %vm3392 = vc.u32 %v3390, %v3386
    %v3393 = vsel %vm3392, 1, 0
    %v3394 = vadd.s32 %v3390, %v3386
    %v3395 = vadd.s32 %v3391, %v3393
    %v3396 = vadd.s32 %v3395, %v3385
    %v3397 = vadd.s32 %v3396, %v3387
    %v3398 = vand.u32 %v3375, 65535
    %v3399 = vshrl.u32 %v3375, 16
    %v3400 = vand.u32 %v3370, 65535
    %v3401 = vshrl.u32 %v3370, 16
    %v3402 = vmul.u32 %v3398, %v3400
    %v3403 = vmul.u32 %v3398, %v3401
    %v3404 = vmul.u32 %v3399, %v3400
    %v3405 = vmul.u32 %v3399, %v3401
    %v3406 = vshll.u32 %v3403, 16
    %v3407 = vshrl.u32 %v3403, 16
    %v3408 = vshll.u32 %v3404, 16
    %v3409 = vshrl.u32 %v3404, 16
    %vm3410 = vc.u32 %v3402, %v3406
    %v3411 = vsel %vm3410, 1, 0
    %v3412 = vadd.s32 %v3402, %v3406
    %v3413 = vadd.s32 %v3405, %v3411
    %vm3414 = vc.u32 %v3412, %v3408
    %v3415 = vsel %vm3414, 1, 0
    %v3416 = vadd.s32 %v3412, %v3408
    %v3417 = vadd.s32 %v3413, %v3415
    %v3418 = vadd.s32 %v3417, %v3407
    %v3419 = vadd.s32 %v3418, %v3409
    %v3420 = vmul.u32 %v3375, %v3366
    %v3421 = vadd.s32 %v3397, %v3416
    %vm3422 = vc.u32 %v3397, %v3416
    %v3423 = vadd.s32 %v3419, 1
    %v3424 = vsel %vm3422, %v3423, %v3419
    %v3425 = vadd.s32 %v3420, %v3424
    %v3426 = vadd.s32 %v3425, 536870912
    %v3427 = vshrl.u32 %v3426, 30
    %v3428 = vshll.u32 %v3427, 30
    %v3429 = vsub.s32 %v3425, %v3428
    %vm3430 = vcmp.lt.s32.totalorder %v3429, 0
    %v3431 = vsub.s32 0, %v3429
    %v3432 = vsel %vm3430, %v3431, %v3429
    %v3433 = vclz %v3432
    %v3434 = vsub.s32 %v3433, 2
    %vm3435 = vcmp.gt.s32.totalorder 0, %v3434
    %v3436 = vsel %vm3435, 0, %v3434
    %v3437 = vsub.s32 32, %v3436
    %v3438 = vshll.u32 %v3429, %v3436
    %v3439 = vshrl.u32 %v3421, %v3437
    %v3440 = vor.u32 %v3438, %v3439
    %v3441 = vsub.s32 4294967266, %v3436
    %v3442 = vadd.s32 %v3441, 127
    %v3443 = vshll.u32 %v3442, 23
    %v3444 = vor.u32 4788187, %v3443
    %v3445 = vand.u32 2147483647, %v3444
    %v3447 = vcvt.s32.f32 %v3440
    %v3448 = vmul.f32 %v3447, %v3445
    %v3449 = vxor.u32 %v3448, 2147483648
    %v3450 = vsel %vm3329, %v3449, %v3448
    %v3451 = vsub.s32 4, %v3427
    %v3452 = vsel %vm3329, %v3451, %v3427
    %v3453 = vsel %vm3328, %v3324, %v3450
    %v3454 = vsel %vm3328, 0, %v3452
    %v3455 = vmul.f32 %v3453, %v3453
    %v3456 = vmul.f32 %v3455, -0.001358992
    %v3457 = vadd.f32 %v3456, 0.041655596
    %v3458 = vmul.f32 %v3455, %v3457
    %v3459 = vadd.f32 %v3458, -0.4999988
    %v3460 = vmul.f32 %v3455, %v3459
    %v3461 = vadd.f32 1.0, %v3460
    %v3462 = vmul.f32 %v3453, %v3453
    %v3463 = vmul.f32 %v3462, -0.00019511016
    %v3464 = vadd.f32 %v3463, 0.008332121
    %v3465 = vmul.f32 %v3462, %v3464
    %v3466 = vadd.f32 %v3465, -0.16666654
    %v3467 = vmul.f32 %v3462, %v3466
    %v3468 = vadd.f32 %v3467, 1.0
    %v3469 = vmul.f32 %v3468, %v3453
    %vm3470 = vweird.f32 %v3324
    %v3471 = vand.u32 %v3454, 3
    %vm3472 = vcmp.lt.s32.totalorder %v3471, 2
    %vm3473 = vcmp.eq.s32.totalorder %v3471, 0
    %v3474 = vxor.u32 %v3469, 2147483648
    %v3475 = vsel %vm3473, %v3461, %v3474
    %vm3476 = vcmp.eq.s32.totalorder %v3471, 2
    %v3477 = vxor.u32 %v3461, 2147483648
    %v3478 = vsel %vm3476, %v3477, %v3469
    %v3479 = vsel %vm3472, %v3475, %v3478
    %v3480 = vsel %vm3470, nan, %v3479
    %v3481 = vand.u32 2147483647, %v3325
    %vm3482 = vcmp.le.f32.partialorder %v3481, 0.7853982
    %vm3483 = vcmp.lt.s32.totalorder %v3325, 0
    %v3484 = vand.u32 %v3325, 2139095040
    %v3485 = vshrl.u32 %v3484, 23
    %v3486 = vsub.s32 %v3485, 127
    %v3487 = vand.u32 2147483647, %v3325
    %v3488 = vand.u32 %v3487, 8388607
    %v3489 = vor.u32 %v3488, 8388608
    %v3490 = vsub.s32 0, %v3489
    %v3491 = vadd.s32 %v3486, 1
    %vm3492 = vcmp.gt.s32.totalorder %v3491, 0
    %v3493 = vsel %vm3492, %v3491, 0
    %v3494 = vshrl.u32 %v3493, 5
    %v3495 = vand.u32 %v3493, 31
    %v3496 = vsub.s32 32, %v3495
    %v3497 = vshrl.u32 683565275, %v3496
    %v3498 = vshll.u32 683565275, %v3495
    %v3499 = vshrl.u32 2475754826, %v3496
    %v3500 = vor.u32 %v3498, %v3499
    %v3501 = vshll.u32 2475754826, %v3495
    %v3502 = vshrl.u32 2131351028, %v3496
    %v3503 = vor.u32 %v3501, %v3502
    %v3504 = vshll.u32 2131351028, %v3495
    %v3505 = vshrl.u32 2102212464, %v3496
    %v3506 = vor.u32 %v3504, %v3505
    %v3507 = vshll.u32 2102212464, %v3495
    %v3508 = vshrl.u32 920167782, %v3496
    %v3509 = vor.u32 %v3507, %v3508
    %v3510 = vshll.u32 920167782, %v3495
    %v3511 = vshrl.u32 1326507024, %v3496
    %v3512 = vor.u32 %v3510, %v3511
    %vm3513 = vcmp.lt.s32.totalorder %v3494, 1
    %vm3514 = vcmp.lt.s32.totalorder %v3494, 2
    %vm3515 = vcmp.lt.s32.totalorder %v3494, 3
    %vm3516 = vcmp.lt.s32.totalorder %v3494, 4
    %v3517 = vsel %vm3513, %v3497, %v3500
    %v3518 = vsel %vm3516, %v3506, 2102212464
    %v3519 = vsel %vm3515, %v3503, %v3518
    %v3520 = vsel %vm3514, %v3517, %v3519
    %v3521 = vsel %vm3513, %v3500, %v3503
    %v3522 = vsel %vm3516, %v3509, 920167782
    %v3523 = vsel %vm3515, %v3506, %v3522
    %v3524 = vsel %vm3514, %v3521, %v3523
    %v3525 = vsel %vm3513, %v3503, %v3506
    %v3526 = vsel %vm3516, %v3512, 1326507024
    %v3527 = vsel %vm3515, %v3509, %v3526
    %v3528 = vsel %vm3514, %v3525, %v3527
    %v3529 = vshll.u32 %v3489, 8
    %v3530 = vand.u32 %v3529, 65535
    %v3531 = vshrl.u32 %v3529, 16
    %v3532 = vand.u32 %v3528, 65535
    %v3533 = vshrl.u32 %v3528, 16
    %v3534 = vmul.u32 %v3530, %v3532
    %v3535 = vmul.u32 %v3530, %v3533
    %v3536 = vmul.u32 %v3531, %v3532
    %v3537 = vmul.u32 %v3531, %v3533
    %v3538 = vshll.u32 %v3535, 16
    %v3539 = vshrl.u32 %v3535, 16
    %v3540 = vshll.u32 %v3536, 16
    %v3541 = vshrl.u32 %v3536, 16
    %vm3542 = vc.u32 %v3534, %v3538
    %v3543 = vsel %vm3542, 1, 0
    %v3544 = vadd.s32 %v3534, %v3538
    %v3545 = vadd.s32 %v3537, %v3543
    %vm3546 = vc.u32 %v3544, %v3540
    %v3547 = vsel %vm3546, 1, 0
    %v3548 = vadd.s32 %v3544, %v3540
    %v3549 = vadd.s32 %v3545, %v3547
    %v3550 = vadd.s32 %v3549, %v3539
    %v3551 = vadd.s32 %v3550, %v3541
    %v3552 = vand.u32 %v3529, 65535
    %v3553 = vshrl.u32 %v3529, 16
    %v3554 = vand.u32 %v3524, 65535
    %v3555 = vshrl.u32 %v3524, 16
    %v3556 = vmul.u32 %v3552, %v3554
    %v3557 = vmul.u32 %v3552, %v3555
    %v3558 = vmul.u32 %v3553, %v3554
    %v3559 = vmul.u32 %v3553, %v3555
    %v3560 = vshll.u32 %v3557, 16
    %v3561 = vshrl.u32 %v3557, 16
    %v3562 = vshll.u32 %v3558, 16
    %v3563 = vshrl.u32 %v3558, 16
    %vm3564 = vc.u32 %v3556, %v3560
    %v3565 = vsel %vm3564, 1, 0
    %v3566 = vadd.s32 %v3556, %v3560
    %v3567 = vadd.s32 %v3559, %v3565
    %vm3568 = vc.u32 %v3566, %v3562
    %v3569 = vsel %vm3568, 1, 0
    %v3570 = vadd.s32 %v3566, %v3562
    %v3571 = vadd.s32 %v3567, %v3569
    %v3572 = vadd.s32 %v3571, %v3561
    %v3573 = vadd.s32 %v3572, %v3563
    %v3574 = vmul.u32 %v3529, %v3520
    %v3575 = vadd.s32 %v3551, %v3570
    %vm3576 = vc.u32 %v3551, %v3570
    %v3577 = vadd.s32 %v3573, 1
    %v3578 = vsel %vm3576, %v3577, %v3573
    %v3579 = vadd.s32 %v3574, %v3578
    %v3580 = vadd.s32 %v3579, 536870912
    %v3581 = vshrl.u32 %v3580, 30
    %v3582 = vshll.u32 %v3581, 30
    %v3583 = vsub.s32 %v3579, %v3582
    %vm3584 = vcmp.lt.s32.totalorder %v3583, 0
    %v3585 = vsub.s32 0, %v3583
    %v3586 = vsel %vm3584, %v3585, %v3583
    %v3587 = vclz %v3586
    %v3588 = vsub.s32 %v3587, 2
    %vm3589 = vcmp.gt.s32.totalorder 0, %v3588
    %v3590 = vsel %vm3589, 0, %v3588
    %v3591 = vsub.s32 32, %v3590
    %v3592 = vshll.u32 %v3583, %v3590
    %v3593 = vshrl.u32 %v3575, %v3591
    %v3594 = vor.u32 %v3592, %v3593
    %v3595 = vsub.s32 4294967266, %v3590
    %v3596 = vadd.s32 %v3595, 127
    %v3597 = vshll.u32 %v3596, 23
    %v3598 = vor.u32 4788187, %v3597
    %v3599 = vand.u32 2147483647, %v3598
    %v3601 = vcvt.s32.f32 %v3594
    %v3602 = vmul.f32 %v3601, %v3599
    %v3603 = vxor.u32 %v3602, 2147483648
    %v3604 = vsel %vm3483, %v3603, %v3602
    %v3605 = vsub.s32 4, %v3581
    %v3606 = vsel %vm3483, %v3605, %v3581
    %v3607 = vsel %vm3482, %v3325, %v3604
    %v3608 = vsel %vm3482, 0, %v3606
    %v3609 = vmul.f32 %v3607, %v3607
    %v3610 = vmul.f32 %v3609, -0.001358992
    %v3611 = vadd.f32 %v3610, 0.041655596
    %v3612 = vmul.f32 %v3609, %v3611
    %v3613 = vadd.f32 %v3612, -0.4999988
    %v3614 = vmul.f32 %v3609, %v3613
    %v3615 = vadd.f32 1.0, %v3614
    %v3616 = vmul.f32 %v3607, %v3607
    %v3617 = vmul.f32 %v3616, -0.00019511016
    %v3618 = vadd.f32 %v3617, 0.008332121
    %v3619 = vmul.f32 %v3616, %v3618
    %v3620 = vadd.f32 %v3619, -0.16666654
    %v3621 = vmul.f32 %v3616, %v3620
    %v3622 = vadd.f32 %v3621, 1.0
    %v3623 = vmul.f32 %v3622, %v3607
    %vm3624 = vweird.f32 %v3325
    %v3625 = vand.u32 %v3608, 3
    %vm3626 = vcmp.lt.s32.totalorder %v3625, 2
    %vm3627 = vcmp.eq.s32.totalorder %v3625, 0
    %v3628 = vxor.u32 %v3623, 2147483648
    %v3629 = vsel %vm3627, %v3615, %v3628
    %vm3630 = vcmp.eq.s32.totalorder %v3625, 2
    %v3631 = vxor.u32 %v3615, 2147483648
    %v3632 = vsel %vm3630, %v3631, %v3623
    %v3633 = vsel %vm3626, %v3629, %v3632
    %v3634 = vsel %vm3624, nan, %v3633
    %v3635 = vand.u32 2147483647, %v3326
    %vm3636 = vcmp.le.f32.partialorder %v3635, 0.7853982
    %vm3637 = vcmp.lt.s32.totalorder %v3326, 0
    %v3638 = vand.u32 %v3326, 2139095040
    %v3639 = vshrl.u32 %v3638, 23
    %v3640 = vsub.s32 %v3639, 127
    %v3641 = vand.u32 2147483647, %v3326
    %v3642 = vand.u32 %v3641, 8388607
    %v3643 = vor.u32 %v3642, 8388608
    %v3644 = vsub.s32 0, %v3643
    %v3645 = vadd.s32 %v3640, 1
    %vm3646 = vcmp.gt.s32.totalorder %v3645, 0
    %v3647 = vsel %vm3646, %v3645, 0
    %v3648 = vshrl.u32 %v3647, 5
    %v3649 = vand.u32 %v3647, 31
    %v3650 = vsub.s32 32, %v3649
    %v3651 = vshrl.u32 683565275, %v3650
    %v3652 = vshll.u32 683565275, %v3649
    %v3653 = vshrl.u32 2475754826, %v3650
    %v3654 = vor.u32 %v3652, %v3653
    %v3655 = vshll.u32 2475754826, %v3649
    %v3656 = vshrl.u32 2131351028, %v3650
    %v3657 = vor.u32 %v3655, %v3656
    %v3658 = vshll.u32 2131351028, %v3649
    %v3659 = vshrl.u32 2102212464, %v3650
    %v3660 = vor.u32 %v3658, %v3659
    %v3661 = vshll.u32 2102212464, %v3649
    %v3662 = vshrl.u32 920167782, %v3650
    %v3663 = vor.u32 %v3661, %v3662
    %v3664 = vshll.u32 920167782, %v3649
    %v3665 = vshrl.u32 1326507024, %v3650
    %v3666 = vor.u32 %v3664, %v3665
    %vm3667 = vcmp.lt.s32.totalorder %v3648, 1
    %vm3668 = vcmp.lt.s32.totalorder %v3648, 2
    %vm3669 = vcmp.lt.s32.totalorder %v3648, 3
    %vm3670 = vcmp.lt.s32.totalorder %v3648, 4
    %v3671 = vsel %vm3667, %v3651, %v3654
    %v3672 = vsel %vm3670, %v3660, 2102212464
    %v3673 = vsel %vm3669, %v3657, %v3672
    %v3674 = vsel %vm3668, %v3671, %v3673
    %v3675 = vsel %vm3667, %v3654, %v3657
    %v3676 = vsel %vm3670, %v3663, 920167782
    %v3677 = vsel %vm3669, %v3660, %v3676
    %v3678 = vsel %vm3668, %v3675, %v3677
    %v3679 = vsel %vm3667, %v3657, %v3660
    %v3680 = vsel %vm3670, %v3666, 1326507024
    %v3681 = vsel %vm3669, %v3663, %v3680
    %v3682 = vsel %vm3668, %v3679, %v3681
    %v3683 = vshll.u32 %v3643, 8
    %v3684 = vand.u32 %v3683, 65535
    %v3685 = vshrl.u32 %v3683, 16
    %v3686 = vand.u32 %v3682, 65535
    %v3687 = vshrl.u32 %v3682, 16
    %v3688 = vmul.u32 %v3684, %v3686
    %v3689 = vmul.u32 %v3684, %v3687
    %v3690 = vmul.u32 %v3685, %v3686
    %v3691 = vmul.u32 %v3685, %v3687
    %v3692 = vshll.u32 %v3689, 16
    %v3693 = vshrl.u32 %v3689, 16
    %v3694 = vshll.u32 %v3690, 16
    %v3695 = vshrl.u32 %v3690, 16
    %vm3696 = vc.u32 %v3688, %v3692
    %v3697 = vsel %vm3696, 1, 0
    %v3698 = vadd.s32 %v3688, %v3692
    %v3699 = vadd.s32 %v3691, %v3697
    %vm3700 = vc.u32 %v3698, %v3694
    %v3701 = vsel %vm3700, 1, 0
    %v3702 = vadd.s32 %v3698, %v3694
    %v3703 = vadd.s32 %v3699, %v3701
    %v3704 = vadd.s32 %v3703, %v3693
    %v3705 = vadd.s32 %v3704, %v3695
    %v3706 = vand.u32 %v3683, 65535
    %v3707 = vshrl.u32 %v3683, 16
    %v3708 = vand.u32 %v3678, 65535
    %v3709 = vshrl.u32 %v3678, 16
    %v3710 = vmul.u32 %v3706, %v3708
    %v3711 = vmul.u32 %v3706, %v3709
    %v3712 = vmul.u32 %v3707, %v3708
    %v3713 = vmul.u32 %v3707, %v3709
    %v3714 = vshll.u32 %v3711, 16
    %v3715 = vshrl.u32 %v3711, 16
    %v3716 = vshll.u32 %v3712, 16
    %v3717 = vshrl.u32 %v3712, 16
    %vm3718 = vc.u32 %v3710, %v3714
    %v3719 = vsel %vm3718, 1, 0
    %v3720 = vadd.s32 %v3710, %v3714
    %v3721 = vadd.s32 %v3713, %v3719
    %vm3722 = vc.u32 %v3720, %v3716
    %v3723 = vsel %vm3722, 1, 0
    %v3724 = vadd.s32 %v3720, %v3716
    %v3725 = vadd.s32 %v3721, %v3723
    %v3726 = vadd.s32 %v3725, %v3715
    %v3727 = vadd.s32 %v3726, %v3717
    %v3728 = vmul.u32 %v3683, %v3674
    %v3729 = vadd.s32 %v3705, %v3724
    %vm3730 = vc.u32 %v3705, %v3724
    %v3731 = vadd.s32 %v3727, 1
    %v3732 = vsel %vm3730, %v3731, %v3727
    %v3733 = vadd.s32 %v3728, %v3732
    %v3734 = vadd.s32 %v3733, 536870912
    %v3735 = vshrl.u32 %v3734, 30
    %v3736 = vshll.u32 %v3735, 30
    %v3737 = vsub.s32 %v3733, %v3736
    %vm3738 = vcmp.lt.s32.totalorder %v3737, 0
    %v3739 = vsub.s32 0, %v3737
    %v3740 = vsel %vm3738, %v3739, %v3737
    %v3741 = vclz %v3740
    %v3742 = vsub.s32 %v3741, 2
    %vm3743 = vcmp.gt.s32.totalorder 0, %v3742
    %v3744 = vsel %vm3743, 0, %v3742
    %v3745 = vsub.s32 32, %v3744
    %v3746 = vshll.u32 %v3737, %v3744
    %v3747 = vshrl.u32 %v3729, %v3745
    %v3748 = vor.u32 %v3746, %v3747
    %v3749 = vsub.s32 4294967266, %v3744
    %v3750 = vadd.s32 %v3749, 127
    %v3751 = vshll.u32 %v3750, 23
    %v3752 = vor.u32 4788187, %v3751
    %v3753 = vand.u32 2147483647, %v3752
    %v3755 = vcvt.s32.f32 %v3748
    %v3756 = vmul.f32 %v3755, %v3753
    %v3757 = vxor.u32 %v3756, 2147483648
    %v3758 = vsel %vm3637, %v3757, %v3756
    %v3759 = vsub.s32 4, %v3735
    %v3760 = vsel %vm3637, %v3759, %v3735
    %v3761 = vsel %vm3636, %v3326, %v3758
    %v3762 = vsel %vm3636, 0, %v3760
    %v3763 = vmul.f32 %v3761, %v3761
    %v3764 = vmul.f32 %v3763, -0.001358992
    %v3765 = vadd.f32 %v3764, 0.041655596
    %v3766 = vmul.f32 %v3763, %v3765
    %v3767 = vadd.f32 %v3766, -0.4999988
    %v3768 = vmul.f32 %v3763, %v3767
    %v3769 = vadd.f32 1.0, %v3768
    %v3770 = vmul.f32 %v3761, %v3761
    %v3771 = vmul.f32 %v3770, -0.00019511016
    %v3772 = vadd.f32 %v3771, 0.008332121
    %v3773 = vmul.f32 %v3770, %v3772
    %v3774 = vadd.f32 %v3773, -0.16666654
    %v3775 = vmul.f32 %v3770, %v3774
    %v3776 = vadd.f32 %v3775, 1.0
    %v3777 = vmul.f32 %v3776, %v3761
    %vm3778 = vweird.f32 %v3326
    %v3779 = vand.u32 %v3762, 3
    %vm3780 = vcmp.lt.s32.totalorder %v3779, 2
    %vm3781 = vcmp.eq.s32.totalorder %v3779, 0
    %v3782 = vxor.u32 %v3777, 2147483648
    %v3783 = vsel %vm3781, %v3769, %v3782
    %vm3784 = vcmp.eq.s32.totalorder %v3779, 2
    %v3785 = vxor.u32 %v3769, 2147483648
    %v3786 = vsel %vm3784, %v3785, %v3777
    %v3787 = vsel %vm3780, %v3783, %v3786
    %v3788 = vsel %vm3778, nan, %v3787
    %v3789 = vmul.f32 %v3291, %v3480
    %v3790 = vmul.f32 %v3292, %v3634
    %v3791 = vmul.f32 %v3293, %v3788
    %v3792 = vand.u32 2147483647, %v3324
    %vm3793 = vcmp.le.f32.partialorder %v3792, 0.7853982
    %vm3794 = vcmp.lt.s32.totalorder %v3324, 0
    %v3795 = vand.u32 %v3324, 2139095040
    %v3796 = vshrl.u32 %v3795, 23
    %v3797 = vsub.s32 %v3796, 127
    %v3798 = vand.u32 2147483647, %v3324
    %v3799 = vand.u32 %v3798, 8388607
    %v3800 = vor.u32 %v3799, 8388608
    %v3801 = vsub.s32 0, %v3800
    %v3802 = vadd.s32 %v3797, 1
    %vm3803 = vcmp.gt.s32.totalorder %v3802, 0
    %v3804 = vsel %vm3803, %v3802, 0
    %v3805 = vshrl.u32 %v3804, 5
    %v3806 = vand.u32 %v3804, 31
    %v3807 = vsub.s32 32, %v3806
    %v3808 = vshrl.u32 683565275, %v3807
    %v3809 = vshll.u32 683565275, %v3806
    %v3810 = vshrl.u32 2475754826, %v3807
    %v3811 = vor.u32 %v3809, %v3810
    %v3812 = vshll.u32 2475754826, %v3806
    %v3813 = vshrl.u32 2131351028, %v3807
    %v3814 = vor.u32 %v3812, %v3813
    %v3815 = vshll.u32 2131351028, %v3806
    %v3816 = vshrl.u32 2102212464, %v3807
    %v3817 = vor.u32 %v3815, %v3816
    %v3818 = vshll.u32 2102212464, %v3806
    %v3819 = vshrl.u32 920167782, %v3807
    %v3820 = vor.u32 %v3818, %v3819
    %v3821 = vshll.u32 920167782, %v3806
    %v3822 = vshrl.u32 1326507024, %v3807
    %v3823 = vor.u32 %v3821, %v3822
    %vm3824 = vcmp.lt.s32.totalorder %v3805, 1
    %vm3825 = vcmp.lt.s32.totalorder %v3805, 2
    %vm3826 = vcmp.lt.s32.totalorder %v3805, 3
    %vm3827 = vcmp.lt.s32.totalorder %v3805, 4
    %v3828 = vsel %vm3824, %v3808, %v3811
    %v3829 = vsel %vm3827, %v3817, 2102212464
    %v3830 = vsel %vm3826, %v3814, %v3829
    %v3831 = vsel %vm3825, %v3828, %v3830
    %v3832 = vsel %vm3824, %v3811, %v3814
    %v3833 = vsel %vm3827, %v3820, 920167782
    %v3834 = vsel %vm3826, %v3817, %v3833
    %v3835 = vsel %vm3825, %v3832, %v3834
    %v3836 = vsel %vm3824, %v3814, %v3817
    %v3837 = vsel %vm3827, %v3823, 1326507024
    %v3838 = vsel %vm3826, %v3820, %v3837
    %v3839 = vsel %vm3825, %v3836, %v3838
    %v3840 = vshll.u32 %v3800, 8
    %v3841 = vand.u32 %v3840, 65535
    %v3842 = vshrl.u32 %v3840, 16
    %v3843 = vand.u32 %v3839, 65535
    %v3844 = vshrl.u32 %v3839, 16
    %v3845 = vmul.u32 %v3841, %v3843
    %v3846 = vmul.u32 %v3841, %v3844
    %v3847 = vmul.u32 %v3842, %v3843
    %v3848 = vmul.u32 %v3842, %v3844
    %v3849 = vshll.u32 %v3846, 16
    %v3850 = vshrl.u32 %v3846, 16
    %v3851 = vshll.u32 %v3847, 16
    %v3852 = vshrl.u32 %v3847, 16
    %vm3853 = vc.u32 %v3845, %v3849
    %v3854 = vsel %vm3853, 1, 0
    %v3855 = vadd.s32 %v3845, %v3849
    %v3856 = vadd.s32 %v3848, %v3854
    %vm3857 = vc.u32 %v3855, %v3851
    %v3858 = vsel %vm3857, 1, 0
    %v3859 = vadd.s32 %v3855, %v3851
    %v3860 = vadd.s32 %v3856, %v3858
    %v3861 = vadd.s32 %v3860, %v3850
    %v3862 = vadd.s32 %v3861, %v3852
    %v3863 = vand.u32 %v3840, 65535
    %v3864 = vshrl.u32 %v3840, 16
    %v3865 = vand.u32 %v3835, 65535
    %v3866 = vshrl.u32 %v3835, 16
    %v3867 = vmul.u32 %v3863, %v3865
    %v3868 = vmul.u32 %v3863, %v3866
    %v3869 = vmul.u32 %v3864, %v3865
    %v3870 = vmul.u32 %v3864, %v3866
    %v3871 = vshll.u32 %v3868, 16
    %v3872 = vshrl.u32 %v3868, 16
    %v3873 = vshll.u32 %v3869, 16
    %v3874 = vshrl.u32 %v3869, 16
    %vm3875 = vc.u32 %v3867, %v3871
    %v3876 = vsel %vm3875, 1, 0
    %v3877 = vadd.s32 %v3867, %v3871
    %v3878 = vadd.s32 %v3870, %v3876
    %vm3879 = vc.u32 %v3877, %v3873
    %v3880 = vsel %vm3879, 1, 0
    %v3881 = vadd.s32 %v3877, %v3873
    %v3882 = vadd.s32 %v3878, %v3880
    %v3883 = vadd.s32 %v3882, %v3872
    %v3884 = vadd.s32 %v3883, %v3874
    %v3885 = vmul.u32 %v3840, %v3831
    %v3886 = vadd.s32 %v3862, %v3881
    %vm3887 = vc.u32 %v3862, %v3881
    %v3888 = vadd.s32 %v3884, 1
    %v3889 = vsel %vm3887, %v3888, %v3884
    %v3890 = vadd.s32 %v3885, %v3889
    %v3891 = vadd.s32 %v3890, 536870912
    %v3892 = vshrl.u32 %v3891, 30
    %v3893 = vshll.u32 %v3892, 30
    %v3894 = vsub.s32 %v3890, %v3893
    %vm3895 = vcmp.lt.s32.totalorder %v3894, 0
    %v3896 = vsub.s32 0, %v3894
    %v3897 = vsel %vm3895, %v3896, %v3894
    %v3898 = vclz %v3897
    %v3899 = vsub.s32 %v3898, 2
    %vm3900 = vcmp.gt.s32.totalorder 0, %v3899
    %v3901 = vsel %vm3900, 0, %v3899
    %v3902 = vsub.s32 32, %v3901
    %v3903 = vshll.u32 %v3894, %v3901
    %v3904 = vshrl.u32 %v3886, %v3902
    %v3905 = vor.u32 %v3903, %v3904
    %v3906 = vsub.s32 4294967266, %v3901
    %v3907 = vadd.s32 %v3906, 127
    %v3908 = vshll.u32 %v3907, 23
    %v3909 = vor.u32 4788187, %v3908
    %v3910 = vand.u32 2147483647, %v3909
    %v3912 = vcvt.s32.f32 %v3905
    %v3913 = vmul.f32 %v3912, %v3910
    %v3914 = vxor.u32 %v3913, 2147483648
    %v3915 = vsel %vm3794, %v3914, %v3913
    %v3916 = vsub.s32 4, %v3892
    %v3917 = vsel %vm3794, %v3916, %v3892
    %v3918 = vsel %vm3793, %v3324, %v3915
    %v3919 = vsel %vm3793, 0, %v3917
    %v3920 = vmul.f32 %v3918, %v3918
    %v3921 = vmul.f32 %v3920, -0.001358992
    %v3922 = vadd.f32 %v3921, 0.041655596
    %v3923 = vmul.f32 %v3920, %v3922
    %v3924 = vadd.f32 %v3923, -0.4999988
    %v3925 = vmul.f32 %v3920, %v3924
    %v3926 = vadd.f32 1.0, %v3925
    %v3927 = vmul.f32 %v3918, %v3918
    %v3928 = vmul.f32 %v3927, -0.00019511016
    %v3929 = vadd.f32 %v3928, 0.008332121
    %v3930 = vmul.f32 %v3927, %v3929
    %v3931 = vadd.f32 %v3930, -0.16666654
    %v3932 = vmul.f32 %v3927, %v3931
    %v3933 = vadd.f32 %v3932, 1.0
    %v3934 = vmul.f32 %v3933, %v3918
    %vm3935 = vweird.f32 %v3324
    %v3936 = vadd.s32 %v3919, 3
    %v3937 = vand.u32 %v3936, 3
    %vm3938 = vcmp.lt.s32.totalorder %v3937, 2
    %vm3939 = vcmp.eq.s32.totalorder %v3937, 0
    %v3940 = vxor.u32 %v3934, 2147483648
    %v3941 = vsel %vm3939, %v3926, %v3940
    %vm3942 = vcmp.eq.s32.totalorder %v3937, 2
    %v3943 = vxor.u32 %v3926, 2147483648
    %v3944 = vsel %vm3942, %v3943, %v3934
    %v3945 = vsel %vm3938, %v3941, %v3944
    %v3946 = vsel %vm3935, nan, %v3945
    %v3947 = vand.u32 2147483647, %v3325
    %vm3948 = vcmp.le.f32.partialorder %v3947, 0.7853982
    %vm3949 = vcmp.lt.s32.totalorder %v3325, 0
    %v3950 = vand.u32 %v3325, 2139095040
    %v3951 = vshrl.u32 %v3950, 23
    %v3952 = vsub.s32 %v3951, 127
    %v3953 = vand.u32 2147483647, %v3325
    %v3954 = vand.u32 %v3953, 8388607
    %v3955 = vor.u32 %v3954, 8388608
    %v3956 = vsub.s32 0, %v3955
    %v3957 = vadd.s32 %v3952, 1
    %vm3958 = vcmp.gt.s32.totalorder %v3957, 0
    %v3959 = vsel %vm3958, %v3957, 0
    %v3960 = vshrl.u32 %v3959, 5
    %v3961 = vand.u32 %v3959, 31
    %v3962 = vsub.s32 32, %v3961
    %v3963 = vshrl.u32 683565275, %v3962
    %v3964 = vshll.u32 683565275, %v3961
    %v3965 = vshrl.u32 2475754826, %v3962
    %v3966 = vor.u32 %v3964, %v3965
    %v3967 = vshll.u32 2475754826, %v3961
    %v3968 = vshrl.u32 2131351028, %v3962
    %v3969 = vor.u32 %v3967, %v3968
    %v3970 = vshll.u32 2131351028, %v3961
    %v3971 = vshrl.u32 2102212464, %v3962
    %v3972 = vor.u32 %v3970, %v3971
    %v3973 = vshll.u32 2102212464, %v3961
    %v3974 = vshrl.u32 920167782, %v3962
    %v3975 = vor.u32 %v3973, %v3974
    %v3976 = vshll.u32 920167782, %v3961
    %v3977 = vshrl.u32 1326507024, %v3962
    %v3978 = vor.u32 %v3976, %v3977
    %vm3979 = vcmp.lt.s32.totalorder %v3960, 1
    %vm3980 = vcmp.lt.s32.totalorder %v3960, 2
    %vm3981 = vcmp.lt.s32.totalorder %v3960, 3
    %vm3982 = vcmp.lt.s32.totalorder %v3960, 4
    %v3983 = vsel %vm3979, %v3963, %v3966
    %v3984 = vsel %vm3982, %v3972, 2102212464
    %v3985 = vsel %vm3981, %v3969, %v3984
    %v3986 = vsel %vm3980, %v3983, %v3985
    %v3987 = vsel %vm3979, %v3966, %v3969
    %v3988 = vsel %vm3982, %v3975, 920167782
    %v3989 = vsel %vm3981, %v3972, %v3988
    %v3990 = vsel %vm3980, %v3987, %v3989
    %v3991 = vsel %vm3979, %v3969, %v3972
    %v3992 = vsel %vm3982, %v3978, 1326507024
    %v3993 = vsel %vm3981, %v3975, %v3992
    %v3994 = vsel %vm3980, %v3991, %v3993
    %v3995 = vshll.u32 %v3955, 8
    %v3996 = vand.u32 %v3995, 65535
    %v3997 = vshrl.u32 %v3995, 16
    %v3998 = vand.u32 %v3994, 65535
    %v3999 = vshrl.u32 %v3994, 16
    %v4000 = vmul.u32 %v3996, %v3998
    %v4001 = vmul.u32 %v3996, %v3999
    %v4002 = vmul.u32 %v3997, %v3998
    %v4003 = vmul.u32 %v3997, %v3999
    %v4004 = vshll.u32 %v4001, 16
    %v4005 = vshrl.u32 %v4001, 16
    %v4006 = vshll.u32 %v4002, 16
    %v4007 = vshrl.u32 %v4002, 16
    %vm4008 = vc.u32 %v4000, %v4004
    %v4009 = vsel %vm4008, 1, 0
    %v4010 = vadd.s32 %v4000, %v4004
    %v4011 = vadd.s32 %v4003, %v4009
    %vm4012 = vc.u32 %v4010, %v4006
    %v4013 = vsel %vm4012, 1, 0
    %v4014 = vadd.s32 %v4010, %v4006
    %v4015 = vadd.s32 %v4011, %v4013
    %v4016 = vadd.s32 %v4015, %v4005
    %v4017 = vadd.s32 %v4016, %v4007
    %v4018 = vand.u32 %v3995, 65535
    %v4019 = vshrl.u32 %v3995, 16
    %v4020 = vand.u32 %v3990, 65535
    %v4021 = vshrl.u32 %v3990, 16
    %v4022 = vmul.u32 %v4018, %v4020
    %v4023 = vmul.u32 %v4018, %v4021
    %v4024 = vmul.u32 %v4019, %v4020
    %v4025 = vmul.u32 %v4019, %v4021
    %v4026 = vshll.u32 %v4023, 16
    %v4027 = vshrl.u32 %v4023, 16
    %v4028 = vshll.u32 %v4024, 16
    %v4029 = vshrl.u32 %v4024, 16
    %vm4030 = vc.u32 %v4022, %v4026
    %v4031 = vsel %vm4030, 1, 0
    %v4032 = vadd.s32 %v4022, %v4026
    %v4033 = vadd.s32 %v4025, %v4031
    %vm4034 = vc.u32 %v4032, %v4028
    %v4035 = vsel %vm4034, 1, 0
    %v4036 = vadd.s32 %v4032, %v4028
    %v4037 = vadd.s32 %v4033, %v4035
    %v4038 = vadd.s32 %v4037, %v4027
    %v4039 = vadd.s32 %v4038, %v4029
    %v4040 = vmul.u32 %v3995, %v3986
    %v4041 = vadd.s32 %v4017, %v4036
    %vm4042 = vc.u32 %v4017, %v4036
    %v4043 = vadd.s32 %v4039, 1
    %v4044 = vsel %vm4042, %v4043, %v4039
    %v4045 = vadd.s32 %v4040, %v4044
    %v4046 = vadd.s32 %v4045, 536870912
    %v4047 = vshrl.u32 %v4046, 30
    %v4048 = vshll.u32 %v4047, 30
    %v4049 = vsub.s32 %v4045, %v4048
    %vm4050 = vcmp.lt.s32.totalorder %v4049, 0
    %v4051 = vsub.s32 0, %v4049
    %v4052 = vsel %vm4050, %v4051, %v4049
    %v4053 = vclz %v4052
    %v4054 = vsub.s32 %v4053, 2
    %vm4055 = vcmp.gt.s32.totalorder 0, %v4054
    %v4056 = vsel %vm4055, 0, %v4054
    %v4057 = vsub.s32 32, %v4056
    %v4058 = vshll.u32 %v4049, %v4056
    %v4059 = vshrl.u32 %v4041, %v4057
    %v4060 = vor.u32 %v4058, %v4059
    %v4061 = vsub.s32 4294967266, %v4056
    %v4062 = vadd.s32 %v4061, 127
    %v4063 = vshll.u32 %v4062, 23
    %v4064 = vor.u32 4788187, %v4063
    %v4065 = vand.u32 2147483647, %v4064
    %v4067 = vcvt.s32.f32 %v4060
    %v4068 = vmul.f32 %v4067, %v4065
    %v4069 = vxor.u32 %v4068, 2147483648
    %v4070 = vsel %vm3949, %v4069, %v4068
    %v4071 = vsub.s32 4, %v4047
    %v4072 = vsel %vm3949, %v4071, %v4047
    %v4073 = vsel %vm3948, %v3325, %v4070
    %v4074 = vsel %vm3948, 0, %v4072
    %v4075 = vmul.f32 %v4073, %v4073
    %v4076 = vmul.f32 %v4075, -0.001358992
    %v4077 = vadd.f32 %v4076, 0.041655596
    %v4078 = vmul.f32 %v4075, %v4077
    %v4079 = vadd.f32 %v4078, -0.4999988
    %v4080 = vmul.f32 %v4075, %v4079
    %v4081 = vadd.f32 1.0, %v4080
    %v4082 = vmul.f32 %v4073, %v4073
    %v4083 = vmul.f32 %v4082, -0.00019511016
    %v4084 = vadd.f32 %v4083, 0.008332121
    %v4085 = vmul.f32 %v4082, %v4084
    %v4086 = vadd.f32 %v4085, -0.16666654
    %v4087 = vmul.f32 %v4082, %v4086
    %v4088 = vadd.f32 %v4087, 1.0
    %v4089 = vmul.f32 %v4088, %v4073
    %vm4090 = vweird.f32 %v3325
    %v4091 = vadd.s32 %v4074, 3
    %v4092 = vand.u32 %v4091, 3
    %vm4093 = vcmp.lt.s32.totalorder %v4092, 2
    %vm4094 = vcmp.eq.s32.totalorder %v4092, 0
    %v4095 = vxor.u32 %v4089, 2147483648
    %v4096 = vsel %vm4094, %v4081, %v4095
    %vm4097 = vcmp.eq.s32.totalorder %v4092, 2
    %v4098 = vxor.u32 %v4081, 2147483648
    %v4099 = vsel %vm4097, %v4098, %v4089
    %v4100 = vsel %vm4093, %v4096, %v4099
    %v4101 = vsel %vm4090, nan, %v4100
    %v4102 = vand.u32 2147483647, %v3326
    %vm4103 = vcmp.le.f32.partialorder %v4102, 0.7853982
    %vm4104 = vcmp.lt.s32.totalorder %v3326, 0
    %v4105 = vand.u32 %v3326, 2139095040
    %v4106 = vshrl.u32 %v4105, 23
    %v4107 = vsub.s32 %v4106, 127
    %v4108 = vand.u32 2147483647, %v3326
    %v4109 = vand.u32 %v4108, 8388607
    %v4110 = vor.u32 %v4109, 8388608
    %v4111 = vsub.s32 0, %v4110
    %v4112 = vadd.s32 %v4107, 1
    %vm4113 = vcmp.gt.s32.totalorder %v4112, 0
    %v4114 = vsel %vm4113, %v4112, 0
    %v4115 = vshrl.u32 %v4114, 5
    %v4116 = vand.u32 %v4114, 31
    %v4117 = vsub.s32 32, %v4116
    %v4118 = vshrl.u32 683565275, %v4117
    %v4119 = vshll.u32 683565275, %v4116
    %v4120 = vshrl.u32 2475754826, %v4117
    %v4121 = vor.u32 %v4119, %v4120
    %v4122 = vshll.u32 2475754826, %v4116
    %v4123 = vshrl.u32 2131351028, %v4117
    %v4124 = vor.u32 %v4122, %v4123
    %v4125 = vshll.u32 2131351028, %v4116
    %v4126 = vshrl.u32 2102212464, %v4117
    %v4127 = vor.u32 %v4125, %v4126
    %v4128 = vshll.u32 2102212464, %v4116
    %v4129 = vshrl.u32 920167782, %v4117
    %v4130 = vor.u32 %v4128, %v4129
    %v4131 = vshll.u32 920167782, %v4116
    %v4132 = vshrl.u32 1326507024, %v4117
    %v4133 = vor.u32 %v4131, %v4132
    %vm4134 = vcmp.lt.s32.totalorder %v4115, 1
    %vm4135 = vcmp.lt.s32.totalorder %v4115, 2
    %vm4136 = vcmp.lt.s32.totalorder %v4115, 3
    %vm4137 = vcmp.lt.s32.totalorder %v4115, 4
    %v4138 = vsel %vm4134, %v4118, %v4121
    %v4139 = vsel %vm4137, %v4127, 2102212464
    %v4140 = vsel %vm4136, %v4124, %v4139
    %v4141 = vsel %vm4135, %v4138, %v4140
    %v4142 = vsel %vm4134, %v4121, %v4124
    %v4143 = vsel %vm4137, %v4130, 920167782
    %v4144 = vsel %vm4136, %v4127, %v4143
    %v4145 = vsel %vm4135, %v4142, %v4144
    %v4146 = vsel %vm4134, %v4124, %v4127
    %v4147 = vsel %vm4137, %v4133, 1326507024
    %v4148 = vsel %vm4136, %v4130, %v4147
    %v4149 = vsel %vm4135, %v4146, %v4148
    %v4150 = vshll.u32 %v4110, 8
    %v4151 = vand.u32 %v4150, 65535
    %v4152 = vshrl.u32 %v4150, 16
    %v4153 = vand.u32 %v4149, 65535
    %v4154 = vshrl.u32 %v4149, 16
    %v4155 = vmul.u32 %v4151, %v4153
    %v4156 = vmul.u32 %v4151, %v4154
    %v4157 = vmul.u32 %v4152, %v4153
    %v4158 = vmul.u32 %v4152, %v4154
    %v4159 = vshll.u32 %v4156, 16
    %v4160 = vshrl.u32 %v4156, 16
    %v4161 = vshll.u32 %v4157, 16
    %v4162 = vshrl.u32 %v4157, 16
    %vm4163 = vc.u32 %v4155, %v4159
    %v4164 = vsel %vm4163, 1, 0
    %v4165 = vadd.s32 %v4155, %v4159
    %v4166 = vadd.s32 %v4158, %v4164
    %vm4167 = vc.u32 %v4165, %v4161
    %v4168 = vsel %vm4167, 1, 0
    %v4169 = vadd.s32 %v4165, %v4161
    %v4170 = vadd.s32 %v4166, %v4168
    %v4171 = vadd.s32 %v4170, %v4160
    %v4172 = vadd.s32 %v4171, %v4162
    %v4173 = vand.u32 %v4150, 65535
    %v4174 = vshrl.u32 %v4150, 16
    %v4175 = vand.u32 %v4145, 65535
    %v4176 = vshrl.u32 %v4145, 16
    %v4177 = vmul.u32 %v4173, %v4175
    %v4178 = vmul.u32 %v4173, %v4176
    %v4179 = vmul.u32 %v4174, %v4175
    %v4180 = vmul.u32 %v4174, %v4176
    %v4181 = vshll.u32 %v4178, 16
    %v4182 = vshrl.u32 %v4178, 16
    %v4183 = vshll.u32 %v4179, 16
    %v4184 = vshrl.u32 %v4179, 16
    %vm4185 = vc.u32 %v4177, %v4181
    %v4186 = vsel %vm4185, 1, 0
    %v4187 = vadd.s32 %v4177, %v4181
    %v4188 = vadd.s32 %v4180, %v4186
    %vm4189 = vc.u32 %v4187, %v4183
    %v4190 = vsel %vm4189, 1, 0
    %v4191 = vadd.s32 %v4187, %v4183
    %v4192 = vadd.s32 %v4188, %v4190
    %v4193 = vadd.s32 %v4192, %v4182
    %v4194 = vadd.s32 %v4193, %v4184
    %v4195 = vmul.u32 %v4150, %v4141
    %v4196 = vadd.s32 %v4172, %v4191
    %vm4197 = vc.u32 %v4172, %v4191
    %v4198 = vadd.s32 %v4194, 1
    %v4199 = vsel %vm4197, %v4198, %v4194
    %v4200 = vadd.s32 %v4195, %v4199
    %v4201 = vadd.s32 %v4200, 536870912
    %v4202 = vshrl.u32 %v4201, 30
    %v4203 = vshll.u32 %v4202, 30
    %v4204 = vsub.s32 %v4200, %v4203
    %vm4205 = vcmp.lt.s32.totalorder %v4204, 0
    %v4206 = vsub.s32 0, %v4204
    %v4207 = vsel %vm4205, %v4206, %v4204
    %v4208 = vclz %v4207
    %v4209 = vsub.s32 %v4208, 2
    %vm4210 = vcmp.gt.s32.totalorder 0, %v4209
    %v4211 = vsel %vm4210, 0, %v4209
    %v4212 = vsub.s32 32, %v4211
    %v4213 = vshll.u32 %v4204, %v4211
    %v4214 = vshrl.u32 %v4196, %v4212
    %v4215 = vor.u32 %v4213, %v4214
    %v4216 = vsub.s32 4294967266, %v4211
    %v4217 = vadd.s32 %v4216, 127
    %v4218 = vshll.u32 %v4217, 23
    %v4219 = vor.u32 4788187, %v4218
    %v4220 = vand.u32 2147483647, %v4219
    %v4222 = vcvt.s32.f32 %v4215
    %v4223 = vmul.f32 %v4222, %v4220
    %v4224 = vxor.u32 %v4223, 2147483648
    %v4225 = vsel %vm4104, %v4224, %v4223
    %v4226 = vsub.s32 4, %v4202
    %v4227 = vsel %vm4104, %v4226, %v4202
    %v4228 = vsel %vm4103, %v3326, %v4225
    %v4229 = vsel %vm4103, 0, %v4227
    %v4230 = vmul.f32 %v4228, %v4228
    %v4231 = vmul.f32 %v4230, -0.001358992
    %v4232 = vadd.f32 %v4231, 0.041655596
    %v4233 = vmul.f32 %v4230, %v4232
    %v4234 = vadd.f32 %v4233, -0.4999988
    %v4235 = vmul.f32 %v4230, %v4234
    %v4236 = vadd.f32 1.0, %v4235
    %v4237 = vmul.f32 %v4228, %v4228
    %v4238 = vmul.f32 %v4237, -0.00019511016
    %v4239 = vadd.f32 %v4238, 0.008332121
    %v4240 = vmul.f32 %v4237, %v4239
    %v4241 = vadd.f32 %v4240, -0.16666654
    %v4242 = vmul.f32 %v4237, %v4241
    %v4243 = vadd.f32 %v4242, 1.0
    %v4244 = vmul.f32 %v4243, %v4228
    %vm4245 = vweird.f32 %v3326
    %v4246 = vadd.s32 %v4229, 3
    %v4247 = vand.u32 %v4246, 3
    %vm4248 = vcmp.lt.s32.totalorder %v4247, 2
    %vm4249 = vcmp.eq.s32.totalorder %v4247, 0
    %v4250 = vxor.u32 %v4244, 2147483648
    %v4251 = vsel %vm4249, %v4236, %v4250
    %vm4252 = vcmp.eq.s32.totalorder %v4247, 2
    %v4253 = vxor.u32 %v4236, 2147483648
    %v4254 = vsel %vm4252, %v4253, %v4244
    %v4255 = vsel %vm4248, %v4251, %v4254
    %v4256 = vsel %vm4245, nan, %v4255
    %v4257 = vmul.f32 %v3294, %v3946
    %v4258 = vmul.f32 %v3295, %v4101
    %v4259 = vmul.f32 %v3296, %v4256
    %v4260 = vadd.f32 %v3789, %v4257
    %v4261 = vadd.f32 %v3790, %v4258
    %v4262 = vadd.f32 %v3791, %v4259
    %v4263 = vmul.f32 %v4260, %v111
    %v4264 = vmul.f32 %v4261, %v112
    %v4265 = vmul.f32 %v4262, %v113
    %4266 = vmatpush.msra.mxu0 0.0
    %4267 = vmatpush.msra.mxu0 0.0
    %4268 = vmatpush.msra.mxu0 0.0
    %4269 = vmatpush.msra.mxu0 0.0
    %4270 = vmatpush.msra.mxu0 0.0
    %4271 = vmatpush.msra.mxu0 0.0
    %4272 = vmatpush.msra.mxu0 0.0
    %4273 = vmatpush.msra.mxu0 0.0
    %4274 = vmatpush.msra.mxu0 0.0
    %4275 = vmatpush.msra.mxu0 0.0
    %4276 = vmatpush.msra.mxu0 0.0
    %4277 = vmatpush.msra.mxu0 0.0
    %4278 = vmatpush.msra.mxu0 0.0
    %4279 = vmatpush.msra.mxu0 %v4265
    %4280 = vmatpush.msra.mxu0 %v4264
    %4281 = vmatpush.msra.mxu0 %v4263
    %4282 = vmatmul.f32.gmra.mxu0 %v1133
    %v4283 = vpop.f32.mrf.mxu0
    %v4284 = vadd.f32 %v1114, %v4283
    %4285 = vmatmul.f32.gmra.mxu0 %v1136
    %v4286 = vpop.f32.mrf.mxu0
    %v4287 = vadd.f32 %v1119, %v4286
    %4288 = vmatmul.f32.gmra.mxu0 %v1139
    %v4289 = vpop.f32.mrf.mxu0
    %v4290 = vadd.f32 %v1124, %v4289
    %4291 = vmatmul.f32.gmra.mxu0 %v1142
    %v4292 = vpop.f32.mrf.mxu0
    %v4293 = vadd.f32 %v1129, %v4292
    %4294 = vdwg.mxu0
    %v4295 = vmax.f32 %v4284, 0.0
    %v4296 = vmax.f32 %v4287, 0.0
    %v4297 = vmax.f32 %v4290, 0.0
    %v4298 = vmax.f32 %v4293, 0.0
    %4299 = vmatpush.msra.mxu0 0.0
    %4300 = vmatpush.msra.mxu0 0.0
    %4301 = vmatpush.msra.mxu0 0.0
    %4302 = vmatpush.msra.mxu0 0.0
    %4303 = vmatpush.msra.mxu0 0.0
    %4304 = vmatpush.msra.mxu0 0.0
    %4305 = vmatpush.msra.mxu0 0.0
    %4306 = vmatpush.msra.mxu0 0.0
    %4307 = vmatpush.msra.mxu0 0.0
    %4308 = vmatpush.msra.mxu0 0.0
    %4309 = vmatpush.msra.mxu0 0.0
    %4310 = vmatpush.msra.mxu0 0.0
    %4311 = vmatpush.msra.mxu0 %v4298
    %4312 = vmatpush.msra.mxu0 %v4297
    %4313 = vmatpush.msra.mxu0 %v4296
    %4314 = vmatpush.msra.mxu0 %v4295
    %4315 = vmatmul.f32.gmra.mxu0 %v1186
    %v4316 = vpop.f32.mrf.mxu0
    %v4317 = vadd.f32 %v1182, %v4316
    %4318 = vdwg.mxu0
    %v4319 = vperm.slane %v3309, 2
    %v4320 = vmul.f32 %v4317, %v4319
    %v4321 = vadd.f32 %v3284, %v4320
    %v4322 = vld [vmem:[%s4] sm:$0xff]
    %v4323 = vsub.f32 %v4321, %v4322
    %v4324 = vand.u32 2147483647, %v4323
    %4325 = vadd.xlane.f32.xlu0 %v4324
    %v4326 = vpop.xlane.xlu0 %4325
    %v4327 = vrot.slane %v4326, 4
    %v4328 = vadd.f32 %v4326, %v4327
    %v4329 = vrot.slane %v4328, 2
    %v4330 = vadd.f32 %v4328, %v4329
    %v4331 = vrot.slane %v4330, 1
    %v4332 = vadd.f32 %v4330, %v4331
    %s4333 = vtos %v4332
    %v4334 = vstv %s4333
    %4335 = vst [vmem:[#allocation7] sm:$0xff] %v4334
    // Predicated region
    $region46: #{tpu_custom_call.1} parent=1 // pred_check
      _
    $region47: #{tpu_custom_call.1} parent=1 // pred_check_branch
      %4337 = sbr.rel (0) target = $region49
    $region48: #{tpu_custom_call.1} parent=1 // pred_region
      %4339 = vsyncadd [#allocation4], 0
      %s4341 = sshll.u32 [#allocation7], 4
      %s4342 = int_to_ptr.vmem [resolvable:$true] %s4341
      %s4343 = sshll.u32 %s9, 4
      %s4344 = int_to_ptr.hbm [resolvable:$true] %s4343
      %4346 = dma.vmem_to_hbm [thread:$0]  %s4342, 128, %s4344, [#allocation4]
    $region49: #{tpu_custom_call.1} parent=1 // pred_fallthru
      _
    // Predicated region
    $region50: #{tpu_custom_call.1} parent=1 // pred_check
      _
    $region51: #{tpu_custom_call.1} parent=1 // pred_check_branch
      %4348 = sbr.rel (0) target = $region53
    $region52: #{tpu_custom_call.1} parent=1 // pred_region
      %4350 = dma.done [#allocation4], 128
    $region53: #{tpu_custom_call.1} parent=1 // pred_fallthru
      _
    %4351 = vsyncpa [#allocation3], 1
    %4352 = vsyncpa [#allocation6], 1
    %4353 = vsyncpa [#allocation4], 1

</llo_original>
